<compile_context>
chip_gen: v7x
topology: tpu7x:2x2x1
jax: 0.10.0
libtpu: 0.0.40
codegen_flags: <defaults>
</compile_context>

<pallas_src>
import jax
import jax.numpy as jnp
import numpy as np
from jax.experimental import pallas as pl
from jax.experimental.pallas import tpu as pltpu


def _outconv_kernel(x_ref, w_ref, b_ref, o_ref):
    # x_ref: (1, Cin, ts)   w_ref: (Cout, Cin)   b_ref: (Cout, 1)
    # o_ref: (1, Cout, ts)
    y = jnp.dot(w_ref[...], x_ref[0],
                preferred_element_type=jnp.float32,
                precision=jax.lax.Precision.HIGHEST)
    o_ref[0] = (y + b_ref[...]).astype(o_ref.dtype)


def _round_up(x, m):
    return -(-x // m) * m


def _input_block_budget_bytes():
    # ~2-4 MiB input blocks amortize per-grid-step overhead at every
    # generation's HBM bandwidth; stay at the low end on chips with less
    # physical VMEM per TensorCore (v7x: 64 MiB/TC).
    try:
        vmem = pltpu.get_tpu_info().vmem_capacity_bytes
    except Exception:
        vmem = 64 << 20
    return (2 << 20) if vmem <= (64 << 20) else (4 << 20)


def out_conv(x, weight, bias, *, spatial_tile=None):
    """1x1x1 Conv3d, PyTorch semantics.

    x:      (N, Cin, D, H, W)        NCDHW
    weight: (Cout, Cin, 1, 1, 1) or (Cout, Cin)
    bias:   (Cout,)
    returns (N, Cout, D, H, W)
    """
    N, Cin, D, H, W = x.shape
    w2 = weight.reshape(weight.shape[0], Cin)
    Cout = w2.shape[0]
    S = D * H * W
    itemsize = x.dtype.itemsize

    # ---- spatial tile: lane-dense, sized from a VMEM byte budget ------------
    S_pad = _round_up(S, 128)              # ragged tail block is masked by Pallas
    if spatial_tile is None:
        budget = _input_block_budget_bytes()
        ts = budget // (itemsize * Cin)
        ts = max(128, (ts // 512) * 512)   # round down to 512 lanes, >= 128
    else:
        ts = max(128, _round_up(spatial_tile, 128))
    ts = min(ts, S_pad)

    # v7x has 2 TensorCores sharing HBM: guarantee >=2 grid steps so neither
    # sits idle and the DMA pipeline has something to overlap with.
    if N == 1 and pl.cdiv(S, ts) == 1 and ts >= 256:
        ts = max(128, (ts // 2 // 128) * 128)

    grid = (N, pl.cdiv(S, ts))

    x2 = x.reshape(N, Cin, S)              # trailing-dim merge: free, row-major
    b2 = bias.reshape(Cout, 1)

    # ---- scoped-VMEM budget: double-buffered in/out blocks + params ---------
    in_block = itemsize * Cin * ts
    out_block = itemsize * Cout * ts
    params = itemsize * (Cout * Cin + Cout)
    vmem_need = 2 * (in_block + out_block) + 2 * params + (1 << 20)
    vmem_limit = int(min(max(vmem_need, 16 << 20), 40 << 20))

    cost = pl.CostEstimate(
        flops=2 * N * Cout * Cin * S,
        transcendentals=0,
        bytes_accessed=itemsize * (N * S * (Cin + Cout) + Cout * Cin + Cout),
    )

    out = pl.pallas_call(
        _outconv_kernel,
        out_shape=jax.ShapeDtypeStruct((N, Cout, S), x.dtype),
        grid_spec=pltpu.PrefetchScalarGridSpec(
            num_scalar_prefetch=0,
            grid=grid,
            in_specs=[
                pl.BlockSpec((1, Cin, ts), lambda n, s: (n, 0, s)),
                pl.BlockSpec((Cout, Cin), lambda n, s: (0, 0)),
                pl.BlockSpec((Cout, 1), lambda n, s: (0, 0)),
            ],
            out_specs=pl.BlockSpec((1, Cout, ts), lambda n, s: (n, 0, s)),
        ),
        compiler_params=pltpu.CompilerParams(
            dimension_semantics=("parallel", "parallel"),
            vmem_limit_bytes=vmem_limit),
        cost_estimate=cost,
    )(x2, w2, b2)
    return out.reshape(N, Cout, D, H, W)


# ----------------------------------------------------------------------------
# pure-JAX reference for verification
# ----------------------------------------------------------------------------
def _ref_out_conv(x, weight, bias):
    w2 = weight.reshape(weight.shape[0], x.shape[1])
    y = jnp.einsum("ncdhw,oc->nodhw", x, w2,
                   precision=jax.lax.Precision.HIGHEST)
    return y + bias.reshape(1, -1, 1, 1, 1)


if __name__ == "__main__":
    # small shapes consistent with OutConv(in_channels=16, out_channels=4)
    N, Cin, Cout, D, H, W = 2, 16, 4, 8, 16, 16

    key = jax.random.PRNGKey(0)
    kx, kw, kb = jax.random.split(key, 3)
    x = jax.random.normal(kx, (N, Cin, D, H, W), jnp.float32)
    weight = (jax.random.normal(kw, (Cout, Cin, 1, 1, 1), jnp.float32)
              * np.sqrt(1.0 / Cin))
    bias = 0.01 * jax.random.normal(kb, (Cout,), jnp.float32)

    out = jax.block_until_ready(out_conv(x, weight, bias))
    ref = jax.block_until_ready(_ref_out_conv(x, weight, bias))

    np.testing.assert_allclose(np.asarray(out), np.asarray(ref),
                               rtol=1e-4, atol=1e-4)
    assert out.shape == (N, Cout, D, H, W)
    print("KERNEL_OK")
</pallas_src>

<mosaic_0001>
module attributes {stable_mosaic.version = 11 : i64} {
  func.func @_outconv_kernel(%arg0: i32, %arg1: i32, %arg2: memref<1x16x2048xf32, #tpu.memory_space<vmem>>, %arg3: memref<4x16xf32, #tpu.memory_space<vmem>>, %arg4: memref<4x1xf32, #tpu.memory_space<vmem>>, %arg5: memref<1x4x2048xf32, #tpu.memory_space<vmem>>) attributes {dimension_semantics = [#tpu.dimension_semantics<parallel>, #tpu.dimension_semantics<parallel>], iteration_bounds = array<i64: 2, 1>, scalar_prefetch = 0 : i64, scratch_operands = 0 : i64, tpu.core_type = #tpu.core_type<tc>, window_params = [{transform_indices = @transform_0, window_bounds = array<i64: 1, 16, 2048>}, {pipeline_mode = #tpu.pipeline_mode<synchronous>, transform_indices = @transform_1, window_bounds = array<i64: 4, 16>}, {pipeline_mode = #tpu.pipeline_mode<synchronous>, transform_indices = @transform_2, window_bounds = array<i64: 4, 1>}, {transform_indices = @transform_3, window_bounds = array<i64: 1, 4, 2048>}]} {
    %c0 = arith.constant 0 : index
    %c0_0 = arith.constant 0 : index
    %0 = vector.load %arg3[%c0, %c0_0] : memref<4x16xf32, #tpu.memory_space<vmem>>, vector<4x16xf32>
    %c0_1 = arith.constant 0 : index
    %c0_2 = arith.constant 0 : index
    %c0_3 = arith.constant 0 : index
    %1 = vector.load %arg2[%c0_1, %c0_2, %c0_3] : memref<1x16x2048xf32, #tpu.memory_space<vmem>>, vector<1x16x2048xf32>
    %2 = vector.shape_cast %1 : vector<1x16x2048xf32> to vector<16x2048xf32>
    %cst = arith.constant dense<0.000000e+00> : vector<4x2048xf32>
    %3 = tpu.matmul %0, %2, %cst {dimension_numbers = #tpu.dot_dimension_numbers<[1], [0], [0], [1], [0, 0, 1, 1], [], []>, precision = #tpu.contract_precision<fp32>} : vector<4x16xf32>, vector<16x2048xf32>, vector<4x2048xf32> -> vector<4x2048xf32>
    %c0_4 = arith.constant 0 : index
    %c0_5 = arith.constant 0 : index
    %4 = vector.load %arg4[%c0_4, %c0_5] : memref<4x1xf32, #tpu.memory_space<vmem>>, vector<4x1xf32>
    %5 = vector.broadcast %4 : vector<4x1xf32> to vector<4x2048xf32>
    %6 = arith.addf %3, %5 : vector<4x2048xf32>
    %c0_6 = arith.constant 0 : index
    %c0_7 = arith.constant 0 : index
    %c0_8 = arith.constant 0 : index
    %7 = vector.load %arg5[%c0_6, %c0_7, %c0_8] : memref<1x4x2048xf32, #tpu.memory_space<vmem>>, vector<1x4x2048xf32>
    %8 = vector.shape_cast %7 : vector<1x4x2048xf32> to vector<4x2048xf32>
    %9 = vector.shape_cast %6 : vector<4x2048xf32> to vector<1x4x2048xf32>
    tpu.vector_store %arg5[%c0_6, %c0_7, %c0_8], %9 {strides = array<i32>} : memref<1x4x2048xf32, #tpu.memory_space<vmem>>, vector<1x4x2048xf32>,
    return
  }
  func.func @transform_0(%arg0: i32, %arg1: i32) -> (i32, i32, i32) {
    %c0_i32 = arith.constant 0 : i32
    %c0_i32_0 = arith.constant 0 : i32
    return %arg0, %c0_i32, %arg1 : i32, i32, i32
  }
  func.func @transform_1(%arg0: i32, %arg1: i32) -> (i32, i32) {
    %c0_i32 = arith.constant 0 : i32
    %c0_i32_0 = arith.constant 0 : i32
    %c0_i32_1 = arith.constant 0 : i32
    return %c0_i32, %c0_i32_0 : i32, i32
  }
  func.func @transform_2(%arg0: i32, %arg1: i32) -> (i32, i32) {
    %c0_i32 = arith.constant 0 : i32
    %c0_i32_0 = arith.constant 0 : i32
    %c0_i32_1 = arith.constant 0 : i32
    return %c0_i32, %c0_i32_0 : i32, i32
  }
  func.func @transform_3(%arg0: i32, %arg1: i32) -> (i32, i32, i32) {
    %c0_i32 = arith.constant 0 : i32
    %c0_i32_0 = arith.constant 0 : i32
    return %arg0, %c0_i32, %arg1 : i32, i32, i32
  }
}

</mosaic_0001>

<llo_original>
// kernel: tpu_custom_call.1
$region0: #{tpu_custom_call.1}
  #allocation0 [shape = 'u32[]', space=smem, size = 0x4, offset = 0x4, fixed_abs, tag = 'smem constant byte address 0x4 - core index']
  #allocation1 [shape = 'u32[144,128]{1,0:T(1,128)}', space=vmem, size = 0x12000, scoped, tag = 'internal scratch']
  %s0 = inlined_call_operand.hbm [shape: f32[2,16,2048], index: 0, kind: input, shape index: {}]
  %s1 = inlined_call_operand.vmem [shape: f32[4,16], index: 1, kind: input, shape index: {}]
  %s2 = inlined_call_operand.vmem [shape: f32[4,1], index: 2, kind: input, shape index: {}]
  %s3 = inlined_call_operand.hbm [shape: f32[2,4,2048], index: 3, kind: output, shape index: {}]
  %s4 = sld [smem:[#allocation0]]
  $region49: #{tpu_custom_call.1} parent=0
    _
  %s6 = ssub.s32 1, %s4
  %s7 = scalar_select 0, %s6, %s4
  $region1: #{tpu_custom_call.1} parent=0
    #allocation2 [shape = 'u8[262144]{0}', space=vmem, size = 0x40000, scoped, tag = 'input window, operand 0']
    #allocation3 [shape = 's32[2]{0}', space=sflag, size = 0x8, scoped, tag = 'scoped memory for tpu_custom_call.1']
    #allocation4 [shape = 's32[2]{0}', space=sflag, size = 0x8, scoped, tag = 'scoped memory for tpu_custom_call.1']
    #allocation5 [shape = 'u8[65536]{0}', space=vmem, size = 0x10000, scoped, tag = 'output window, operand 0']
    %8 = vsyncpa [#allocation3], 0
    %s9 = scalar_lea.sflag [#allocation3], 1
    %10 = vsyncpa %s9, 0
    %11 = vsyncpa [#allocation4], 0
    %s12 = scalar_lea.sflag [#allocation4], 1
    %13 = vsyncpa %s12, 0
    loop: start=0, step=1, limit=4
    $region2: #{tpu_custom_call.1} parent=1 // loop_pre_header
      _
    $region3: #{tpu_custom_call.1} parent=1 // loop_header
      %s15 = sphi 0, %s19
      %p16 = scmp.ge.s32.totalorder %s15, 4
      %s22 = sphi 0, %s34
      %s23 = sphi 0, %s30
      %s24 = sphi 0, %s22
      %s25 = sphi 0, %s23
      %s26 = sphi 0, %s24
      %s27 = sphi 0, %s25
      %s39 = sphi 0, %s41
      %s42 = sphi 0, %s39
      %s43 = sphi 0, %s42
      %s59 = sphi 0, %s43
      %s63 = sphi 0, %s63
      %s65 = sphi 0, %s63
      %s66 = sphi 0, %s65
      %s80 = sphi 0, %s66
      %s84 = sphi 0, %s84
      %s86 = sphi 0, %s84
      %s87 = sphi 0, %s86
      %s101 = sphi 0, %s87
      %s109 = sphi 0, %s111
      %s112 = sphi 0, %s109
      %s113 = sphi 0, %s112
      %s129 = sphi 0, %s113
    $region4: #{tpu_custom_call.1} parent=1 // loop_header_branch
      %18 = sbr.rel (%p16) target = $region8
    $region5: #{tpu_custom_call.1} parent=1 // loop_body
      %s20 = ssub.s32 %s15, 1
      %s21 = ssub.s32 %s15, 2
      %s28 = sadd.s32 1, %s23
      %p29 = scmp.ge.s32.totalorder %s28, 1
      %s30 = scalar_select %p29, 0, %s28
      %s31 = sadd.s32 1, %s22
      %s32 = scalar_select %p29, %s31, %s22
      %p33 = scmp.ge.s32.totalorder %s32, 2
      %s34 = scalar_select %p33, 0, %s32
      %s35 = ssub.s32 %s22, %s34
      %s36 = ssub.s32 %s23, %s30
      %s37 = sor.u32 %s35, %s36
      %p38 = scmp.eq.s32.totalorder %s37, 0
      %s40 = sadd.s32 %s39, 1
      %s41 = scalar_select %p38, %s39, %s40
      %p44 = pneg %p38
      %p45 = scmp.eq.s32.totalorder %s15, 1
      %p46 = por %p44, %p45
      %p47 = scmp.ne.s32.totalorder %s39, %s42
      %p48 = scmp.eq.s32.totalorder %s15, 0
      %p49 = por %p47, %p48
      %p50 = scmp.ne.s32.totalorder %s39, %s42
      %p51 = scmp.eq.s32.totalorder %s20, 1
      %p52 = por %p50, %p51
      %p53 = scmp.ne.s32.totalorder %s42, %s43
      %p54 = scmp.eq.s32.totalorder %s20, 0
      %p55 = por %p53, %p54
      %p56 = scmp.ne.s32.totalorder %s42, %s43
      %p57 = scmp.eq.s32.totalorder %s21, 1
      %p58 = por %p56, %p57
      %p60 = scmp.ne.s32.totalorder %s43, %s59
      %p61 = scmp.eq.s32.totalorder %s21, 0
      %p62 = por %p60, %p61
      %s64 = sadd.s32 %s63, 1
      %p67 = scmp.eq.s32.totalorder %s15, 1
      %p68 = scmp.ne.s32.totalorder %s63, %s65
      %p69 = scmp.eq.s32.totalorder %s15, 0
      %p70 = por %p68, %p69
      %p71 = scmp.ne.s32.totalorder %s63, %s65
      %p72 = scmp.eq.s32.totalorder %s20, 1
      %p73 = por %p71, %p72
      %p74 = scmp.ne.s32.totalorder %s65, %s66
      %p75 = scmp.eq.s32.totalorder %s20, 0
      %p76 = por %p74, %p75
      %p77 = scmp.ne.s32.totalorder %s65, %s66
      %p78 = scmp.eq.s32.totalorder %s21, 1
      %p79 = por %p77, %p78
      %p81 = scmp.ne.s32.totalorder %s66, %s80
      %p82 = scmp.eq.s32.totalorder %s21, 0
      %p83 = por %p81, %p82
      %s85 = sadd.s32 %s84, 1
      %p88 = scmp.eq.s32.totalorder %s15, 1
      %p89 = scmp.ne.s32.totalorder %s84, %s86
      %p90 = scmp.eq.s32.totalorder %s15, 0
      %p91 = por %p89, %p90
      %p92 = scmp.ne.s32.totalorder %s84, %s86
      %p93 = scmp.eq.s32.totalorder %s20, 1
      %p94 = por %p92, %p93
      %p95 = scmp.ne.s32.totalorder %s86, %s87
      %p96 = scmp.eq.s32.totalorder %s20, 0
      %p97 = por %p95, %p96
      %p98 = scmp.ne.s32.totalorder %s86, %s87
      %p99 = scmp.eq.s32.totalorder %s21, 1
      %p100 = por %p98, %p99
      %p102 = scmp.ne.s32.totalorder %s87, %s101
      %p103 = scmp.eq.s32.totalorder %s21, 0
      %p104 = por %p102, %p103
      %s105 = ssub.s32 %s22, %s34
      %s106 = ssub.s32 %s23, %s30
      %s107 = sor.u32 %s105, %s106
      %p108 = scmp.eq.s32.totalorder %s107, 0
      %s110 = sadd.s32 %s109, 1
      %s111 = scalar_select %p108, %s109, %s110
      %p114 = pneg %p108
      %p115 = scmp.eq.s32.totalorder %s15, 1
      %p116 = por %p114, %p115
      %p117 = scmp.ne.s32.totalorder %s109, %s112
      %p118 = scmp.eq.s32.totalorder %s15, 0
      %p119 = por %p117, %p118
      %p120 = scmp.ne.s32.totalorder %s109, %s112
      %p121 = scmp.eq.s32.totalorder %s20, 1
      %p122 = por %p120, %p121
      %p123 = scmp.ne.s32.totalorder %s112, %s113
      %p124 = scmp.eq.s32.totalorder %s20, 0
      %p125 = por %p123, %p124
      %p126 = scmp.ne.s32.totalorder %s112, %s113
      %p127 = scmp.eq.s32.totalorder %s21, 1
      %p128 = por %p126, %p127
      %p130 = scmp.ne.s32.totalorder %s113, %s129
      %p131 = scmp.eq.s32.totalorder %s21, 0
      %p132 = por %p130, %p131
      %p133 = scmp.le.s32.totalorder 1, %s15
      %p134 = scmp.lt.s32.totalorder %s15, 3
      %p135 = pnand %p133, %p134
      %p136 = pneg %p135
      // Predicated region
      $region9: #{tpu_custom_call.1} parent=5 // pred_check
        _
      $region10: #{tpu_custom_call.1} parent=5 // pred_check_branch
        %138 = sbr.rel (%p135) target = $region12
      $region11: #{tpu_custom_call.1} parent=5 // pred_region
        %s139 = ssub.s32 %s15, 1
        // Predicated region
        $region13: #{tpu_custom_call.1} parent=11 // pred_check
          %p140 = pneg %p76
        $region14: #{tpu_custom_call.1} parent=11 // pred_check_branch
          %142 = sbr.rel (%p140) target = $region16
        $region15: #{tpu_custom_call.1} parent=11 // pred_region
          _
        $region16: #{tpu_custom_call.1} parent=11 // pred_fallthru
          _
        // Predicated region
        $region17: #{tpu_custom_call.1} parent=11 // pred_check
          %p143 = pneg %p97
        $region18: #{tpu_custom_call.1} parent=11 // pred_check_branch
          %145 = sbr.rel (%p143) target = $region20
        $region19: #{tpu_custom_call.1} parent=11 // pred_region
          _
        $region20: #{tpu_custom_call.1} parent=11 // pred_fallthru
          _
      $region12: #{tpu_custom_call.1} parent=5 // pred_fallthru
        _
      %p146 = scmp.lt.s32.totalorder %s15, 2
      // Predicated region
      $region21: #{tpu_custom_call.1} parent=5 // pred_check
        %p147 = pneg %p146
      $region22: #{tpu_custom_call.1} parent=5 // pred_check_branch
        %149 = sbr.rel (%p147) target = $region24
      $region23: #{tpu_custom_call.1} parent=5 // pred_region
        // Predicated region
        $region25: #{tpu_custom_call.1} parent=23 // pred_check
          %p150 = pneg %p49
        $region26: #{tpu_custom_call.1} parent=23 // pred_check_branch
          %152 = sbr.rel (%p150) target = $region28
        $region27: #{tpu_custom_call.1} parent=23 // pred_region
          %s153 = sand.u32 %s39, 1
          %s154 = scalar_lea.sflag [#allocation3], %s153
          %s155 = sand.u32 %s39, 1
          %s156 = smul.addr %s155, 256
          %s157 = scalar_lea.vmem [#allocation2], %s156
          %s158 = smul.u32 16, %s23
          %s160 = ssub.s32 4096, 4096
          %161 = vsyncadd %s154, %s160
          %s162 = smul.addr %s22, 32
          %s163 = sadd.s32 %s158, %s162
          %s164 = smul.addr %s163, 128
          %s165 = scalar_lea.hbm %s0, %s164
          %s166 = sshll.u32 %s157, 4
          %s167 = int_to_ptr.vmem [resolvable:$true] %s166
          %172 = dma.hbm_to_vmem [thread:$0]  %s165, 4096, %s167, %s154, 2048, 2048, 128
        $region28: #{tpu_custom_call.1} parent=23 // pred_fallthru
          _
      $region24: #{tpu_custom_call.1} parent=5 // pred_fallthru
        _
      %p173 = scmp.le.s32.totalorder 1, %s15
      %p174 = scmp.lt.s32.totalorder %s15, 3
      %p175 = pnand %p173, %p174
      %p176 = pneg %p175
      // Predicated region
      $region29: #{tpu_custom_call.1} parent=5 // pred_check
        _
      $region30: #{tpu_custom_call.1} parent=5 // pred_check_branch
        %178 = sbr.rel (%p175) target = $region32
      $region31: #{tpu_custom_call.1} parent=5 // pred_region
        %s179 = ssub.s32 %s15, 1
        %s180 = sand.u32 %s42, 1
        %s181 = scalar_lea.sflag [#allocation3], %s180
        %s182 = sand.u32 %s42, 1
        %s183 = smul.addr %s182, 256
        %s184 = scalar_lea.vmem [#allocation2], %s183
        // Predicated region
        $region33: #{tpu_custom_call.1} parent=31 // pred_check
          %p185 = pneg %p55
        $region34: #{tpu_custom_call.1} parent=31 // pred_check_branch
          %187 = sbr.rel (%p185) target = $region36
        $region35: #{tpu_custom_call.1} parent=31 // pred_region
          %188 = dma.done %s181, 4096
        $region36: #{tpu_custom_call.1} parent=31 // pred_fallthru
          _
        %s189 = sand.u32 %s42, 1
        %s190 = scalar_lea.sflag [#allocation3], %s189
        %s191 = sand.u32 %s42, 1
        %s192 = smul.addr %s191, 256
        %s193 = scalar_lea.vmem [#allocation2], %s192
        %p194 = pneg %p55
        %p195 = pneg %p52
        %p196 = pneg %p76
        %p197 = pneg %p73
        %p198 = pneg %p97
        %p199 = pneg %p94
        %p200 = pneg %p125
        %p201 = pneg %p122
        %s202 = sand.u32 %s112, 1
        %s203 = scalar_lea.sflag [#allocation4], %s202
        %s204 = sand.u32 %s112, 1
        %s205 = smul.addr %s204, 64
        %s206 = scalar_lea.vmem [#allocation5], %s205
        %s207 = smul.u32 16, %s25
        %s208 = smul.u32 16, %s25
        %v209 = vld [vmem:[%s1] sm:$0xf]
        %v210 = vld [vmem:[%s184] sm:$0xff]
        %v211 = vld [vmem:[%s184 + $0x8] sm:$0xff]
        %v212 = vld [vmem:[%s184 + $0x10] sm:$0xff]
        %v213 = vld [vmem:[%s184 + $0x18] sm:$0xff]
        %v214 = vld [vmem:[%s184 + $0x20] sm:$0xff]
        %v215 = vld [vmem:[%s184 + $0x28] sm:$0xff]
        %v216 = vld [vmem:[%s184 + $0x30] sm:$0xff]
        %v217 = vld [vmem:[%s184 + $0x38] sm:$0xff]
        %v218 = vld [vmem:[%s184 + $0x40] sm:$0xff]
        %v219 = vld [vmem:[%s184 + $0x48] sm:$0xff]
        %v220 = vld [vmem:[%s184 + $0x50] sm:$0xff]
        %v221 = vld [vmem:[%s184 + $0x58] sm:$0xff]
        %v222 = vld [vmem:[%s184 + $0x60] sm:$0xff]
        %v223 = vld [vmem:[%s184 + $0x68] sm:$0xff]
        %v224 = vld [vmem:[%s184 + $0x70] sm:$0xff]
        %v225 = vld [vmem:[%s184 + $0x78] sm:$0xff]
        %v226 = vld [vmem:[%s184 + $0x80] sm:$0xff]
        %v227 = vld [vmem:[%s184 + $0x88] sm:$0xff]
        %v228 = vld [vmem:[%s184 + $0x90] sm:$0xff]
        %v229 = vld [vmem:[%s184 + $0x98] sm:$0xff]
        %v230 = vld [vmem:[%s184 + $0xa0] sm:$0xff]
        %v231 = vld [vmem:[%s184 + $0xa8] sm:$0xff]
        %v232 = vld [vmem:[%s184 + $0xb0] sm:$0xff]
        %v233 = vld [vmem:[%s184 + $0xb8] sm:$0xff]
        %v234 = vld [vmem:[%s184 + $0xc0] sm:$0xff]
        %v235 = vld [vmem:[%s184 + $0xc8] sm:$0xff]
        %v236 = vld [vmem:[%s184 + $0xd0] sm:$0xff]
        %v237 = vld [vmem:[%s184 + $0xd8] sm:$0xff]
        %v238 = vld [vmem:[%s184 + $0xe0] sm:$0xff]
        %v239 = vld [vmem:[%s184 + $0xe8] sm:$0xff]
        %v240 = vld [vmem:[%s184 + $0xf0] sm:$0xff]
        %v241 = vld [vmem:[%s184 + $0xf8] sm:$0xff]
        %v242 = vld [vmem:[%s2] sm:$0xf]
        %244 = vset.pattern.permute.xlu0 0
        %245 = vperm.xlu0 %244, %v242
        %v246 = vpop.permute.xlu0 %245
        %vm248 = vcmask 130048
        %v250 = vsel %vm248, %v209, 0
        %v252 = vand.u32 %v211, 4294901760
        %253 = vmatprep.subr.mxu0 %v252
        %v254 = vand.u32 %v210, 4294901760
        %255 = vmatpush1.msra.mxu0 %v254
        %v256 = vand.u32 %v227, 4294901760
        %257 = vmatprep.subr.mxu0 %v256
        %v258 = vand.u32 %v226, 4294901760
        %259 = vmatpush1.msra.mxu0 %v258
        %260 = vmatprep.subr.mxu0 0.0
        %261 = vmatpush1.msra.mxu0 0.0
        %262 = vmatprep.subr.mxu0 0.0
        %263 = vmatpush1.msra.mxu0 0.0
        %264 = vmatprep.subr.mxu0 0.0
        %265 = vmatpush1.msra.mxu0 0.0
        %266 = vmatprep.subr.mxu0 0.0
        %267 = vmatpush1.msra.mxu0 0.0
        %268 = vmatprep.subr.mxu0 0.0
        %269 = vmatpush1.msra.mxu0 0.0
        %270 = vmatprep.subr.mxu0 0.0
        %271 = vmatpush1.msra.mxu0 0.0
        %272 = vmatprep.subr.mxu0 0.0
        %273 = vmatpush1.msra.mxu0 0.0
        %274 = vmatprep.subr.mxu0 0.0
        %275 = vmatpush1.msra.mxu0 0.0
        %276 = vmatprep.subr.mxu0 0.0
        %277 = vmatpush1.msra.mxu0 0.0
        %278 = vmatprep.subr.mxu0 0.0
        %279 = vmatpush1.msra.mxu0 0.0
        %280 = vmatprep.subr.mxu0 0.0
        %281 = vmatpush1.msra.mxu0 0.0
        %282 = vmatprep.subr.mxu0 0.0
        %283 = vmatpush1.msra.mxu0 0.0
        %284 = vmatprep.subr.mxu0 0.0
        %285 = vmatpush1.msra.mxu0 0.0
        %286 = vmatprep.subr.mxu0 0.0
        %287 = vmatpush1.msra.mxu0 0.0
        %288 = vmatprep.subr.mxu0 0.0
        %289 = vmatpush1.msra.mxu0 0.0
        %290 = vmatprep.subr.mxu0 0.0
        %291 = vmatpush1.msra.mxu0 0.0
        %292 = vmatprep.subr.mxu0 0.0
        %293 = vmatpush1.msra.mxu0 0.0
        %294 = vmatprep.subr.mxu0 0.0
        %295 = vmatpush1.msra.mxu0 0.0
        %296 = vmatprep.subr.mxu0 0.0
        %297 = vmatpush1.msra.mxu0 0.0
        %298 = vmatprep.subr.mxu0 0.0
        %299 = vmatpush1.msra.mxu0 0.0
        %300 = vmatprep.subr.mxu0 0.0
        %301 = vmatpush1.msra.mxu0 0.0
        %302 = vmatprep.subr.mxu0 0.0
        %303 = vmatpush1.msra.mxu0 0.0
        %304 = vmatprep.subr.mxu0 0.0
        %305 = vmatpush1.msra.mxu0 0.0
        %306 = vmatprep.subr.mxu0 0.0
        %307 = vmatpush1.msra.mxu0 0.0
        %308 = vmatprep.subr.mxu0 0.0
        %309 = vmatpush1.msra.mxu0 0.0
        %310 = vmatprep.subr.mxu0 0.0
        %311 = vmatpush1.msra.mxu0 0.0
        %312 = vmatprep.subr.mxu0 0.0
        %313 = vmatpush1.msra.mxu0 0.0
        %314 = vmatprep.subr.mxu0 0.0
        %315 = vmatpush1.msra.mxu0 0.0
        %316 = vmatprep.subr.mxu0 0.0
        %317 = vmatpush1.msra.mxu0 0.0
        %318 = vmatprep.subr.mxu0 0.0
        %319 = vmatpush1.msra.mxu0 0.0
        %320 = vmatprep.mubr.f32.mxu0 0.0
        %v321 = vand.u32 %v250, 4294901760
        %v322 = vsub.f32 %v250, %v321
        %v323 = vand.u32 %v322, 4294901760
        %v324 = vsub.f32 %v322, %v323
        %v325 = vand.u32 %v324, 4294901760
        %326 = vmatmul.mubr.f32.gmra.mrb[0].mxu0 %v325
        %v327 = vpop.f32.mrb[0].mxu0
        %v328 = vadd.f32 %v246, %v327
        %v329 = vpop.f32.mrb[0].mxu0
        %v330 = vadd.f32 %v246, %v329
        %331 = vdwg.mxu0
        %v332 = vand.u32 %v211, 4294901760
        %v333 = vsub.f32 %v211, %v332
        %v334 = vand.u32 %v333, 4294901760
        %v335 = vsub.f32 %v333, %v334
        %v336 = vand.u32 %v335, 4294901760
        %337 = vmatprep.subr.mxu0 %v336
        %v338 = vand.u32 %v210, 4294901760
        %v339 = vsub.f32 %v210, %v338
        %v340 = vand.u32 %v339, 4294901760
        %v341 = vsub.f32 %v339, %v340
        %v342 = vand.u32 %v341, 4294901760
        %343 = vmatpush1.msra.mxu0 %v342
        %v344 = vand.u32 %v227, 4294901760
        %v345 = vsub.f32 %v227, %v344
        %v346 = vand.u32 %v345, 4294901760
        %v347 = vsub.f32 %v345, %v346
        %v348 = vand.u32 %v347, 4294901760
        %349 = vmatprep.subr.mxu0 %v348
        %v350 = vand.u32 %v226, 4294901760
        %v351 = vsub.f32 %v226, %v350
        %v352 = vand.u32 %v351, 4294901760
        %v353 = vsub.f32 %v351, %v352
        %v354 = vand.u32 %v353, 4294901760
        %355 = vmatpush1.msra.mxu0 %v354
        %356 = vmatprep.subr.mxu0 0.0
        %357 = vmatpush1.msra.mxu0 0.0
        %358 = vmatprep.subr.mxu0 0.0
        %359 = vmatpush1.msra.mxu0 0.0
        %360 = vmatprep.subr.mxu0 0.0
        %361 = vmatpush1.msra.mxu0 0.0
        %362 = vmatprep.subr.mxu0 0.0
        %363 = vmatpush1.msra.mxu0 0.0
        %364 = vmatprep.subr.mxu0 0.0
        %365 = vmatpush1.msra.mxu0 0.0
        %366 = vmatprep.subr.mxu0 0.0
        %367 = vmatpush1.msra.mxu0 0.0
        %368 = vmatprep.subr.mxu0 0.0
        %369 = vmatpush1.msra.mxu0 0.0
        %370 = vmatprep.subr.mxu0 0.0
        %371 = vmatpush1.msra.mxu0 0.0
        %372 = vmatprep.subr.mxu0 0.0
        %373 = vmatpush1.msra.mxu0 0.0
        %374 = vmatprep.subr.mxu0 0.0
        %375 = vmatpush1.msra.mxu0 0.0
        %376 = vmatprep.subr.mxu0 0.0
        %377 = vmatpush1.msra.mxu0 0.0
        %378 = vmatprep.subr.mxu0 0.0
        %379 = vmatpush1.msra.mxu0 0.0
        %380 = vmatprep.subr.mxu0 0.0
        %381 = vmatpush1.msra.mxu0 0.0
        %382 = vmatprep.subr.mxu0 0.0
        %383 = vmatpush1.msra.mxu0 0.0
        %384 = vmatprep.subr.mxu0 0.0
        %385 = vmatpush1.msra.mxu0 0.0
        %386 = vmatprep.subr.mxu0 0.0
        %387 = vmatpush1.msra.mxu0 0.0
        %388 = vmatprep.subr.mxu0 0.0
        %389 = vmatpush1.msra.mxu0 0.0
        %390 = vmatprep.subr.mxu0 0.0
        %391 = vmatpush1.msra.mxu0 0.0
        %392 = vmatprep.subr.mxu0 0.0
        %393 = vmatpush1.msra.mxu0 0.0
        %394 = vmatprep.subr.mxu0 0.0
        %395 = vmatpush1.msra.mxu0 0.0
        %396 = vmatprep.subr.mxu0 0.0
        %397 = vmatpush1.msra.mxu0 0.0
        %398 = vmatprep.subr.mxu0 0.0
        %399 = vmatpush1.msra.mxu0 0.0
        %400 = vmatprep.subr.mxu0 0.0
        %401 = vmatpush1.msra.mxu0 0.0
        %402 = vmatprep.subr.mxu0 0.0
        %403 = vmatpush1.msra.mxu0 0.0
        %404 = vmatprep.subr.mxu0 0.0
        %405 = vmatpush1.msra.mxu0 0.0
        %406 = vmatprep.subr.mxu0 0.0
        %407 = vmatpush1.msra.mxu0 0.0
        %408 = vmatprep.subr.mxu0 0.0
        %409 = vmatpush1.msra.mxu0 0.0
        %410 = vmatprep.subr.mxu0 0.0
        %411 = vmatpush1.msra.mxu0 0.0
        %412 = vmatprep.subr.mxu0 0.0
        %413 = vmatpush1.msra.mxu0 0.0
        %414 = vmatprep.subr.mxu0 0.0
        %415 = vmatpush1.msra.mxu0 0.0
        %416 = vmatprep.mubr.f32.mxu0 0.0
        %v417 = vand.u32 %v250, 4294901760
        %418 = vmatmul.mubr.f32.gmra.mrb[0].mxu0 %v417
        %v419 = vpop.f32.mrb[0].mxu0
        %v420 = vadd.f32 %v328, %v419
        %v421 = vpop.f32.mrb[0].mxu0
        %v422 = vadd.f32 %v330, %v421
        %423 = vdwg.mxu0
        %v424 = vand.u32 %v211, 4294901760
        %v425 = vsub.f32 %v211, %v424
        %426 = vmatprep.subr.mxu0 %v425
        %v427 = vand.u32 %v210, 4294901760
        %v428 = vsub.f32 %v210, %v427
        %429 = vmatpush1.msra.mxu0 %v428
        %v430 = vand.u32 %v227, 4294901760
        %v431 = vsub.f32 %v227, %v430
        %432 = vmatprep.subr.mxu0 %v431
        %v433 = vand.u32 %v226, 4294901760
        %v434 = vsub.f32 %v226, %v433
        %435 = vmatpush1.msra.mxu0 %v434
        %436 = vmatprep.subr.mxu0 0.0
        %437 = vmatpush1.msra.mxu0 0.0
        %438 = vmatprep.subr.mxu0 0.0
        %439 = vmatpush1.msra.mxu0 0.0
        %440 = vmatprep.subr.mxu0 0.0
        %441 = vmatpush1.msra.mxu0 0.0
        %442 = vmatprep.subr.mxu0 0.0
        %443 = vmatpush1.msra.mxu0 0.0
        %444 = vmatprep.subr.mxu0 0.0
        %445 = vmatpush1.msra.mxu0 0.0
        %446 = vmatprep.subr.mxu0 0.0
        %447 = vmatpush1.msra.mxu0 0.0
        %448 = vmatprep.subr.mxu0 0.0
        %449 = vmatpush1.msra.mxu0 0.0
        %450 = vmatprep.subr.mxu0 0.0
        %451 = vmatpush1.msra.mxu0 0.0
        %452 = vmatprep.subr.mxu0 0.0
        %453 = vmatpush1.msra.mxu0 0.0
        %454 = vmatprep.subr.mxu0 0.0
        %455 = vmatpush1.msra.mxu0 0.0
        %456 = vmatprep.subr.mxu0 0.0
        %457 = vmatpush1.msra.mxu0 0.0
        %458 = vmatprep.subr.mxu0 0.0
        %459 = vmatpush1.msra.mxu0 0.0
        %460 = vmatprep.subr.mxu0 0.0
        %461 = vmatpush1.msra.mxu0 0.0
        %462 = vmatprep.subr.mxu0 0.0
        %463 = vmatpush1.msra.mxu0 0.0
        %464 = vmatprep.subr.mxu0 0.0
        %465 = vmatpush1.msra.mxu0 0.0
        %466 = vmatprep.subr.mxu0 0.0
        %467 = vmatpush1.msra.mxu0 0.0
        %468 = vmatprep.subr.mxu0 0.0
        %469 = vmatpush1.msra.mxu0 0.0
        %470 = vmatprep.subr.mxu0 0.0
        %471 = vmatpush1.msra.mxu0 0.0
        %472 = vmatprep.subr.mxu0 0.0
        %473 = vmatpush1.msra.mxu0 0.0
        %474 = vmatprep.subr.mxu0 0.0
        %475 = vmatpush1.msra.mxu0 0.0
        %476 = vmatprep.subr.mxu0 0.0
        %477 = vmatpush1.msra.mxu0 0.0
        %478 = vmatprep.subr.mxu0 0.0
        %479 = vmatpush1.msra.mxu0 0.0
        %480 = vmatprep.subr.mxu0 0.0
        %481 = vmatpush1.msra.mxu0 0.0
        %482 = vmatprep.subr.mxu0 0.0
        %483 = vmatpush1.msra.mxu0 0.0
        %484 = vmatprep.subr.mxu0 0.0
        %485 = vmatpush1.msra.mxu0 0.0
        %486 = vmatprep.subr.mxu0 0.0
        %487 = vmatpush1.msra.mxu0 0.0
        %488 = vmatprep.subr.mxu0 0.0
        %489 = vmatpush1.msra.mxu0 0.0
        %490 = vmatprep.subr.mxu0 0.0
        %491 = vmatpush1.msra.mxu0 0.0
        %492 = vmatprep.subr.mxu0 0.0
        %493 = vmatpush1.msra.mxu0 0.0
        %494 = vmatprep.subr.mxu0 0.0
        %495 = vmatpush1.msra.mxu0 0.0
        %496 = vmatprep.mubr.f32.mxu0 0.0
        %v497 = vand.u32 %v250, 4294901760
        %v498 = vsub.f32 %v250, %v497
        %499 = vmatmul.mubr.f32.gmra.mrb[0].mxu0 %v498
        %v500 = vpop.f32.mrb[0].mxu0
        %v501 = vadd.f32 %v420, %v500
        %v502 = vpop.f32.mrb[0].mxu0
        %v503 = vadd.f32 %v422, %v502
        %504 = vdwg.mxu0
        %v505 = vand.u32 %v211, 4294901760
        %506 = vmatprep.subr.mxu0 %v505
        %v507 = vand.u32 %v210, 4294901760
        %508 = vmatpush1.msra.mxu0 %v507
        %v509 = vand.u32 %v227, 4294901760
        %510 = vmatprep.subr.mxu0 %v509
        %v511 = vand.u32 %v226, 4294901760
        %512 = vmatpush1.msra.mxu0 %v511
        %513 = vmatprep.subr.mxu0 0.0
        %514 = vmatpush1.msra.mxu0 0.0
        %515 = vmatprep.subr.mxu0 0.0
        %516 = vmatpush1.msra.mxu0 0.0
        %517 = vmatprep.subr.mxu0 0.0
        %518 = vmatpush1.msra.mxu0 0.0
        %519 = vmatprep.subr.mxu0 0.0
        %520 = vmatpush1.msra.mxu0 0.0
        %521 = vmatprep.subr.mxu0 0.0
        %522 = vmatpush1.msra.mxu0 0.0
        %523 = vmatprep.subr.mxu0 0.0
        %524 = vmatpush1.msra.mxu0 0.0
        %525 = vmatprep.subr.mxu0 0.0
        %526 = vmatpush1.msra.mxu0 0.0
        %527 = vmatprep.subr.mxu0 0.0
        %528 = vmatpush1.msra.mxu0 0.0
        %529 = vmatprep.subr.mxu0 0.0
        %530 = vmatpush1.msra.mxu0 0.0
        %531 = vmatprep.subr.mxu0 0.0
        %532 = vmatpush1.msra.mxu0 0.0
        %533 = vmatprep.subr.mxu0 0.0
        %534 = vmatpush1.msra.mxu0 0.0
        %535 = vmatprep.subr.mxu0 0.0
        %536 = vmatpush1.msra.mxu0 0.0
        %537 = vmatprep.subr.mxu0 0.0
        %538 = vmatpush1.msra.mxu0 0.0
        %539 = vmatprep.subr.mxu0 0.0
        %540 = vmatpush1.msra.mxu0 0.0
        %541 = vmatprep.subr.mxu0 0.0
        %542 = vmatpush1.msra.mxu0 0.0
        %543 = vmatprep.subr.mxu0 0.0
        %544 = vmatpush1.msra.mxu0 0.0
        %545 = vmatprep.subr.mxu0 0.0
        %546 = vmatpush1.msra.mxu0 0.0
        %547 = vmatprep.subr.mxu0 0.0
        %548 = vmatpush1.msra.mxu0 0.0
        %549 = vmatprep.subr.mxu0 0.0
        %550 = vmatpush1.msra.mxu0 0.0
        %551 = vmatprep.subr.mxu0 0.0
        %552 = vmatpush1.msra.mxu0 0.0
        %553 = vmatprep.subr.mxu0 0.0
        %554 = vmatpush1.msra.mxu0 0.0
        %555 = vmatprep.subr.mxu0 0.0
        %556 = vmatpush1.msra.mxu0 0.0
        %557 = vmatprep.subr.mxu0 0.0
        %558 = vmatpush1.msra.mxu0 0.0
        %559 = vmatprep.subr.mxu0 0.0
        %560 = vmatpush1.msra.mxu0 0.0
        %561 = vmatprep.subr.mxu0 0.0
        %562 = vmatpush1.msra.mxu0 0.0
        %563 = vmatprep.subr.mxu0 0.0
        %564 = vmatpush1.msra.mxu0 0.0
        %565 = vmatprep.subr.mxu0 0.0
        %566 = vmatpush1.msra.mxu0 0.0
        %567 = vmatprep.subr.mxu0 0.0
        %568 = vmatpush1.msra.mxu0 0.0
        %569 = vmatprep.subr.mxu0 0.0
        %570 = vmatpush1.msra.mxu0 0.0
        %571 = vmatprep.subr.mxu0 0.0
        %572 = vmatpush1.msra.mxu0 0.0
        %573 = vmatprep.mubr.f32.mxu0 0.0
        %v574 = vand.u32 %v250, 4294901760
        %v575 = vsub.f32 %v250, %v574
        %v576 = vand.u32 %v575, 4294901760
        %577 = vmatmul.mubr.f32.gmra.mrb[0].mxu0 %v576
        %v578 = vpop.f32.mrb[0].mxu0
        %v579 = vadd.f32 %v501, %v578
        %v580 = vpop.f32.mrb[0].mxu0
        %v581 = vadd.f32 %v503, %v580
        %582 = vdwg.mxu0
        %v583 = vand.u32 %v211, 4294901760
        %v584 = vsub.f32 %v211, %v583
        %v585 = vand.u32 %v584, 4294901760
        %586 = vmatprep.subr.mxu0 %v585
        %v587 = vand.u32 %v210, 4294901760
        %v588 = vsub.f32 %v210, %v587
        %v589 = vand.u32 %v588, 4294901760
        %590 = vmatpush1.msra.mxu0 %v589
        %v591 = vand.u32 %v227, 4294901760
        %v592 = vsub.f32 %v227, %v591
        %v593 = vand.u32 %v592, 4294901760
        %594 = vmatprep.subr.mxu0 %v593
        %v595 = vand.u32 %v226, 4294901760
        %v596 = vsub.f32 %v226, %v595
        %v597 = vand.u32 %v596, 4294901760
        %598 = vmatpush1.msra.mxu0 %v597
        %599 = vmatprep.subr.mxu0 0.0
        %600 = vmatpush1.msra.mxu0 0.0
        %601 = vmatprep.subr.mxu0 0.0
        %602 = vmatpush1.msra.mxu0 0.0
        %603 = vmatprep.subr.mxu0 0.0
        %604 = vmatpush1.msra.mxu0 0.0
        %605 = vmatprep.subr.mxu0 0.0
        %606 = vmatpush1.msra.mxu0 0.0
        %607 = vmatprep.subr.mxu0 0.0
        %608 = vmatpush1.msra.mxu0 0.0
        %609 = vmatprep.subr.mxu0 0.0
        %610 = vmatpush1.msra.mxu0 0.0
        %611 = vmatprep.subr.mxu0 0.0
        %612 = vmatpush1.msra.mxu0 0.0
        %613 = vmatprep.subr.mxu0 0.0
        %614 = vmatpush1.msra.mxu0 0.0
        %615 = vmatprep.subr.mxu0 0.0
        %616 = vmatpush1.msra.mxu0 0.0
        %617 = vmatprep.subr.mxu0 0.0
        %618 = vmatpush1.msra.mxu0 0.0
        %619 = vmatprep.subr.mxu0 0.0
        %620 = vmatpush1.msra.mxu0 0.0
        %621 = vmatprep.subr.mxu0 0.0
        %622 = vmatpush1.msra.mxu0 0.0
        %623 = vmatprep.subr.mxu0 0.0
        %624 = vmatpush1.msra.mxu0 0.0
        %625 = vmatprep.subr.mxu0 0.0
        %626 = vmatpush1.msra.mxu0 0.0
        %627 = vmatprep.subr.mxu0 0.0
        %628 = vmatpush1.msra.mxu0 0.0
        %629 = vmatprep.subr.mxu0 0.0
        %630 = vmatpush1.msra.mxu0 0.0
        %631 = vmatprep.subr.mxu0 0.0
        %632 = vmatpush1.msra.mxu0 0.0
        %633 = vmatprep.subr.mxu0 0.0
        %634 = vmatpush1.msra.mxu0 0.0
        %635 = vmatprep.subr.mxu0 0.0
        %636 = vmatpush1.msra.mxu0 0.0
        %637 = vmatprep.subr.mxu0 0.0
        %638 = vmatpush1.msra.mxu0 0.0
        %639 = vmatprep.subr.mxu0 0.0
        %640 = vmatpush1.msra.mxu0 0.0
        %641 = vmatprep.subr.mxu0 0.0
        %642 = vmatpush1.msra.mxu0 0.0
        %643 = vmatprep.subr.mxu0 0.0
        %644 = vmatpush1.msra.mxu0 0.0
        %645 = vmatprep.subr.mxu0 0.0
        %646 = vmatpush1.msra.mxu0 0.0
        %647 = vmatprep.subr.mxu0 0.0
        %648 = vmatpush1.msra.mxu0 0.0
        %649 = vmatprep.subr.mxu0 0.0
        %650 = vmatpush1.msra.mxu0 0.0
        %651 = vmatprep.subr.mxu0 0.0
        %652 = vmatpush1.msra.mxu0 0.0
        %653 = vmatprep.subr.mxu0 0.0
        %654 = vmatpush1.msra.mxu0 0.0
        %655 = vmatprep.subr.mxu0 0.0
        %656 = vmatpush1.msra.mxu0 0.0
        %657 = vmatprep.subr.mxu0 0.0
        %658 = vmatpush1.msra.mxu0 0.0
        %659 = vmatprep.mubr.f32.mxu0 0.0
        %v660 = vand.u32 %v250, 4294901760
        %661 = vmatmul.mubr.f32.gmra.mrb[0].mxu0 %v660
        %v662 = vpop.f32.mrb[0].mxu0
        %v663 = vadd.f32 %v579, %v662
        %v664 = vpop.f32.mrb[0].mxu0
        %v665 = vadd.f32 %v581, %v664
        %666 = vdwg.mxu0
        %v667 = vand.u32 %v211, 4294901760
        %668 = vmatprep.subr.mxu0 %v667
        %v669 = vand.u32 %v210, 4294901760
        %670 = vmatpush1.msra.mxu0 %v669
        %v671 = vand.u32 %v227, 4294901760
        %672 = vmatprep.subr.mxu0 %v671
        %v673 = vand.u32 %v226, 4294901760
        %674 = vmatpush1.msra.mxu0 %v673
        %675 = vmatprep.subr.mxu0 0.0
        %676 = vmatpush1.msra.mxu0 0.0
        %677 = vmatprep.subr.mxu0 0.0
        %678 = vmatpush1.msra.mxu0 0.0
        %679 = vmatprep.subr.mxu0 0.0
        %680 = vmatpush1.msra.mxu0 0.0
        %681 = vmatprep.subr.mxu0 0.0
        %682 = vmatpush1.msra.mxu0 0.0
        %683 = vmatprep.subr.mxu0 0.0
        %684 = vmatpush1.msra.mxu0 0.0
        %685 = vmatprep.subr.mxu0 0.0
        %686 = vmatpush1.msra.mxu0 0.0
        %687 = vmatprep.subr.mxu0 0.0
        %688 = vmatpush1.msra.mxu0 0.0
        %689 = vmatprep.subr.mxu0 0.0
        %690 = vmatpush1.msra.mxu0 0.0
        %691 = vmatprep.subr.mxu0 0.0
        %692 = vmatpush1.msra.mxu0 0.0
        %693 = vmatprep.subr.mxu0 0.0
        %694 = vmatpush1.msra.mxu0 0.0
        %695 = vmatprep.subr.mxu0 0.0
        %696 = vmatpush1.msra.mxu0 0.0
        %697 = vmatprep.subr.mxu0 0.0
        %698 = vmatpush1.msra.mxu0 0.0
        %699 = vmatprep.subr.mxu0 0.0
        %700 = vmatpush1.msra.mxu0 0.0
        %701 = vmatprep.subr.mxu0 0.0
        %702 = vmatpush1.msra.mxu0 0.0
        %703 = vmatprep.subr.mxu0 0.0
        %704 = vmatpush1.msra.mxu0 0.0
        %705 = vmatprep.subr.mxu0 0.0
        %706 = vmatpush1.msra.mxu0 0.0
        %707 = vmatprep.subr.mxu0 0.0
        %708 = vmatpush1.msra.mxu0 0.0
        %709 = vmatprep.subr.mxu0 0.0
        %710 = vmatpush1.msra.mxu0 0.0
        %711 = vmatprep.subr.mxu0 0.0
        %712 = vmatpush1.msra.mxu0 0.0
        %713 = vmatprep.subr.mxu0 0.0
        %714 = vmatpush1.msra.mxu0 0.0
        %715 = vmatprep.subr.mxu0 0.0
        %716 = vmatpush1.msra.mxu0 0.0
        %717 = vmatprep.subr.mxu0 0.0
        %718 = vmatpush1.msra.mxu0 0.0
        %719 = vmatprep.subr.mxu0 0.0
        %720 = vmatpush1.msra.mxu0 0.0
        %721 = vmatprep.subr.mxu0 0.0
        %722 = vmatpush1.msra.mxu0 0.0
        %723 = vmatprep.subr.mxu0 0.0
        %724 = vmatpush1.msra.mxu0 0.0
        %725 = vmatprep.subr.mxu0 0.0
        %726 = vmatpush1.msra.mxu0 0.0
        %727 = vmatprep.subr.mxu0 0.0
        %728 = vmatpush1.msra.mxu0 0.0
        %729 = vmatprep.subr.mxu0 0.0
        %730 = vmatpush1.msra.mxu0 0.0
        %731 = vmatprep.subr.mxu0 0.0
        %732 = vmatpush1.msra.mxu0 0.0
        %733 = vmatprep.subr.mxu0 0.0
        %734 = vmatpush1.msra.mxu0 0.0
        %735 = vmatprep.mubr.f32.mxu0 0.0
        %v736 = vand.u32 %v250, 4294901760
        %737 = vmatmul.mubr.f32.gmra.mrb[0].mxu0 %v736
        %v738 = vpop.f32.mrb[0].mxu0
        %v739 = vadd.f32 %v663, %v738
        %v740 = vpop.f32.mrb[0].mxu0
        %v741 = vadd.f32 %v665, %v740
        %742 = vdwg.mxu0
        %v743 = vand.u32 %v213, 4294901760
        %744 = vmatprep.subr.mxu0 %v743
        %v745 = vand.u32 %v212, 4294901760
        %746 = vmatpush1.msra.mxu0 %v745
        %v747 = vand.u32 %v229, 4294901760
        %748 = vmatprep.subr.mxu0 %v747
        %v749 = vand.u32 %v228, 4294901760
        %750 = vmatpush1.msra.mxu0 %v749
        %751 = vmatprep.subr.mxu0 0.0
        %752 = vmatpush1.msra.mxu0 0.0
        %753 = vmatprep.subr.mxu0 0.0
        %754 = vmatpush1.msra.mxu0 0.0
        %755 = vmatprep.subr.mxu0 0.0
        %756 = vmatpush1.msra.mxu0 0.0
        %757 = vmatprep.subr.mxu0 0.0
        %758 = vmatpush1.msra.mxu0 0.0
        %759 = vmatprep.subr.mxu0 0.0
        %760 = vmatpush1.msra.mxu0 0.0
        %761 = vmatprep.subr.mxu0 0.0
        %762 = vmatpush1.msra.mxu0 0.0
        %763 = vmatprep.subr.mxu0 0.0
        %764 = vmatpush1.msra.mxu0 0.0
        %765 = vmatprep.subr.mxu0 0.0
        %766 = vmatpush1.msra.mxu0 0.0
        %767 = vmatprep.subr.mxu0 0.0
        %768 = vmatpush1.msra.mxu0 0.0
        %769 = vmatprep.subr.mxu0 0.0
        %770 = vmatpush1.msra.mxu0 0.0
        %771 = vmatprep.subr.mxu0 0.0
        %772 = vmatpush1.msra.mxu0 0.0
        %773 = vmatprep.subr.mxu0 0.0
        %774 = vmatpush1.msra.mxu0 0.0
        %775 = vmatprep.subr.mxu0 0.0
        %776 = vmatpush1.msra.mxu0 0.0
        %777 = vmatprep.subr.mxu0 0.0
        %778 = vmatpush1.msra.mxu0 0.0
        %779 = vmatprep.subr.mxu0 0.0
        %780 = vmatpush1.msra.mxu0 0.0
        %781 = vmatprep.subr.mxu0 0.0
        %782 = vmatpush1.msra.mxu0 0.0
        %783 = vmatprep.subr.mxu0 0.0
        %784 = vmatpush1.msra.mxu0 0.0
        %785 = vmatprep.subr.mxu0 0.0
        %786 = vmatpush1.msra.mxu0 0.0
        %787 = vmatprep.subr.mxu0 0.0
        %788 = vmatpush1.msra.mxu0 0.0
        %789 = vmatprep.subr.mxu0 0.0
        %790 = vmatpush1.msra.mxu0 0.0
        %791 = vmatprep.subr.mxu0 0.0
        %792 = vmatpush1.msra.mxu0 0.0
        %793 = vmatprep.subr.mxu0 0.0
        %794 = vmatpush1.msra.mxu0 0.0
        %795 = vmatprep.subr.mxu0 0.0
        %796 = vmatpush1.msra.mxu0 0.0
        %797 = vmatprep.subr.mxu0 0.0
        %798 = vmatpush1.msra.mxu0 0.0
        %799 = vmatprep.subr.mxu0 0.0
        %800 = vmatpush1.msra.mxu0 0.0
        %801 = vmatprep.subr.mxu0 0.0
        %802 = vmatpush1.msra.mxu0 0.0
        %803 = vmatprep.subr.mxu0 0.0
        %804 = vmatpush1.msra.mxu0 0.0
        %805 = vmatprep.subr.mxu0 0.0
        %806 = vmatpush1.msra.mxu0 0.0
        %807 = vmatprep.subr.mxu0 0.0
        %808 = vmatpush1.msra.mxu0 0.0
        %809 = vmatprep.subr.mxu0 0.0
        %810 = vmatpush1.msra.mxu0 0.0
        %811 = vmatprep.mubr.f32.mxu0 0.0
        %v812 = vand.u32 %v250, 4294901760
        %v813 = vsub.f32 %v250, %v812
        %v814 = vand.u32 %v813, 4294901760
        %v815 = vsub.f32 %v813, %v814
        %v816 = vand.u32 %v815, 4294901760
        %817 = vmatmul.mubr.f32.gmra.mrb[0].mxu0 %v816
        %v818 = vpop.f32.mrb[0].mxu0
        %v819 = vadd.f32 %v246, %v818
        %v820 = vpop.f32.mrb[0].mxu0
        %v821 = vadd.f32 %v246, %v820
        %822 = vdwg.mxu0
        %v823 = vand.u32 %v213, 4294901760
        %v824 = vsub.f32 %v213, %v823
        %v825 = vand.u32 %v824, 4294901760
        %v826 = vsub.f32 %v824, %v825
        %v827 = vand.u32 %v826, 4294901760
        %828 = vmatprep.subr.mxu0 %v827
        %v829 = vand.u32 %v212, 4294901760
        %v830 = vsub.f32 %v212, %v829
        %v831 = vand.u32 %v830, 4294901760
        %v832 = vsub.f32 %v830, %v831
        %v833 = vand.u32 %v832, 4294901760
        %834 = vmatpush1.msra.mxu0 %v833
        %v835 = vand.u32 %v229, 4294901760
        %v836 = vsub.f32 %v229, %v835
        %v837 = vand.u32 %v836, 4294901760
        %v838 = vsub.f32 %v836, %v837
        %v839 = vand.u32 %v838, 4294901760
        %840 = vmatprep.subr.mxu0 %v839
        %v841 = vand.u32 %v228, 4294901760
        %v842 = vsub.f32 %v228, %v841
        %v843 = vand.u32 %v842, 4294901760
        %v844 = vsub.f32 %v842, %v843
        %v845 = vand.u32 %v844, 4294901760
        %846 = vmatpush1.msra.mxu0 %v845
        %847 = vmatprep.subr.mxu0 0.0
        %848 = vmatpush1.msra.mxu0 0.0
        %849 = vmatprep.subr.mxu0 0.0
        %850 = vmatpush1.msra.mxu0 0.0
        %851 = vmatprep.subr.mxu0 0.0
        %852 = vmatpush1.msra.mxu0 0.0
        %853 = vmatprep.subr.mxu0 0.0
        %854 = vmatpush1.msra.mxu0 0.0
        %855 = vmatprep.subr.mxu0 0.0
        %856 = vmatpush1.msra.mxu0 0.0
        %857 = vmatprep.subr.mxu0 0.0
        %858 = vmatpush1.msra.mxu0 0.0
        %859 = vmatprep.subr.mxu0 0.0
        %860 = vmatpush1.msra.mxu0 0.0
        %861 = vmatprep.subr.mxu0 0.0
        %862 = vmatpush1.msra.mxu0 0.0
        %863 = vmatprep.subr.mxu0 0.0
        %864 = vmatpush1.msra.mxu0 0.0
        %865 = vmatprep.subr.mxu0 0.0
        %866 = vmatpush1.msra.mxu0 0.0
        %867 = vmatprep.subr.mxu0 0.0
        %868 = vmatpush1.msra.mxu0 0.0
        %869 = vmatprep.subr.mxu0 0.0
        %870 = vmatpush1.msra.mxu0 0.0
        %871 = vmatprep.subr.mxu0 0.0
        %872 = vmatpush1.msra.mxu0 0.0
        %873 = vmatprep.subr.mxu0 0.0
        %874 = vmatpush1.msra.mxu0 0.0
        %875 = vmatprep.subr.mxu0 0.0
        %876 = vmatpush1.msra.mxu0 0.0
        %877 = vmatprep.subr.mxu0 0.0
        %878 = vmatpush1.msra.mxu0 0.0
        %879 = vmatprep.subr.mxu0 0.0
        %880 = vmatpush1.msra.mxu0 0.0
        %881 = vmatprep.subr.mxu0 0.0
        %882 = vmatpush1.msra.mxu0 0.0
        %883 = vmatprep.subr.mxu0 0.0
        %884 = vmatpush1.msra.mxu0 0.0
        %885 = vmatprep.subr.mxu0 0.0
        %886 = vmatpush1.msra.mxu0 0.0
        %887 = vmatprep.subr.mxu0 0.0
        %888 = vmatpush1.msra.mxu0 0.0
        %889 = vmatprep.subr.mxu0 0.0
        %890 = vmatpush1.msra.mxu0 0.0
        %891 = vmatprep.subr.mxu0 0.0
        %892 = vmatpush1.msra.mxu0 0.0
        %893 = vmatprep.subr.mxu0 0.0
        %894 = vmatpush1.msra.mxu0 0.0
        %895 = vmatprep.subr.mxu0 0.0
        %896 = vmatpush1.msra.mxu0 0.0
        %897 = vmatprep.subr.mxu0 0.0
        %898 = vmatpush1.msra.mxu0 0.0
        %899 = vmatprep.subr.mxu0 0.0
        %900 = vmatpush1.msra.mxu0 0.0
        %901 = vmatprep.subr.mxu0 0.0
        %902 = vmatpush1.msra.mxu0 0.0
        %903 = vmatprep.subr.mxu0 0.0
        %904 = vmatpush1.msra.mxu0 0.0
        %905 = vmatprep.subr.mxu0 0.0
        %906 = vmatpush1.msra.mxu0 0.0
        %907 = vmatprep.mubr.f32.mxu0 0.0
        %v908 = vand.u32 %v250, 4294901760
        %909 = vmatmul.mubr.f32.gmra.mrb[0].mxu0 %v908
        %v910 = vpop.f32.mrb[0].mxu0
        %v911 = vadd.f32 %v819, %v910
        %v912 = vpop.f32.mrb[0].mxu0
        %v913 = vadd.f32 %v821, %v912
        %914 = vdwg.mxu0
        %v915 = vand.u32 %v213, 4294901760
        %v916 = vsub.f32 %v213, %v915
        %917 = vmatprep.subr.mxu0 %v916
        %v918 = vand.u32 %v212, 4294901760
        %v919 = vsub.f32 %v212, %v918
        %920 = vmatpush1.msra.mxu0 %v919
        %v921 = vand.u32 %v229, 4294901760
        %v922 = vsub.f32 %v229, %v921
        %923 = vmatprep.subr.mxu0 %v922
        %v924 = vand.u32 %v228, 4294901760
        %v925 = vsub.f32 %v228, %v924
        %926 = vmatpush1.msra.mxu0 %v925
        %927 = vmatprep.subr.mxu0 0.0
        %928 = vmatpush1.msra.mxu0 0.0
        %929 = vmatprep.subr.mxu0 0.0
        %930 = vmatpush1.msra.mxu0 0.0
        %931 = vmatprep.subr.mxu0 0.0
        %932 = vmatpush1.msra.mxu0 0.0
        %933 = vmatprep.subr.mxu0 0.0
        %934 = vmatpush1.msra.mxu0 0.0
        %935 = vmatprep.subr.mxu0 0.0
        %936 = vmatpush1.msra.mxu0 0.0
        %937 = vmatprep.subr.mxu0 0.0
        %938 = vmatpush1.msra.mxu0 0.0
        %939 = vmatprep.subr.mxu0 0.0
        %940 = vmatpush1.msra.mxu0 0.0
        %941 = vmatprep.subr.mxu0 0.0
        %942 = vmatpush1.msra.mxu0 0.0
        %943 = vmatprep.subr.mxu0 0.0
        %944 = vmatpush1.msra.mxu0 0.0
        %945 = vmatprep.subr.mxu0 0.0
        %946 = vmatpush1.msra.mxu0 0.0
        %947 = vmatprep.subr.mxu0 0.0
        %948 = vmatpush1.msra.mxu0 0.0
        %949 = vmatprep.subr.mxu0 0.0
        %950 = vmatpush1.msra.mxu0 0.0
        %951 = vmatprep.subr.mxu0 0.0
        %952 = vmatpush1.msra.mxu0 0.0
        %953 = vmatprep.subr.mxu0 0.0
        %954 = vmatpush1.msra.mxu0 0.0
        %955 = vmatprep.subr.mxu0 0.0
        %956 = vmatpush1.msra.mxu0 0.0
        %957 = vmatprep.subr.mxu0 0.0
        %958 = vmatpush1.msra.mxu0 0.0
        %959 = vmatprep.subr.mxu0 0.0
        %960 = vmatpush1.msra.mxu0 0.0
        %961 = vmatprep.subr.mxu0 0.0
        %962 = vmatpush1.msra.mxu0 0.0
        %963 = vmatprep.subr.mxu0 0.0
        %964 = vmatpush1.msra.mxu0 0.0
        %965 = vmatprep.subr.mxu0 0.0
        %966 = vmatpush1.msra.mxu0 0.0
        %967 = vmatprep.subr.mxu0 0.0
        %968 = vmatpush1.msra.mxu0 0.0
        %969 = vmatprep.subr.mxu0 0.0
        %970 = vmatpush1.msra.mxu0 0.0
        %971 = vmatprep.subr.mxu0 0.0
        %972 = vmatpush1.msra.mxu0 0.0
        %973 = vmatprep.subr.mxu0 0.0
        %974 = vmatpush1.msra.mxu0 0.0
        %975 = vmatprep.subr.mxu0 0.0
        %976 = vmatpush1.msra.mxu0 0.0
        %977 = vmatprep.subr.mxu0 0.0
        %978 = vmatpush1.msra.mxu0 0.0
        %979 = vmatprep.subr.mxu0 0.0
        %980 = vmatpush1.msra.mxu0 0.0
        %981 = vmatprep.subr.mxu0 0.0
        %982 = vmatpush1.msra.mxu0 0.0
        %983 = vmatprep.subr.mxu0 0.0
        %984 = vmatpush1.msra.mxu0 0.0
        %985 = vmatprep.subr.mxu0 0.0
        %986 = vmatpush1.msra.mxu0 0.0
        %987 = vmatprep.mubr.f32.mxu0 0.0
        %v988 = vand.u32 %v250, 4294901760
        %v989 = vsub.f32 %v250, %v988
        %990 = vmatmul.mubr.f32.gmra.mrb[0].mxu0 %v989
        %v991 = vpop.f32.mrb[0].mxu0
        %v992 = vadd.f32 %v911, %v991
        %v993 = vpop.f32.mrb[0].mxu0
        %v994 = vadd.f32 %v913, %v993
        %995 = vdwg.mxu0
        %v996 = vand.u32 %v213, 4294901760
        %997 = vmatprep.subr.mxu0 %v996
        %v998 = vand.u32 %v212, 4294901760
        %999 = vmatpush1.msra.mxu0 %v998
        %v1000 = vand.u32 %v229, 4294901760
        %1001 = vmatprep.subr.mxu0 %v1000
        %v1002 = vand.u32 %v228, 4294901760
        %1003 = vmatpush1.msra.mxu0 %v1002
        %1004 = vmatprep.subr.mxu0 0.0
        %1005 = vmatpush1.msra.mxu0 0.0
        %1006 = vmatprep.subr.mxu0 0.0
        %1007 = vmatpush1.msra.mxu0 0.0
        %1008 = vmatprep.subr.mxu0 0.0
        %1009 = vmatpush1.msra.mxu0 0.0
        %1010 = vmatprep.subr.mxu0 0.0
        %1011 = vmatpush1.msra.mxu0 0.0
        %1012 = vmatprep.subr.mxu0 0.0
        %1013 = vmatpush1.msra.mxu0 0.0
        %1014 = vmatprep.subr.mxu0 0.0
        %1015 = vmatpush1.msra.mxu0 0.0
        %1016 = vmatprep.subr.mxu0 0.0
        %1017 = vmatpush1.msra.mxu0 0.0
        %1018 = vmatprep.subr.mxu0 0.0
        %1019 = vmatpush1.msra.mxu0 0.0
        %1020 = vmatprep.subr.mxu0 0.0
        %1021 = vmatpush1.msra.mxu0 0.0
        %1022 = vmatprep.subr.mxu0 0.0
        %1023 = vmatpush1.msra.mxu0 0.0
        %1024 = vmatprep.subr.mxu0 0.0
        %1025 = vmatpush1.msra.mxu0 0.0
        %1026 = vmatprep.subr.mxu0 0.0
        %1027 = vmatpush1.msra.mxu0 0.0
        %1028 = vmatprep.subr.mxu0 0.0
        %1029 = vmatpush1.msra.mxu0 0.0
        %1030 = vmatprep.subr.mxu0 0.0
        %1031 = vmatpush1.msra.mxu0 0.0
        %1032 = vmatprep.subr.mxu0 0.0
        %1033 = vmatpush1.msra.mxu0 0.0
        %1034 = vmatprep.subr.mxu0 0.0
        %1035 = vmatpush1.msra.mxu0 0.0
        %1036 = vmatprep.subr.mxu0 0.0
        %1037 = vmatpush1.msra.mxu0 0.0
        %1038 = vmatprep.subr.mxu0 0.0
        %1039 = vmatpush1.msra.mxu0 0.0
        %1040 = vmatprep.subr.mxu0 0.0
        %1041 = vmatpush1.msra.mxu0 0.0
        %1042 = vmatprep.subr.mxu0 0.0
        %1043 = vmatpush1.msra.mxu0 0.0
        %1044 = vmatprep.subr.mxu0 0.0
        %1045 = vmatpush1.msra.mxu0 0.0
        %1046 = vmatprep.subr.mxu0 0.0
        %1047 = vmatpush1.msra.mxu0 0.0
        %1048 = vmatprep.subr.mxu0 0.0
        %1049 = vmatpush1.msra.mxu0 0.0
        %1050 = vmatprep.subr.mxu0 0.0
        %1051 = vmatpush1.msra.mxu0 0.0
        %1052 = vmatprep.subr.mxu0 0.0
        %1053 = vmatpush1.msra.mxu0 0.0
        %1054 = vmatprep.subr.mxu0 0.0
        %1055 = vmatpush1.msra.mxu0 0.0
        %1056 = vmatprep.subr.mxu0 0.0
        %1057 = vmatpush1.msra.mxu0 0.0
        %1058 = vmatprep.subr.mxu0 0.0
        %1059 = vmatpush1.msra.mxu0 0.0
        %1060 = vmatprep.subr.mxu0 0.0
        %1061 = vmatpush1.msra.mxu0 0.0
        %1062 = vmatprep.subr.mxu0 0.0
        %1063 = vmatpush1.msra.mxu0 0.0
        %1064 = vmatprep.mubr.f32.mxu0 0.0
        %v1065 = vand.u32 %v250, 4294901760
        %v1066 = vsub.f32 %v250, %v1065
        %v1067 = vand.u32 %v1066, 4294901760
        %1068 = vmatmul.mubr.f32.gmra.mrb[0].mxu0 %v1067
        %v1069 = vpop.f32.mrb[0].mxu0
        %v1070 = vadd.f32 %v992, %v1069
        %v1071 = vpop.f32.mrb[0].mxu0
        %v1072 = vadd.f32 %v994, %v1071
        %1073 = vdwg.mxu0
        %v1074 = vand.u32 %v213, 4294901760
        %v1075 = vsub.f32 %v213, %v1074
        %v1076 = vand.u32 %v1075, 4294901760
        %1077 = vmatprep.subr.mxu0 %v1076
        %v1078 = vand.u32 %v212, 4294901760
        %v1079 = vsub.f32 %v212, %v1078
        %v1080 = vand.u32 %v1079, 4294901760
        %1081 = vmatpush1.msra.mxu0 %v1080
        %v1082 = vand.u32 %v229, 4294901760
        %v1083 = vsub.f32 %v229, %v1082
        %v1084 = vand.u32 %v1083, 4294901760
        %1085 = vmatprep.subr.mxu0 %v1084
        %v1086 = vand.u32 %v228, 4294901760
        %v1087 = vsub.f32 %v228, %v1086
        %v1088 = vand.u32 %v1087, 4294901760
        %1089 = vmatpush1.msra.mxu0 %v1088
        %1090 = vmatprep.subr.mxu0 0.0
        %1091 = vmatpush1.msra.mxu0 0.0
        %1092 = vmatprep.subr.mxu0 0.0
        %1093 = vmatpush1.msra.mxu0 0.0
        %1094 = vmatprep.subr.mxu0 0.0
        %1095 = vmatpush1.msra.mxu0 0.0
        %1096 = vmatprep.subr.mxu0 0.0
        %1097 = vmatpush1.msra.mxu0 0.0
        %1098 = vmatprep.subr.mxu0 0.0
        %1099 = vmatpush1.msra.mxu0 0.0
        %1100 = vmatprep.subr.mxu0 0.0
        %1101 = vmatpush1.msra.mxu0 0.0
        %1102 = vmatprep.subr.mxu0 0.0
        %1103 = vmatpush1.msra.mxu0 0.0
        %1104 = vmatprep.subr.mxu0 0.0
        %1105 = vmatpush1.msra.mxu0 0.0
        %1106 = vmatprep.subr.mxu0 0.0
        %1107 = vmatpush1.msra.mxu0 0.0
        %1108 = vmatprep.subr.mxu0 0.0
        %1109 = vmatpush1.msra.mxu0 0.0
        %1110 = vmatprep.subr.mxu0 0.0
        %1111 = vmatpush1.msra.mxu0 0.0
        %1112 = vmatprep.subr.mxu0 0.0
        %1113 = vmatpush1.msra.mxu0 0.0
        %1114 = vmatprep.subr.mxu0 0.0
        %1115 = vmatpush1.msra.mxu0 0.0
        %1116 = vmatprep.subr.mxu0 0.0
        %1117 = vmatpush1.msra.mxu0 0.0
        %1118 = vmatprep.subr.mxu0 0.0
        %1119 = vmatpush1.msra.mxu0 0.0
        %1120 = vmatprep.subr.mxu0 0.0
        %1121 = vmatpush1.msra.mxu0 0.0
        %1122 = vmatprep.subr.mxu0 0.0
        %1123 = vmatpush1.msra.mxu0 0.0
        %1124 = vmatprep.subr.mxu0 0.0
        %1125 = vmatpush1.msra.mxu0 0.0
        %1126 = vmatprep.subr.mxu0 0.0
        %1127 = vmatpush1.msra.mxu0 0.0
        %1128 = vmatprep.subr.mxu0 0.0
        %1129 = vmatpush1.msra.mxu0 0.0
        %1130 = vmatprep.subr.mxu0 0.0
        %1131 = vmatpush1.msra.mxu0 0.0
        %1132 = vmatprep.subr.mxu0 0.0
        %1133 = vmatpush1.msra.mxu0 0.0
        %1134 = vmatprep.subr.mxu0 0.0
        %1135 = vmatpush1.msra.mxu0 0.0
        %1136 = vmatprep.subr.mxu0 0.0
        %1137 = vmatpush1.msra.mxu0 0.0
        %1138 = vmatprep.subr.mxu0 0.0
        %1139 = vmatpush1.msra.mxu0 0.0
        %1140 = vmatprep.subr.mxu0 0.0
        %1141 = vmatpush1.msra.mxu0 0.0
        %1142 = vmatprep.subr.mxu0 0.0
        %1143 = vmatpush1.msra.mxu0 0.0
        %1144 = vmatprep.subr.mxu0 0.0
        %1145 = vmatpush1.msra.mxu0 0.0
        %1146 = vmatprep.subr.mxu0 0.0
        %1147 = vmatpush1.msra.mxu0 0.0
        %1148 = vmatprep.subr.mxu0 0.0
        %1149 = vmatpush1.msra.mxu0 0.0
        %1150 = vmatprep.mubr.f32.mxu0 0.0
        %v1151 = vand.u32 %v250, 4294901760
        %1152 = vmatmul.mubr.f32.gmra.mrb[0].mxu0 %v1151
        %v1153 = vpop.f32.mrb[0].mxu0
        %v1154 = vadd.f32 %v1070, %v1153
        %v1155 = vpop.f32.mrb[0].mxu0
        %v1156 = vadd.f32 %v1072, %v1155
        %1157 = vdwg.mxu0
        %v1158 = vand.u32 %v213, 4294901760
        %1159 = vmatprep.subr.mxu0 %v1158
        %v1160 = vand.u32 %v212, 4294901760
        %1161 = vmatpush1.msra.mxu0 %v1160
        %v1162 = vand.u32 %v229, 4294901760
        %1163 = vmatprep.subr.mxu0 %v1162
        %v1164 = vand.u32 %v228, 4294901760
        %1165 = vmatpush1.msra.mxu0 %v1164
        %1166 = vmatprep.subr.mxu0 0.0
        %1167 = vmatpush1.msra.mxu0 0.0
        %1168 = vmatprep.subr.mxu0 0.0
        %1169 = vmatpush1.msra.mxu0 0.0
        %1170 = vmatprep.subr.mxu0 0.0
        %1171 = vmatpush1.msra.mxu0 0.0
        %1172 = vmatprep.subr.mxu0 0.0
        %1173 = vmatpush1.msra.mxu0 0.0
        %1174 = vmatprep.subr.mxu0 0.0
        %1175 = vmatpush1.msra.mxu0 0.0
        %1176 = vmatprep.subr.mxu0 0.0
        %1177 = vmatpush1.msra.mxu0 0.0
        %1178 = vmatprep.subr.mxu0 0.0
        %1179 = vmatpush1.msra.mxu0 0.0
        %1180 = vmatprep.subr.mxu0 0.0
        %1181 = vmatpush1.msra.mxu0 0.0
        %1182 = vmatprep.subr.mxu0 0.0
        %1183 = vmatpush1.msra.mxu0 0.0
        %1184 = vmatprep.subr.mxu0 0.0
        %1185 = vmatpush1.msra.mxu0 0.0
        %1186 = vmatprep.subr.mxu0 0.0
        %1187 = vmatpush1.msra.mxu0 0.0
        %1188 = vmatprep.subr.mxu0 0.0
        %1189 = vmatpush1.msra.mxu0 0.0
        %1190 = vmatprep.subr.mxu0 0.0
        %1191 = vmatpush1.msra.mxu0 0.0
        %1192 = vmatprep.subr.mxu0 0.0
        %1193 = vmatpush1.msra.mxu0 0.0
        %1194 = vmatprep.subr.mxu0 0.0
        %1195 = vmatpush1.msra.mxu0 0.0
        %1196 = vmatprep.subr.mxu0 0.0
        %1197 = vmatpush1.msra.mxu0 0.0
        %1198 = vmatprep.subr.mxu0 0.0
        %1199 = vmatpush1.msra.mxu0 0.0
        %1200 = vmatprep.subr.mxu0 0.0
        %1201 = vmatpush1.msra.mxu0 0.0
        %1202 = vmatprep.subr.mxu0 0.0
        %1203 = vmatpush1.msra.mxu0 0.0
        %1204 = vmatprep.subr.mxu0 0.0
        %1205 = vmatpush1.msra.mxu0 0.0
        %1206 = vmatprep.subr.mxu0 0.0
        %1207 = vmatpush1.msra.mxu0 0.0
        %1208 = vmatprep.subr.mxu0 0.0
        %1209 = vmatpush1.msra.mxu0 0.0
        %1210 = vmatprep.subr.mxu0 0.0
        %1211 = vmatpush1.msra.mxu0 0.0
        %1212 = vmatprep.subr.mxu0 0.0
        %1213 = vmatpush1.msra.mxu0 0.0
        %1214 = vmatprep.subr.mxu0 0.0
        %1215 = vmatpush1.msra.mxu0 0.0
        %1216 = vmatprep.subr.mxu0 0.0
        %1217 = vmatpush1.msra.mxu0 0.0
        %1218 = vmatprep.subr.mxu0 0.0
        %1219 = vmatpush1.msra.mxu0 0.0
        %1220 = vmatprep.subr.mxu0 0.0
        %1221 = vmatpush1.msra.mxu0 0.0
        %1222 = vmatprep.subr.mxu0 0.0
        %1223 = vmatpush1.msra.mxu0 0.0
        %1224 = vmatprep.subr.mxu0 0.0
        %1225 = vmatpush1.msra.mxu0 0.0
        %1226 = vmatprep.mubr.f32.mxu0 0.0
        %v1227 = vand.u32 %v250, 4294901760
        %1228 = vmatmul.mubr.f32.gmra.mrb[0].mxu0 %v1227
        %v1229 = vpop.f32.mrb[0].mxu0
        %v1230 = vadd.f32 %v1154, %v1229
        %v1231 = vpop.f32.mrb[0].mxu0
        %v1232 = vadd.f32 %v1156, %v1231
        %1233 = vdwg.mxu0
        %v1234 = vand.u32 %v215, 4294901760
        %1235 = vmatprep.subr.mxu0 %v1234
        %v1236 = vand.u32 %v214, 4294901760
        %1237 = vmatpush1.msra.mxu0 %v1236
        %v1238 = vand.u32 %v231, 4294901760
        %1239 = vmatprep.subr.mxu0 %v1238
        %v1240 = vand.u32 %v230, 4294901760
        %1241 = vmatpush1.msra.mxu0 %v1240
        %1242 = vmatprep.subr.mxu0 0.0
        %1243 = vmatpush1.msra.mxu0 0.0
        %1244 = vmatprep.subr.mxu0 0.0
        %1245 = vmatpush1.msra.mxu0 0.0
        %1246 = vmatprep.subr.mxu0 0.0
        %1247 = vmatpush1.msra.mxu0 0.0
        %1248 = vmatprep.subr.mxu0 0.0
        %1249 = vmatpush1.msra.mxu0 0.0
        %1250 = vmatprep.subr.mxu0 0.0
        %1251 = vmatpush1.msra.mxu0 0.0
        %1252 = vmatprep.subr.mxu0 0.0
        %1253 = vmatpush1.msra.mxu0 0.0
        %1254 = vmatprep.subr.mxu0 0.0
        %1255 = vmatpush1.msra.mxu0 0.0
        %1256 = vmatprep.subr.mxu0 0.0
        %1257 = vmatpush1.msra.mxu0 0.0
        %1258 = vmatprep.subr.mxu0 0.0
        %1259 = vmatpush1.msra.mxu0 0.0
        %1260 = vmatprep.subr.mxu0 0.0
        %1261 = vmatpush1.msra.mxu0 0.0
        %1262 = vmatprep.subr.mxu0 0.0
        %1263 = vmatpush1.msra.mxu0 0.0
        %1264 = vmatprep.subr.mxu0 0.0
        %1265 = vmatpush1.msra.mxu0 0.0
        %1266 = vmatprep.subr.mxu0 0.0
        %1267 = vmatpush1.msra.mxu0 0.0
        %1268 = vmatprep.subr.mxu0 0.0
        %1269 = vmatpush1.msra.mxu0 0.0
        %1270 = vmatprep.subr.mxu0 0.0
        %1271 = vmatpush1.msra.mxu0 0.0
        %1272 = vmatprep.subr.mxu0 0.0
        %1273 = vmatpush1.msra.mxu0 0.0
        %1274 = vmatprep.subr.mxu0 0.0
        %1275 = vmatpush1.msra.mxu0 0.0
        %1276 = vmatprep.subr.mxu0 0.0
        %1277 = vmatpush1.msra.mxu0 0.0
        %1278 = vmatprep.subr.mxu0 0.0
        %1279 = vmatpush1.msra.mxu0 0.0
        %1280 = vmatprep.subr.mxu0 0.0
        %1281 = vmatpush1.msra.mxu0 0.0
        %1282 = vmatprep.subr.mxu0 0.0
        %1283 = vmatpush1.msra.mxu0 0.0
        %1284 = vmatprep.subr.mxu0 0.0
        %1285 = vmatpush1.msra.mxu0 0.0
        %1286 = vmatprep.subr.mxu0 0.0
        %1287 = vmatpush1.msra.mxu0 0.0
        %1288 = vmatprep.subr.mxu0 0.0
        %1289 = vmatpush1.msra.mxu0 0.0
        %1290 = vmatprep.subr.mxu0 0.0
        %1291 = vmatpush1.msra.mxu0 0.0
        %1292 = vmatprep.subr.mxu0 0.0
        %1293 = vmatpush1.msra.mxu0 0.0
        %1294 = vmatprep.subr.mxu0 0.0
        %1295 = vmatpush1.msra.mxu0 0.0
        %1296 = vmatprep.subr.mxu0 0.0
        %1297 = vmatpush1.msra.mxu0 0.0
        %1298 = vmatprep.subr.mxu0 0.0
        %1299 = vmatpush1.msra.mxu0 0.0
        %1300 = vmatprep.subr.mxu0 0.0
        %1301 = vmatpush1.msra.mxu0 0.0
        %1302 = vmatprep.mubr.f32.mxu0 0.0
        %v1303 = vand.u32 %v250, 4294901760
        %v1304 = vsub.f32 %v250, %v1303
        %v1305 = vand.u32 %v1304, 4294901760
        %v1306 = vsub.f32 %v1304, %v1305
        %v1307 = vand.u32 %v1306, 4294901760
        %1308 = vmatmul.mubr.f32.gmra.mrb[0].mxu0 %v1307
        %v1309 = vpop.f32.mrb[0].mxu0
        %v1310 = vadd.f32 %v246, %v1309
        %v1311 = vpop.f32.mrb[0].mxu0
        %v1312 = vadd.f32 %v246, %v1311
        %1313 = vdwg.mxu0
        %v1314 = vand.u32 %v215, 4294901760
        %v1315 = vsub.f32 %v215, %v1314
        %v1316 = vand.u32 %v1315, 4294901760
        %v1317 = vsub.f32 %v1315, %v1316
        %v1318 = vand.u32 %v1317, 4294901760
        %1319 = vmatprep.subr.mxu0 %v1318
        %v1320 = vand.u32 %v214, 4294901760
        %v1321 = vsub.f32 %v214, %v1320
        %v1322 = vand.u32 %v1321, 4294901760
        %v1323 = vsub.f32 %v1321, %v1322
        %v1324 = vand.u32 %v1323, 4294901760
        %1325 = vmatpush1.msra.mxu0 %v1324
        %v1326 = vand.u32 %v231, 4294901760
        %v1327 = vsub.f32 %v231, %v1326
        %v1328 = vand.u32 %v1327, 4294901760
        %v1329 = vsub.f32 %v1327, %v1328
        %v1330 = vand.u32 %v1329, 4294901760
        %1331 = vmatprep.subr.mxu0 %v1330
        %v1332 = vand.u32 %v230, 4294901760
        %v1333 = vsub.f32 %v230, %v1332
        %v1334 = vand.u32 %v1333, 4294901760
        %v1335 = vsub.f32 %v1333, %v1334
        %v1336 = vand.u32 %v1335, 4294901760
        %1337 = vmatpush1.msra.mxu0 %v1336
        %1338 = vmatprep.subr.mxu0 0.0
        %1339 = vmatpush1.msra.mxu0 0.0
        %1340 = vmatprep.subr.mxu0 0.0
        %1341 = vmatpush1.msra.mxu0 0.0
        %1342 = vmatprep.subr.mxu0 0.0
        %1343 = vmatpush1.msra.mxu0 0.0
        %1344 = vmatprep.subr.mxu0 0.0
        %1345 = vmatpush1.msra.mxu0 0.0
        %1346 = vmatprep.subr.mxu0 0.0
        %1347 = vmatpush1.msra.mxu0 0.0
        %1348 = vmatprep.subr.mxu0 0.0
        %1349 = vmatpush1.msra.mxu0 0.0
        %1350 = vmatprep.subr.mxu0 0.0
        %1351 = vmatpush1.msra.mxu0 0.0
        %1352 = vmatprep.subr.mxu0 0.0
        %1353 = vmatpush1.msra.mxu0 0.0
        %1354 = vmatprep.subr.mxu0 0.0
        %1355 = vmatpush1.msra.mxu0 0.0
        %1356 = vmatprep.subr.mxu0 0.0
        %1357 = vmatpush1.msra.mxu0 0.0
        %1358 = vmatprep.subr.mxu0 0.0
        %1359 = vmatpush1.msra.mxu0 0.0
        %1360 = vmatprep.subr.mxu0 0.0
        %1361 = vmatpush1.msra.mxu0 0.0
        %1362 = vmatprep.subr.mxu0 0.0
        %1363 = vmatpush1.msra.mxu0 0.0
        %1364 = vmatprep.subr.mxu0 0.0
        %1365 = vmatpush1.msra.mxu0 0.0
        %1366 = vmatprep.subr.mxu0 0.0
        %1367 = vmatpush1.msra.mxu0 0.0
        %1368 = vmatprep.subr.mxu0 0.0
        %1369 = vmatpush1.msra.mxu0 0.0
        %1370 = vmatprep.subr.mxu0 0.0
        %1371 = vmatpush1.msra.mxu0 0.0
        %1372 = vmatprep.subr.mxu0 0.0
        %1373 = vmatpush1.msra.mxu0 0.0
        %1374 = vmatprep.subr.mxu0 0.0
        %1375 = vmatpush1.msra.mxu0 0.0
        %1376 = vmatprep.subr.mxu0 0.0
        %1377 = vmatpush1.msra.mxu0 0.0
        %1378 = vmatprep.subr.mxu0 0.0
        %1379 = vmatpush1.msra.mxu0 0.0
        %1380 = vmatprep.subr.mxu0 0.0
        %1381 = vmatpush1.msra.mxu0 0.0
        %1382 = vmatprep.subr.mxu0 0.0
        %1383 = vmatpush1.msra.mxu0 0.0
        %1384 = vmatprep.subr.mxu0 0.0
        %1385 = vmatpush1.msra.mxu0 0.0
        %1386 = vmatprep.subr.mxu0 0.0
        %1387 = vmatpush1.msra.mxu0 0.0
        %1388 = vmatprep.subr.mxu0 0.0
        %1389 = vmatpush1.msra.mxu0 0.0
        %1390 = vmatprep.subr.mxu0 0.0
        %1391 = vmatpush1.msra.mxu0 0.0
        %1392 = vmatprep.subr.mxu0 0.0
        %1393 = vmatpush1.msra.mxu0 0.0
        %1394 = vmatprep.subr.mxu0 0.0
        %1395 = vmatpush1.msra.mxu0 0.0
        %1396 = vmatprep.subr.mxu0 0.0
        %1397 = vmatpush1.msra.mxu0 0.0
        %1398 = vmatprep.mubr.f32.mxu0 0.0
        %v1399 = vand.u32 %v250, 4294901760
        %1400 = vmatmul.mubr.f32.gmra.mrb[0].mxu0 %v1399
        %v1401 = vpop.f32.mrb[0].mxu0
        %v1402 = vadd.f32 %v1310, %v1401
        %v1403 = vpop.f32.mrb[0].mxu0
        %v1404 = vadd.f32 %v1312, %v1403
        %1405 = vdwg.mxu0
        %v1406 = vand.u32 %v215, 4294901760
        %v1407 = vsub.f32 %v215, %v1406
        %1408 = vmatprep.subr.mxu0 %v1407
        %v1409 = vand.u32 %v214, 4294901760
        %v1410 = vsub.f32 %v214, %v1409
        %1411 = vmatpush1.msra.mxu0 %v1410
        %v1412 = vand.u32 %v231, 4294901760
        %v1413 = vsub.f32 %v231, %v1412
        %1414 = vmatprep.subr.mxu0 %v1413
        %v1415 = vand.u32 %v230, 4294901760
        %v1416 = vsub.f32 %v230, %v1415
        %1417 = vmatpush1.msra.mxu0 %v1416
        %1418 = vmatprep.subr.mxu0 0.0
        %1419 = vmatpush1.msra.mxu0 0.0
        %1420 = vmatprep.subr.mxu0 0.0
        %1421 = vmatpush1.msra.mxu0 0.0
        %1422 = vmatprep.subr.mxu0 0.0
        %1423 = vmatpush1.msra.mxu0 0.0
        %1424 = vmatprep.subr.mxu0 0.0
        %1425 = vmatpush1.msra.mxu0 0.0
        %1426 = vmatprep.subr.mxu0 0.0
        %1427 = vmatpush1.msra.mxu0 0.0
        %1428 = vmatprep.subr.mxu0 0.0
        %1429 = vmatpush1.msra.mxu0 0.0
        %1430 = vmatprep.subr.mxu0 0.0
        %1431 = vmatpush1.msra.mxu0 0.0
        %1432 = vmatprep.subr.mxu0 0.0
        %1433 = vmatpush1.msra.mxu0 0.0
        %1434 = vmatprep.subr.mxu0 0.0
        %1435 = vmatpush1.msra.mxu0 0.0
        %1436 = vmatprep.subr.mxu0 0.0
        %1437 = vmatpush1.msra.mxu0 0.0
        %1438 = vmatprep.subr.mxu0 0.0
        %1439 = vmatpush1.msra.mxu0 0.0
        %1440 = vmatprep.subr.mxu0 0.0
        %1441 = vmatpush1.msra.mxu0 0.0
        %1442 = vmatprep.subr.mxu0 0.0
        %1443 = vmatpush1.msra.mxu0 0.0
        %1444 = vmatprep.subr.mxu0 0.0
        %1445 = vmatpush1.msra.mxu0 0.0
        %1446 = vmatprep.subr.mxu0 0.0
        %1447 = vmatpush1.msra.mxu0 0.0
        %1448 = vmatprep.subr.mxu0 0.0
        %1449 = vmatpush1.msra.mxu0 0.0
        %1450 = vmatprep.subr.mxu0 0.0
        %1451 = vmatpush1.msra.mxu0 0.0
        %1452 = vmatprep.subr.mxu0 0.0
        %1453 = vmatpush1.msra.mxu0 0.0
        %1454 = vmatprep.subr.mxu0 0.0
        %1455 = vmatpush1.msra.mxu0 0.0
        %1456 = vmatprep.subr.mxu0 0.0
        %1457 = vmatpush1.msra.mxu0 0.0
        %1458 = vmatprep.subr.mxu0 0.0
        %1459 = vmatpush1.msra.mxu0 0.0
        %1460 = vmatprep.subr.mxu0 0.0
        %1461 = vmatpush1.msra.mxu0 0.0
        %1462 = vmatprep.subr.mxu0 0.0
        %1463 = vmatpush1.msra.mxu0 0.0
        %1464 = vmatprep.subr.mxu0 0.0
        %1465 = vmatpush1.msra.mxu0 0.0
        %1466 = vmatprep.subr.mxu0 0.0
        %1467 = vmatpush1.msra.mxu0 0.0
        %1468 = vmatprep.subr.mxu0 0.0
        %1469 = vmatpush1.msra.mxu0 0.0
        %1470 = vmatprep.subr.mxu0 0.0
        %1471 = vmatpush1.msra.mxu0 0.0
        %1472 = vmatprep.subr.mxu0 0.0
        %1473 = vmatpush1.msra.mxu0 0.0
        %1474 = vmatprep.subr.mxu0 0.0
        %1475 = vmatpush1.msra.mxu0 0.0
        %1476 = vmatprep.subr.mxu0 0.0
        %1477 = vmatpush1.msra.mxu0 0.0
        %1478 = vmatprep.mubr.f32.mxu0 0.0
        %v1479 = vand.u32 %v250, 4294901760
        %v1480 = vsub.f32 %v250, %v1479
        %1481 = vmatmul.mubr.f32.gmra.mrb[0].mxu0 %v1480
        %v1482 = vpop.f32.mrb[0].mxu0
        %v1483 = vadd.f32 %v1402, %v1482
        %v1484 = vpop.f32.mrb[0].mxu0
        %v1485 = vadd.f32 %v1404, %v1484
        %1486 = vdwg.mxu0
        %v1487 = vand.u32 %v215, 4294901760
        %1488 = vmatprep.subr.mxu0 %v1487
        %v1489 = vand.u32 %v214, 4294901760
        %1490 = vmatpush1.msra.mxu0 %v1489
        %v1491 = vand.u32 %v231, 4294901760
        %1492 = vmatprep.subr.mxu0 %v1491
        %v1493 = vand.u32 %v230, 4294901760
        %1494 = vmatpush1.msra.mxu0 %v1493
        %1495 = vmatprep.subr.mxu0 0.0
        %1496 = vmatpush1.msra.mxu0 0.0
        %1497 = vmatprep.subr.mxu0 0.0
        %1498 = vmatpush1.msra.mxu0 0.0
        %1499 = vmatprep.subr.mxu0 0.0
        %1500 = vmatpush1.msra.mxu0 0.0
        %1501 = vmatprep.subr.mxu0 0.0
        %1502 = vmatpush1.msra.mxu0 0.0
        %1503 = vmatprep.subr.mxu0 0.0
        %1504 = vmatpush1.msra.mxu0 0.0
        %1505 = vmatprep.subr.mxu0 0.0
        %1506 = vmatpush1.msra.mxu0 0.0
        %1507 = vmatprep.subr.mxu0 0.0
        %1508 = vmatpush1.msra.mxu0 0.0
        %1509 = vmatprep.subr.mxu0 0.0
        %1510 = vmatpush1.msra.mxu0 0.0
        %1511 = vmatprep.subr.mxu0 0.0
        %1512 = vmatpush1.msra.mxu0 0.0
        %1513 = vmatprep.subr.mxu0 0.0
        %1514 = vmatpush1.msra.mxu0 0.0
        %1515 = vmatprep.subr.mxu0 0.0
        %1516 = vmatpush1.msra.mxu0 0.0
        %1517 = vmatprep.subr.mxu0 0.0
        %1518 = vmatpush1.msra.mxu0 0.0
        %1519 = vmatprep.subr.mxu0 0.0
        %1520 = vmatpush1.msra.mxu0 0.0
        %1521 = vmatprep.subr.mxu0 0.0
        %1522 = vmatpush1.msra.mxu0 0.0
        %1523 = vmatprep.subr.mxu0 0.0
        %1524 = vmatpush1.msra.mxu0 0.0
        %1525 = vmatprep.subr.mxu0 0.0
        %1526 = vmatpush1.msra.mxu0 0.0
        %1527 = vmatprep.subr.mxu0 0.0
        %1528 = vmatpush1.msra.mxu0 0.0
        %1529 = vmatprep.subr.mxu0 0.0
        %1530 = vmatpush1.msra.mxu0 0.0
        %1531 = vmatprep.subr.mxu0 0.0
        %1532 = vmatpush1.msra.mxu0 0.0
        %1533 = vmatprep.subr.mxu0 0.0
        %1534 = vmatpush1.msra.mxu0 0.0
        %1535 = vmatprep.subr.mxu0 0.0
        %1536 = vmatpush1.msra.mxu0 0.0
        %1537 = vmatprep.subr.mxu0 0.0
        %1538 = vmatpush1.msra.mxu0 0.0
        %1539 = vmatprep.subr.mxu0 0.0
        %1540 = vmatpush1.msra.mxu0 0.0
        %1541 = vmatprep.subr.mxu0 0.0
        %1542 = vmatpush1.msra.mxu0 0.0
        %1543 = vmatprep.subr.mxu0 0.0
        %1544 = vmatpush1.msra.mxu0 0.0
        %1545 = vmatprep.subr.mxu0 0.0
        %1546 = vmatpush1.msra.mxu0 0.0
        %1547 = vmatprep.subr.mxu0 0.0
        %1548 = vmatpush1.msra.mxu0 0.0
        %1549 = vmatprep.subr.mxu0 0.0
        %1550 = vmatpush1.msra.mxu0 0.0
        %1551 = vmatprep.subr.mxu0 0.0
        %1552 = vmatpush1.msra.mxu0 0.0
        %1553 = vmatprep.subr.mxu0 0.0
        %1554 = vmatpush1.msra.mxu0 0.0
        %1555 = vmatprep.mubr.f32.mxu0 0.0
        %v1556 = vand.u32 %v250, 4294901760
        %v1557 = vsub.f32 %v250, %v1556
        %v1558 = vand.u32 %v1557, 4294901760
        %1559 = vmatmul.mubr.f32.gmra.mrb[0].mxu0 %v1558
        %v1560 = vpop.f32.mrb[0].mxu0
        %v1561 = vadd.f32 %v1483, %v1560
        %v1562 = vpop.f32.mrb[0].mxu0
        %v1563 = vadd.f32 %v1485, %v1562
        %1564 = vdwg.mxu0
        %v1565 = vand.u32 %v215, 4294901760
        %v1566 = vsub.f32 %v215, %v1565
        %v1567 = vand.u32 %v1566, 4294901760
        %1568 = vmatprep.subr.mxu0 %v1567
        %v1569 = vand.u32 %v214, 4294901760
        %v1570 = vsub.f32 %v214, %v1569
        %v1571 = vand.u32 %v1570, 4294901760
        %1572 = vmatpush1.msra.mxu0 %v1571
        %v1573 = vand.u32 %v231, 4294901760
        %v1574 = vsub.f32 %v231, %v1573
        %v1575 = vand.u32 %v1574, 4294901760
        %1576 = vmatprep.subr.mxu0 %v1575
        %v1577 = vand.u32 %v230, 4294901760
        %v1578 = vsub.f32 %v230, %v1577
        %v1579 = vand.u32 %v1578, 4294901760
        %1580 = vmatpush1.msra.mxu0 %v1579
        %1581 = vmatprep.subr.mxu0 0.0
        %1582 = vmatpush1.msra.mxu0 0.0
        %1583 = vmatprep.subr.mxu0 0.0
        %1584 = vmatpush1.msra.mxu0 0.0
        %1585 = vmatprep.subr.mxu0 0.0
        %1586 = vmatpush1.msra.mxu0 0.0
        %1587 = vmatprep.subr.mxu0 0.0
        %1588 = vmatpush1.msra.mxu0 0.0
        %1589 = vmatprep.subr.mxu0 0.0
        %1590 = vmatpush1.msra.mxu0 0.0
        %1591 = vmatprep.subr.mxu0 0.0
        %1592 = vmatpush1.msra.mxu0 0.0
        %1593 = vmatprep.subr.mxu0 0.0
        %1594 = vmatpush1.msra.mxu0 0.0
        %1595 = vmatprep.subr.mxu0 0.0
        %1596 = vmatpush1.msra.mxu0 0.0
        %1597 = vmatprep.subr.mxu0 0.0
        %1598 = vmatpush1.msra.mxu0 0.0
        %1599 = vmatprep.subr.mxu0 0.0
        %1600 = vmatpush1.msra.mxu0 0.0
        %1601 = vmatprep.subr.mxu0 0.0
        %1602 = vmatpush1.msra.mxu0 0.0
        %1603 = vmatprep.subr.mxu0 0.0
        %1604 = vmatpush1.msra.mxu0 0.0
        %1605 = vmatprep.subr.mxu0 0.0
        %1606 = vmatpush1.msra.mxu0 0.0
        %1607 = vmatprep.subr.mxu0 0.0
        %1608 = vmatpush1.msra.mxu0 0.0
        %1609 = vmatprep.subr.mxu0 0.0
        %1610 = vmatpush1.msra.mxu0 0.0
        %1611 = vmatprep.subr.mxu0 0.0
        %1612 = vmatpush1.msra.mxu0 0.0
        %1613 = vmatprep.subr.mxu0 0.0
        %1614 = vmatpush1.msra.mxu0 0.0
        %1615 = vmatprep.subr.mxu0 0.0
        %1616 = vmatpush1.msra.mxu0 0.0
        %1617 = vmatprep.subr.mxu0 0.0
        %1618 = vmatpush1.msra.mxu0 0.0
        %1619 = vmatprep.subr.mxu0 0.0
        %1620 = vmatpush1.msra.mxu0 0.0
        %1621 = vmatprep.subr.mxu0 0.0
        %1622 = vmatpush1.msra.mxu0 0.0
        %1623 = vmatprep.subr.mxu0 0.0
        %1624 = vmatpush1.msra.mxu0 0.0
        %1625 = vmatprep.subr.mxu0 0.0
        %1626 = vmatpush1.msra.mxu0 0.0
        %1627 = vmatprep.subr.mxu0 0.0
        %1628 = vmatpush1.msra.mxu0 0.0
        %1629 = vmatprep.subr.mxu0 0.0
        %1630 = vmatpush1.msra.mxu0 0.0
        %1631 = vmatprep.subr.mxu0 0.0
        %1632 = vmatpush1.msra.mxu0 0.0
        %1633 = vmatprep.subr.mxu0 0.0
        %1634 = vmatpush1.msra.mxu0 0.0
        %1635 = vmatprep.subr.mxu0 0.0
        %1636 = vmatpush1.msra.mxu0 0.0
        %1637 = vmatprep.subr.mxu0 0.0
        %1638 = vmatpush1.msra.mxu0 0.0
        %1639 = vmatprep.subr.mxu0 0.0
        %1640 = vmatpush1.msra.mxu0 0.0
        %1641 = vmatprep.mubr.f32.mxu0 0.0
        %v1642 = vand.u32 %v250, 4294901760
        %1643 = vmatmul.mubr.f32.gmra.mrb[0].mxu0 %v1642
        %v1644 = vpop.f32.mrb[0].mxu0
        %v1645 = vadd.f32 %v1561, %v1644
        %v1646 = vpop.f32.mrb[0].mxu0
        %v1647 = vadd.f32 %v1563, %v1646
        %1648 = vdwg.mxu0
        %v1649 = vand.u32 %v215, 4294901760
        %1650 = vmatprep.subr.mxu0 %v1649
        %v1651 = vand.u32 %v214, 4294901760
        %1652 = vmatpush1.msra.mxu0 %v1651
        %v1653 = vand.u32 %v231, 4294901760
        %1654 = vmatprep.subr.mxu0 %v1653
        %v1655 = vand.u32 %v230, 4294901760
        %1656 = vmatpush1.msra.mxu0 %v1655
        %1657 = vmatprep.subr.mxu0 0.0
        %1658 = vmatpush1.msra.mxu0 0.0
        %1659 = vmatprep.subr.mxu0 0.0
        %1660 = vmatpush1.msra.mxu0 0.0
        %1661 = vmatprep.subr.mxu0 0.0
        %1662 = vmatpush1.msra.mxu0 0.0
        %1663 = vmatprep.subr.mxu0 0.0
        %1664 = vmatpush1.msra.mxu0 0.0
        %1665 = vmatprep.subr.mxu0 0.0
        %1666 = vmatpush1.msra.mxu0 0.0
        %1667 = vmatprep.subr.mxu0 0.0
        %1668 = vmatpush1.msra.mxu0 0.0
        %1669 = vmatprep.subr.mxu0 0.0
        %1670 = vmatpush1.msra.mxu0 0.0
        %1671 = vmatprep.subr.mxu0 0.0
        %1672 = vmatpush1.msra.mxu0 0.0
        %1673 = vmatprep.subr.mxu0 0.0
        %1674 = vmatpush1.msra.mxu0 0.0
        %1675 = vmatprep.subr.mxu0 0.0
        %1676 = vmatpush1.msra.mxu0 0.0
        %1677 = vmatprep.subr.mxu0 0.0
        %1678 = vmatpush1.msra.mxu0 0.0
        %1679 = vmatprep.subr.mxu0 0.0
        %1680 = vmatpush1.msra.mxu0 0.0
        %1681 = vmatprep.subr.mxu0 0.0
        %1682 = vmatpush1.msra.mxu0 0.0
        %1683 = vmatprep.subr.mxu0 0.0
        %1684 = vmatpush1.msra.mxu0 0.0
        %1685 = vmatprep.subr.mxu0 0.0
        %1686 = vmatpush1.msra.mxu0 0.0
        %1687 = vmatprep.subr.mxu0 0.0
        %1688 = vmatpush1.msra.mxu0 0.0
        %1689 = vmatprep.subr.mxu0 0.0
        %1690 = vmatpush1.msra.mxu0 0.0
        %1691 = vmatprep.subr.mxu0 0.0
        %1692 = vmatpush1.msra.mxu0 0.0
        %1693 = vmatprep.subr.mxu0 0.0
        %1694 = vmatpush1.msra.mxu0 0.0
        %1695 = vmatprep.subr.mxu0 0.0
        %1696 = vmatpush1.msra.mxu0 0.0
        %1697 = vmatprep.subr.mxu0 0.0
        %1698 = vmatpush1.msra.mxu0 0.0
        %1699 = vmatprep.subr.mxu0 0.0
        %1700 = vmatpush1.msra.mxu0 0.0
        %1701 = vmatprep.subr.mxu0 0.0
        %1702 = vmatpush1.msra.mxu0 0.0
        %1703 = vmatprep.subr.mxu0 0.0
        %1704 = vmatpush1.msra.mxu0 0.0
        %1705 = vmatprep.subr.mxu0 0.0
        %1706 = vmatpush1.msra.mxu0 0.0
        %1707 = vmatprep.subr.mxu0 0.0
        %1708 = vmatpush1.msra.mxu0 0.0
        %1709 = vmatprep.subr.mxu0 0.0
        %1710 = vmatpush1.msra.mxu0 0.0
        %1711 = vmatprep.subr.mxu0 0.0
        %1712 = vmatpush1.msra.mxu0 0.0
        %1713 = vmatprep.subr.mxu0 0.0
        %1714 = vmatpush1.msra.mxu0 0.0
        %1715 = vmatprep.subr.mxu0 0.0
        %1716 = vmatpush1.msra.mxu0 0.0
        %1717 = vmatprep.mubr.f32.mxu0 0.0
        %v1718 = vand.u32 %v250, 4294901760
        %1719 = vmatmul.mubr.f32.gmra.mrb[0].mxu0 %v1718
        %v1720 = vpop.f32.mrb[0].mxu0
        %v1721 = vadd.f32 %v1645, %v1720
        %v1722 = vpop.f32.mrb[0].mxu0
        %v1723 = vadd.f32 %v1647, %v1722
        %1724 = vdwg.mxu0
        %v1725 = vand.u32 %v217, 4294901760
        %1726 = vmatprep.subr.mxu0 %v1725
        %v1727 = vand.u32 %v216, 4294901760
        %1728 = vmatpush1.msra.mxu0 %v1727
        %v1729 = vand.u32 %v233, 4294901760
        %1730 = vmatprep.subr.mxu0 %v1729
        %v1731 = vand.u32 %v232, 4294901760
        %1732 = vmatpush1.msra.mxu0 %v1731
        %1733 = vmatprep.subr.mxu0 0.0
        %1734 = vmatpush1.msra.mxu0 0.0
        %1735 = vmatprep.subr.mxu0 0.0
        %1736 = vmatpush1.msra.mxu0 0.0
        %1737 = vmatprep.subr.mxu0 0.0
        %1738 = vmatpush1.msra.mxu0 0.0
        %1739 = vmatprep.subr.mxu0 0.0
        %1740 = vmatpush1.msra.mxu0 0.0
        %1741 = vmatprep.subr.mxu0 0.0
        %1742 = vmatpush1.msra.mxu0 0.0
        %1743 = vmatprep.subr.mxu0 0.0
        %1744 = vmatpush1.msra.mxu0 0.0
        %1745 = vmatprep.subr.mxu0 0.0
        %1746 = vmatpush1.msra.mxu0 0.0
        %1747 = vmatprep.subr.mxu0 0.0
        %1748 = vmatpush1.msra.mxu0 0.0
        %1749 = vmatprep.subr.mxu0 0.0
        %1750 = vmatpush1.msra.mxu0 0.0
        %1751 = vmatprep.subr.mxu0 0.0
        %1752 = vmatpush1.msra.mxu0 0.0
        %1753 = vmatprep.subr.mxu0 0.0
        %1754 = vmatpush1.msra.mxu0 0.0
        %1755 = vmatprep.subr.mxu0 0.0
        %1756 = vmatpush1.msra.mxu0 0.0
        %1757 = vmatprep.subr.mxu0 0.0
        %1758 = vmatpush1.msra.mxu0 0.0
        %1759 = vmatprep.subr.mxu0 0.0
        %1760 = vmatpush1.msra.mxu0 0.0
        %1761 = vmatprep.subr.mxu0 0.0
        %1762 = vmatpush1.msra.mxu0 0.0
        %1763 = vmatprep.subr.mxu0 0.0
        %1764 = vmatpush1.msra.mxu0 0.0
        %1765 = vmatprep.subr.mxu0 0.0
        %1766 = vmatpush1.msra.mxu0 0.0
        %1767 = vmatprep.subr.mxu0 0.0
        %1768 = vmatpush1.msra.mxu0 0.0
        %1769 = vmatprep.subr.mxu0 0.0
        %1770 = vmatpush1.msra.mxu0 0.0
        %1771 = vmatprep.subr.mxu0 0.0
        %1772 = vmatpush1.msra.mxu0 0.0
        %1773 = vmatprep.subr.mxu0 0.0
        %1774 = vmatpush1.msra.mxu0 0.0
        %1775 = vmatprep.subr.mxu0 0.0
        %1776 = vmatpush1.msra.mxu0 0.0
        %1777 = vmatprep.subr.mxu0 0.0
        %1778 = vmatpush1.msra.mxu0 0.0
        %1779 = vmatprep.subr.mxu0 0.0
        %1780 = vmatpush1.msra.mxu0 0.0
        %1781 = vmatprep.subr.mxu0 0.0
        %1782 = vmatpush1.msra.mxu0 0.0
        %1783 = vmatprep.subr.mxu0 0.0
        %1784 = vmatpush1.msra.mxu0 0.0
        %1785 = vmatprep.subr.mxu0 0.0
        %1786 = vmatpush1.msra.mxu0 0.0
        %1787 = vmatprep.subr.mxu0 0.0
        %1788 = vmatpush1.msra.mxu0 0.0
        %1789 = vmatprep.subr.mxu0 0.0
        %1790 = vmatpush1.msra.mxu0 0.0
        %1791 = vmatprep.subr.mxu0 0.0
        %1792 = vmatpush1.msra.mxu0 0.0
        %1793 = vmatprep.mubr.f32.mxu0 0.0
        %v1794 = vand.u32 %v250, 4294901760
        %v1795 = vsub.f32 %v250, %v1794
        %v1796 = vand.u32 %v1795, 4294901760
        %v1797 = vsub.f32 %v1795, %v1796
        %v1798 = vand.u32 %v1797, 4294901760
        %1799 = vmatmul.mubr.f32.gmra.mrb[0].mxu0 %v1798
        %v1800 = vpop.f32.mrb[0].mxu0
        %v1801 = vadd.f32 %v246, %v1800
        %v1802 = vpop.f32.mrb[0].mxu0
        %v1803 = vadd.f32 %v246, %v1802
        %1804 = vdwg.mxu0
        %v1805 = vand.u32 %v217, 4294901760
        %v1806 = vsub.f32 %v217, %v1805
        %v1807 = vand.u32 %v1806, 4294901760
        %v1808 = vsub.f32 %v1806, %v1807
        %v1809 = vand.u32 %v1808, 4294901760
        %1810 = vmatprep.subr.mxu0 %v1809
        %v1811 = vand.u32 %v216, 4294901760
        %v1812 = vsub.f32 %v216, %v1811
        %v1813 = vand.u32 %v1812, 4294901760
        %v1814 = vsub.f32 %v1812, %v1813
        %v1815 = vand.u32 %v1814, 4294901760
        %1816 = vmatpush1.msra.mxu0 %v1815
        %v1817 = vand.u32 %v233, 4294901760
        %v1818 = vsub.f32 %v233, %v1817
        %v1819 = vand.u32 %v1818, 4294901760
        %v1820 = vsub.f32 %v1818, %v1819
        %v1821 = vand.u32 %v1820, 4294901760
        %1822 = vmatprep.subr.mxu0 %v1821
        %v1823 = vand.u32 %v232, 4294901760
        %v1824 = vsub.f32 %v232, %v1823
        %v1825 = vand.u32 %v1824, 4294901760
        %v1826 = vsub.f32 %v1824, %v1825
        %v1827 = vand.u32 %v1826, 4294901760
        %1828 = vmatpush1.msra.mxu0 %v1827
        %1829 = vmatprep.subr.mxu0 0.0
        %1830 = vmatpush1.msra.mxu0 0.0
        %1831 = vmatprep.subr.mxu0 0.0
        %1832 = vmatpush1.msra.mxu0 0.0
        %1833 = vmatprep.subr.mxu0 0.0
        %1834 = vmatpush1.msra.mxu0 0.0
        %1835 = vmatprep.subr.mxu0 0.0
        %1836 = vmatpush1.msra.mxu0 0.0
        %1837 = vmatprep.subr.mxu0 0.0
        %1838 = vmatpush1.msra.mxu0 0.0
        %1839 = vmatprep.subr.mxu0 0.0
        %1840 = vmatpush1.msra.mxu0 0.0
        %1841 = vmatprep.subr.mxu0 0.0
        %1842 = vmatpush1.msra.mxu0 0.0
        %1843 = vmatprep.subr.mxu0 0.0
        %1844 = vmatpush1.msra.mxu0 0.0
        %1845 = vmatprep.subr.mxu0 0.0
        %1846 = vmatpush1.msra.mxu0 0.0
        %1847 = vmatprep.subr.mxu0 0.0
        %1848 = vmatpush1.msra.mxu0 0.0
        %1849 = vmatprep.subr.mxu0 0.0
        %1850 = vmatpush1.msra.mxu0 0.0
        %1851 = vmatprep.subr.mxu0 0.0
        %1852 = vmatpush1.msra.mxu0 0.0
        %1853 = vmatprep.subr.mxu0 0.0
        %1854 = vmatpush1.msra.mxu0 0.0
        %1855 = vmatprep.subr.mxu0 0.0
        %1856 = vmatpush1.msra.mxu0 0.0
        %1857 = vmatprep.subr.mxu0 0.0
        %1858 = vmatpush1.msra.mxu0 0.0
        %1859 = vmatprep.subr.mxu0 0.0
        %1860 = vmatpush1.msra.mxu0 0.0
        %1861 = vmatprep.subr.mxu0 0.0
        %1862 = vmatpush1.msra.mxu0 0.0
        %1863 = vmatprep.subr.mxu0 0.0
        %1864 = vmatpush1.msra.mxu0 0.0
        %1865 = vmatprep.subr.mxu0 0.0
        %1866 = vmatpush1.msra.mxu0 0.0
        %1867 = vmatprep.subr.mxu0 0.0
        %1868 = vmatpush1.msra.mxu0 0.0
        %1869 = vmatprep.subr.mxu0 0.0
        %1870 = vmatpush1.msra.mxu0 0.0
        %1871 = vmatprep.subr.mxu0 0.0
        %1872 = vmatpush1.msra.mxu0 0.0
        %1873 = vmatprep.subr.mxu0 0.0
        %1874 = vmatpush1.msra.mxu0 0.0
        %1875 = vmatprep.subr.mxu0 0.0
        %1876 = vmatpush1.msra.mxu0 0.0
        %1877 = vmatprep.subr.mxu0 0.0
        %1878 = vmatpush1.msra.mxu0 0.0
        %1879 = vmatprep.subr.mxu0 0.0
        %1880 = vmatpush1.msra.mxu0 0.0
        %1881 = vmatprep.subr.mxu0 0.0
        %1882 = vmatpush1.msra.mxu0 0.0
        %1883 = vmatprep.subr.mxu0 0.0
        %1884 = vmatpush1.msra.mxu0 0.0
        %1885 = vmatprep.subr.mxu0 0.0
        %1886 = vmatpush1.msra.mxu0 0.0
        %1887 = vmatprep.subr.mxu0 0.0
        %1888 = vmatpush1.msra.mxu0 0.0
        %1889 = vmatprep.mubr.f32.mxu0 0.0
        %v1890 = vand.u32 %v250, 4294901760
        %1891 = vmatmul.mubr.f32.gmra.mrb[0].mxu0 %v1890
        %v1892 = vpop.f32.mrb[0].mxu0
        %v1893 = vadd.f32 %v1801, %v1892
        %v1894 = vpop.f32.mrb[0].mxu0
        %v1895 = vadd.f32 %v1803, %v1894
        %1896 = vdwg.mxu0
        %v1897 = vand.u32 %v217, 4294901760
        %v1898 = vsub.f32 %v217, %v1897
        %1899 = vmatprep.subr.mxu0 %v1898
        %v1900 = vand.u32 %v216, 4294901760
        %v1901 = vsub.f32 %v216, %v1900
        %1902 = vmatpush1.msra.mxu0 %v1901
        %v1903 = vand.u32 %v233, 4294901760
        %v1904 = vsub.f32 %v233, %v1903
        %1905 = vmatprep.subr.mxu0 %v1904
        %v1906 = vand.u32 %v232, 4294901760
        %v1907 = vsub.f32 %v232, %v1906
        %1908 = vmatpush1.msra.mxu0 %v1907
        %1909 = vmatprep.subr.mxu0 0.0
        %1910 = vmatpush1.msra.mxu0 0.0
        %1911 = vmatprep.subr.mxu0 0.0
        %1912 = vmatpush1.msra.mxu0 0.0
        %1913 = vmatprep.subr.mxu0 0.0
        %1914 = vmatpush1.msra.mxu0 0.0
        %1915 = vmatprep.subr.mxu0 0.0
        %1916 = vmatpush1.msra.mxu0 0.0
        %1917 = vmatprep.subr.mxu0 0.0
        %1918 = vmatpush1.msra.mxu0 0.0
        %1919 = vmatprep.subr.mxu0 0.0
        %1920 = vmatpush1.msra.mxu0 0.0
        %1921 = vmatprep.subr.mxu0 0.0
        %1922 = vmatpush1.msra.mxu0 0.0
        %1923 = vmatprep.subr.mxu0 0.0
        %1924 = vmatpush1.msra.mxu0 0.0
        %1925 = vmatprep.subr.mxu0 0.0
        %1926 = vmatpush1.msra.mxu0 0.0
        %1927 = vmatprep.subr.mxu0 0.0
        %1928 = vmatpush1.msra.mxu0 0.0
        %1929 = vmatprep.subr.mxu0 0.0
        %1930 = vmatpush1.msra.mxu0 0.0
        %1931 = vmatprep.subr.mxu0 0.0
        %1932 = vmatpush1.msra.mxu0 0.0
        %1933 = vmatprep.subr.mxu0 0.0
        %1934 = vmatpush1.msra.mxu0 0.0
        %1935 = vmatprep.subr.mxu0 0.0
        %1936 = vmatpush1.msra.mxu0 0.0
        %1937 = vmatprep.subr.mxu0 0.0
        %1938 = vmatpush1.msra.mxu0 0.0
        %1939 = vmatprep.subr.mxu0 0.0
        %1940 = vmatpush1.msra.mxu0 0.0
        %1941 = vmatprep.subr.mxu0 0.0
        %1942 = vmatpush1.msra.mxu0 0.0
        %1943 = vmatprep.subr.mxu0 0.0
        %1944 = vmatpush1.msra.mxu0 0.0
        %1945 = vmatprep.subr.mxu0 0.0
        %1946 = vmatpush1.msra.mxu0 0.0
        %1947 = vmatprep.subr.mxu0 0.0
        %1948 = vmatpush1.msra.mxu0 0.0
        %1949 = vmatprep.subr.mxu0 0.0
        %1950 = vmatpush1.msra.mxu0 0.0
        %1951 = vmatprep.subr.mxu0 0.0
        %1952 = vmatpush1.msra.mxu0 0.0
        %1953 = vmatprep.subr.mxu0 0.0
        %1954 = vmatpush1.msra.mxu0 0.0
        %1955 = vmatprep.subr.mxu0 0.0
        %1956 = vmatpush1.msra.mxu0 0.0
        %1957 = vmatprep.subr.mxu0 0.0
        %1958 = vmatpush1.msra.mxu0 0.0
        %1959 = vmatprep.subr.mxu0 0.0
        %1960 = vmatpush1.msra.mxu0 0.0
        %1961 = vmatprep.subr.mxu0 0.0
        %1962 = vmatpush1.msra.mxu0 0.0
        %1963 = vmatprep.subr.mxu0 0.0
        %1964 = vmatpush1.msra.mxu0 0.0
        %1965 = vmatprep.subr.mxu0 0.0
        %1966 = vmatpush1.msra.mxu0 0.0
        %1967 = vmatprep.subr.mxu0 0.0
        %1968 = vmatpush1.msra.mxu0 0.0
        %1969 = vmatprep.mubr.f32.mxu0 0.0
        %v1970 = vand.u32 %v250, 4294901760
        %v1971 = vsub.f32 %v250, %v1970
        %1972 = vmatmul.mubr.f32.gmra.mrb[0].mxu0 %v1971
        %v1973 = vpop.f32.mrb[0].mxu0
        %v1974 = vadd.f32 %v1893, %v1973
        %v1975 = vpop.f32.mrb[0].mxu0
        %v1976 = vadd.f32 %v1895, %v1975
        %1977 = vdwg.mxu0
        %v1978 = vand.u32 %v217, 4294901760
        %1979 = vmatprep.subr.mxu0 %v1978
        %v1980 = vand.u32 %v216, 4294901760
        %1981 = vmatpush1.msra.mxu0 %v1980
        %v1982 = vand.u32 %v233, 4294901760
        %1983 = vmatprep.subr.mxu0 %v1982
        %v1984 = vand.u32 %v232, 4294901760
        %1985 = vmatpush1.msra.mxu0 %v1984
        %1986 = vmatprep.subr.mxu0 0.0
        %1987 = vmatpush1.msra.mxu0 0.0
        %1988 = vmatprep.subr.mxu0 0.0
        %1989 = vmatpush1.msra.mxu0 0.0
        %1990 = vmatprep.subr.mxu0 0.0
        %1991 = vmatpush1.msra.mxu0 0.0
        %1992 = vmatprep.subr.mxu0 0.0
        %1993 = vmatpush1.msra.mxu0 0.0
        %1994 = vmatprep.subr.mxu0 0.0
        %1995 = vmatpush1.msra.mxu0 0.0
        %1996 = vmatprep.subr.mxu0 0.0
        %1997 = vmatpush1.msra.mxu0 0.0
        %1998 = vmatprep.subr.mxu0 0.0
        %1999 = vmatpush1.msra.mxu0 0.0
        %2000 = vmatprep.subr.mxu0 0.0
        %2001 = vmatpush1.msra.mxu0 0.0
        %2002 = vmatprep.subr.mxu0 0.0
        %2003 = vmatpush1.msra.mxu0 0.0
        %2004 = vmatprep.subr.mxu0 0.0
        %2005 = vmatpush1.msra.mxu0 0.0
        %2006 = vmatprep.subr.mxu0 0.0
        %2007 = vmatpush1.msra.mxu0 0.0
        %2008 = vmatprep.subr.mxu0 0.0
        %2009 = vmatpush1.msra.mxu0 0.0
        %2010 = vmatprep.subr.mxu0 0.0
        %2011 = vmatpush1.msra.mxu0 0.0
        %2012 = vmatprep.subr.mxu0 0.0
        %2013 = vmatpush1.msra.mxu0 0.0
        %2014 = vmatprep.subr.mxu0 0.0
        %2015 = vmatpush1.msra.mxu0 0.0
        %2016 = vmatprep.subr.mxu0 0.0
        %2017 = vmatpush1.msra.mxu0 0.0
        %2018 = vmatprep.subr.mxu0 0.0
        %2019 = vmatpush1.msra.mxu0 0.0
        %2020 = vmatprep.subr.mxu0 0.0
        %2021 = vmatpush1.msra.mxu0 0.0
        %2022 = vmatprep.subr.mxu0 0.0
        %2023 = vmatpush1.msra.mxu0 0.0
        %2024 = vmatprep.subr.mxu0 0.0
        %2025 = vmatpush1.msra.mxu0 0.0
        %2026 = vmatprep.subr.mxu0 0.0
        %2027 = vmatpush1.msra.mxu0 0.0
        %2028 = vmatprep.subr.mxu0 0.0
        %2029 = vmatpush1.msra.mxu0 0.0
        %2030 = vmatprep.subr.mxu0 0.0
        %2031 = vmatpush1.msra.mxu0 0.0
        %2032 = vmatprep.subr.mxu0 0.0
        %2033 = vmatpush1.msra.mxu0 0.0
        %2034 = vmatprep.subr.mxu0 0.0
        %2035 = vmatpush1.msra.mxu0 0.0
        %2036 = vmatprep.subr.mxu0 0.0
        %2037 = vmatpush1.msra.mxu0 0.0
        %2038 = vmatprep.subr.mxu0 0.0
        %2039 = vmatpush1.msra.mxu0 0.0
        %2040 = vmatprep.subr.mxu0 0.0
        %2041 = vmatpush1.msra.mxu0 0.0
        %2042 = vmatprep.subr.mxu0 0.0
        %2043 = vmatpush1.msra.mxu0 0.0
        %2044 = vmatprep.subr.mxu0 0.0
        %2045 = vmatpush1.msra.mxu0 0.0
        %2046 = vmatprep.mubr.f32.mxu0 0.0
        %v2047 = vand.u32 %v250, 4294901760
        %v2048 = vsub.f32 %v250, %v2047
        %v2049 = vand.u32 %v2048, 4294901760
        %2050 = vmatmul.mubr.f32.gmra.mrb[0].mxu0 %v2049
        %v2051 = vpop.f32.mrb[0].mxu0
        %v2052 = vadd.f32 %v1974, %v2051
        %v2053 = vpop.f32.mrb[0].mxu0
        %v2054 = vadd.f32 %v1976, %v2053
        %2055 = vdwg.mxu0
        %v2056 = vand.u32 %v217, 4294901760
        %v2057 = vsub.f32 %v217, %v2056
        %v2058 = vand.u32 %v2057, 4294901760
        %2059 = vmatprep.subr.mxu0 %v2058
        %v2060 = vand.u32 %v216, 4294901760
        %v2061 = vsub.f32 %v216, %v2060
        %v2062 = vand.u32 %v2061, 4294901760
        %2063 = vmatpush1.msra.mxu0 %v2062
        %v2064 = vand.u32 %v233, 4294901760
        %v2065 = vsub.f32 %v233, %v2064
        %v2066 = vand.u32 %v2065, 4294901760
        %2067 = vmatprep.subr.mxu0 %v2066
        %v2068 = vand.u32 %v232, 4294901760
        %v2069 = vsub.f32 %v232, %v2068
        %v2070 = vand.u32 %v2069, 4294901760
        %2071 = vmatpush1.msra.mxu0 %v2070
        %2072 = vmatprep.subr.mxu0 0.0
        %2073 = vmatpush1.msra.mxu0 0.0
        %2074 = vmatprep.subr.mxu0 0.0
        %2075 = vmatpush1.msra.mxu0 0.0
        %2076 = vmatprep.subr.mxu0 0.0
        %2077 = vmatpush1.msra.mxu0 0.0
        %2078 = vmatprep.subr.mxu0 0.0
        %2079 = vmatpush1.msra.mxu0 0.0
        %2080 = vmatprep.subr.mxu0 0.0
        %2081 = vmatpush1.msra.mxu0 0.0
        %2082 = vmatprep.subr.mxu0 0.0
        %2083 = vmatpush1.msra.mxu0 0.0
        %2084 = vmatprep.subr.mxu0 0.0
        %2085 = vmatpush1.msra.mxu0 0.0
        %2086 = vmatprep.subr.mxu0 0.0
        %2087 = vmatpush1.msra.mxu0 0.0
        %2088 = vmatprep.subr.mxu0 0.0
        %2089 = vmatpush1.msra.mxu0 0.0
        %2090 = vmatprep.subr.mxu0 0.0
        %2091 = vmatpush1.msra.mxu0 0.0
        %2092 = vmatprep.subr.mxu0 0.0
        %2093 = vmatpush1.msra.mxu0 0.0
        %2094 = vmatprep.subr.mxu0 0.0
        %2095 = vmatpush1.msra.mxu0 0.0
        %2096 = vmatprep.subr.mxu0 0.0
        %2097 = vmatpush1.msra.mxu0 0.0
        %2098 = vmatprep.subr.mxu0 0.0
        %2099 = vmatpush1.msra.mxu0 0.0
        %2100 = vmatprep.subr.mxu0 0.0
        %2101 = vmatpush1.msra.mxu0 0.0
        %2102 = vmatprep.subr.mxu0 0.0
        %2103 = vmatpush1.msra.mxu0 0.0
        %2104 = vmatprep.subr.mxu0 0.0
        %2105 = vmatpush1.msra.mxu0 0.0
        %2106 = vmatprep.subr.mxu0 0.0
        %2107 = vmatpush1.msra.mxu0 0.0
        %2108 = vmatprep.subr.mxu0 0.0
        %2109 = vmatpush1.msra.mxu0 0.0
        %2110 = vmatprep.subr.mxu0 0.0
        %2111 = vmatpush1.msra.mxu0 0.0
        %2112 = vmatprep.subr.mxu0 0.0
        %2113 = vmatpush1.msra.mxu0 0.0
        %2114 = vmatprep.subr.mxu0 0.0
        %2115 = vmatpush1.msra.mxu0 0.0
        %2116 = vmatprep.subr.mxu0 0.0
        %2117 = vmatpush1.msra.mxu0 0.0
        %2118 = vmatprep.subr.mxu0 0.0
        %2119 = vmatpush1.msra.mxu0 0.0
        %2120 = vmatprep.subr.mxu0 0.0
        %2121 = vmatpush1.msra.mxu0 0.0
        %2122 = vmatprep.subr.mxu0 0.0
        %2123 = vmatpush1.msra.mxu0 0.0
        %2124 = vmatprep.subr.mxu0 0.0
        %2125 = vmatpush1.msra.mxu0 0.0
        %2126 = vmatprep.subr.mxu0 0.0
        %2127 = vmatpush1.msra.mxu0 0.0
        %2128 = vmatprep.subr.mxu0 0.0
        %2129 = vmatpush1.msra.mxu0 0.0
        %2130 = vmatprep.subr.mxu0 0.0
        %2131 = vmatpush1.msra.mxu0 0.0
        %2132 = vmatprep.mubr.f32.mxu0 0.0
        %v2133 = vand.u32 %v250, 4294901760
        %2134 = vmatmul.mubr.f32.gmra.mrb[0].mxu0 %v2133
        %v2135 = vpop.f32.mrb[0].mxu0
        %v2136 = vadd.f32 %v2052, %v2135
        %v2137 = vpop.f32.mrb[0].mxu0
        %v2138 = vadd.f32 %v2054, %v2137
        %2139 = vdwg.mxu0
        %v2140 = vand.u32 %v217, 4294901760
        %2141 = vmatprep.subr.mxu0 %v2140
        %v2142 = vand.u32 %v216, 4294901760
        %2143 = vmatpush1.msra.mxu0 %v2142
        %v2144 = vand.u32 %v233, 4294901760
        %2145 = vmatprep.subr.mxu0 %v2144
        %v2146 = vand.u32 %v232, 4294901760
        %2147 = vmatpush1.msra.mxu0 %v2146
        %2148 = vmatprep.subr.mxu0 0.0
        %2149 = vmatpush1.msra.mxu0 0.0
        %2150 = vmatprep.subr.mxu0 0.0
        %2151 = vmatpush1.msra.mxu0 0.0
        %2152 = vmatprep.subr.mxu0 0.0
        %2153 = vmatpush1.msra.mxu0 0.0
        %2154 = vmatprep.subr.mxu0 0.0
        %2155 = vmatpush1.msra.mxu0 0.0
        %2156 = vmatprep.subr.mxu0 0.0
        %2157 = vmatpush1.msra.mxu0 0.0
        %2158 = vmatprep.subr.mxu0 0.0
        %2159 = vmatpush1.msra.mxu0 0.0
        %2160 = vmatprep.subr.mxu0 0.0
        %2161 = vmatpush1.msra.mxu0 0.0
        %2162 = vmatprep.subr.mxu0 0.0
        %2163 = vmatpush1.msra.mxu0 0.0
        %2164 = vmatprep.subr.mxu0 0.0
        %2165 = vmatpush1.msra.mxu0 0.0
        %2166 = vmatprep.subr.mxu0 0.0
        %2167 = vmatpush1.msra.mxu0 0.0
        %2168 = vmatprep.subr.mxu0 0.0
        %2169 = vmatpush1.msra.mxu0 0.0
        %2170 = vmatprep.subr.mxu0 0.0
        %2171 = vmatpush1.msra.mxu0 0.0
        %2172 = vmatprep.subr.mxu0 0.0
        %2173 = vmatpush1.msra.mxu0 0.0
        %2174 = vmatprep.subr.mxu0 0.0
        %2175 = vmatpush1.msra.mxu0 0.0
        %2176 = vmatprep.subr.mxu0 0.0
        %2177 = vmatpush1.msra.mxu0 0.0
        %2178 = vmatprep.subr.mxu0 0.0
        %2179 = vmatpush1.msra.mxu0 0.0
        %2180 = vmatprep.subr.mxu0 0.0
        %2181 = vmatpush1.msra.mxu0 0.0
        %2182 = vmatprep.subr.mxu0 0.0
        %2183 = vmatpush1.msra.mxu0 0.0
        %2184 = vmatprep.subr.mxu0 0.0
        %2185 = vmatpush1.msra.mxu0 0.0
        %2186 = vmatprep.subr.mxu0 0.0
        %2187 = vmatpush1.msra.mxu0 0.0
        %2188 = vmatprep.subr.mxu0 0.0
        %2189 = vmatpush1.msra.mxu0 0.0
        %2190 = vmatprep.subr.mxu0 0.0
        %2191 = vmatpush1.msra.mxu0 0.0
        %2192 = vmatprep.subr.mxu0 0.0
        %2193 = vmatpush1.msra.mxu0 0.0
        %2194 = vmatprep.subr.mxu0 0.0
        %2195 = vmatpush1.msra.mxu0 0.0
        %2196 = vmatprep.subr.mxu0 0.0
        %2197 = vmatpush1.msra.mxu0 0.0
        %2198 = vmatprep.subr.mxu0 0.0
        %2199 = vmatpush1.msra.mxu0 0.0
        %2200 = vmatprep.subr.mxu0 0.0
        %2201 = vmatpush1.msra.mxu0 0.0
        %2202 = vmatprep.subr.mxu0 0.0
        %2203 = vmatpush1.msra.mxu0 0.0
        %2204 = vmatprep.subr.mxu0 0.0
        %2205 = vmatpush1.msra.mxu0 0.0
        %2206 = vmatprep.subr.mxu0 0.0
        %2207 = vmatpush1.msra.mxu0 0.0
        %2208 = vmatprep.mubr.f32.mxu0 0.0
        %v2209 = vand.u32 %v250, 4294901760
        %2210 = vmatmul.mubr.f32.gmra.mrb[0].mxu0 %v2209
        %v2211 = vpop.f32.mrb[0].mxu0
        %v2212 = vadd.f32 %v2136, %v2211
        %v2213 = vpop.f32.mrb[0].mxu0
        %v2214 = vadd.f32 %v2138, %v2213
        %2215 = vdwg.mxu0
        %v2216 = vand.u32 %v219, 4294901760
        %2217 = vmatprep.subr.mxu0 %v2216
        %v2218 = vand.u32 %v218, 4294901760
        %2219 = vmatpush1.msra.mxu0 %v2218
        %v2220 = vand.u32 %v235, 4294901760
        %2221 = vmatprep.subr.mxu0 %v2220
        %v2222 = vand.u32 %v234, 4294901760
        %2223 = vmatpush1.msra.mxu0 %v2222
        %2224 = vmatprep.subr.mxu0 0.0
        %2225 = vmatpush1.msra.mxu0 0.0
        %2226 = vmatprep.subr.mxu0 0.0
        %2227 = vmatpush1.msra.mxu0 0.0
        %2228 = vmatprep.subr.mxu0 0.0
        %2229 = vmatpush1.msra.mxu0 0.0
        %2230 = vmatprep.subr.mxu0 0.0
        %2231 = vmatpush1.msra.mxu0 0.0
        %2232 = vmatprep.subr.mxu0 0.0
        %2233 = vmatpush1.msra.mxu0 0.0
        %2234 = vmatprep.subr.mxu0 0.0
        %2235 = vmatpush1.msra.mxu0 0.0
        %2236 = vmatprep.subr.mxu0 0.0
        %2237 = vmatpush1.msra.mxu0 0.0
        %2238 = vmatprep.subr.mxu0 0.0
        %2239 = vmatpush1.msra.mxu0 0.0
        %2240 = vmatprep.subr.mxu0 0.0
        %2241 = vmatpush1.msra.mxu0 0.0
        %2242 = vmatprep.subr.mxu0 0.0
        %2243 = vmatpush1.msra.mxu0 0.0
        %2244 = vmatprep.subr.mxu0 0.0
        %2245 = vmatpush1.msra.mxu0 0.0
        %2246 = vmatprep.subr.mxu0 0.0
        %2247 = vmatpush1.msra.mxu0 0.0
        %2248 = vmatprep.subr.mxu0 0.0
        %2249 = vmatpush1.msra.mxu0 0.0
        %2250 = vmatprep.subr.mxu0 0.0
        %2251 = vmatpush1.msra.mxu0 0.0
        %2252 = vmatprep.subr.mxu0 0.0
        %2253 = vmatpush1.msra.mxu0 0.0
        %2254 = vmatprep.subr.mxu0 0.0
        %2255 = vmatpush1.msra.mxu0 0.0
        %2256 = vmatprep.subr.mxu0 0.0
        %2257 = vmatpush1.msra.mxu0 0.0
        %2258 = vmatprep.subr.mxu0 0.0
        %2259 = vmatpush1.msra.mxu0 0.0
        %2260 = vmatprep.subr.mxu0 0.0
        %2261 = vmatpush1.msra.mxu0 0.0
        %2262 = vmatprep.subr.mxu0 0.0
        %2263 = vmatpush1.msra.mxu0 0.0
        %2264 = vmatprep.subr.mxu0 0.0
        %2265 = vmatpush1.msra.mxu0 0.0
        %2266 = vmatprep.subr.mxu0 0.0
        %2267 = vmatpush1.msra.mxu0 0.0
        %2268 = vmatprep.subr.mxu0 0.0
        %2269 = vmatpush1.msra.mxu0 0.0
        %2270 = vmatprep.subr.mxu0 0.0
        %2271 = vmatpush1.msra.mxu0 0.0
        %2272 = vmatprep.subr.mxu0 0.0
        %2273 = vmatpush1.msra.mxu0 0.0
        %2274 = vmatprep.subr.mxu0 0.0
        %2275 = vmatpush1.msra.mxu0 0.0
        %2276 = vmatprep.subr.mxu0 0.0
        %2277 = vmatpush1.msra.mxu0 0.0
        %2278 = vmatprep.subr.mxu0 0.0
        %2279 = vmatpush1.msra.mxu0 0.0
        %2280 = vmatprep.subr.mxu0 0.0
        %2281 = vmatpush1.msra.mxu0 0.0
        %2282 = vmatprep.subr.mxu0 0.0
        %2283 = vmatpush1.msra.mxu0 0.0
        %2284 = vmatprep.mubr.f32.mxu0 0.0
        %v2285 = vand.u32 %v250, 4294901760
        %v2286 = vsub.f32 %v250, %v2285
        %v2287 = vand.u32 %v2286, 4294901760
        %v2288 = vsub.f32 %v2286, %v2287
        %v2289 = vand.u32 %v2288, 4294901760
        %2290 = vmatmul.mubr.f32.gmra.mrb[0].mxu0 %v2289
        %v2291 = vpop.f32.mrb[0].mxu0
        %v2292 = vadd.f32 %v246, %v2291
        %v2293 = vpop.f32.mrb[0].mxu0
        %v2294 = vadd.f32 %v246, %v2293
        %2295 = vdwg.mxu0
        %v2296 = vand.u32 %v219, 4294901760
        %v2297 = vsub.f32 %v219, %v2296
        %v2298 = vand.u32 %v2297, 4294901760
        %v2299 = vsub.f32 %v2297, %v2298
        %v2300 = vand.u32 %v2299, 4294901760
        %2301 = vmatprep.subr.mxu0 %v2300
        %v2302 = vand.u32 %v218, 4294901760
        %v2303 = vsub.f32 %v218, %v2302
        %v2304 = vand.u32 %v2303, 4294901760
        %v2305 = vsub.f32 %v2303, %v2304
        %v2306 = vand.u32 %v2305, 4294901760
        %2307 = vmatpush1.msra.mxu0 %v2306
        %v2308 = vand.u32 %v235, 4294901760
        %v2309 = vsub.f32 %v235, %v2308
        %v2310 = vand.u32 %v2309, 4294901760
        %v2311 = vsub.f32 %v2309, %v2310
        %v2312 = vand.u32 %v2311, 4294901760
        %2313 = vmatprep.subr.mxu0 %v2312
        %v2314 = vand.u32 %v234, 4294901760
        %v2315 = vsub.f32 %v234, %v2314
        %v2316 = vand.u32 %v2315, 4294901760
        %v2317 = vsub.f32 %v2315, %v2316
        %v2318 = vand.u32 %v2317, 4294901760
        %2319 = vmatpush1.msra.mxu0 %v2318
        %2320 = vmatprep.subr.mxu0 0.0
        %2321 = vmatpush1.msra.mxu0 0.0
        %2322 = vmatprep.subr.mxu0 0.0
        %2323 = vmatpush1.msra.mxu0 0.0
        %2324 = vmatprep.subr.mxu0 0.0
        %2325 = vmatpush1.msra.mxu0 0.0
        %2326 = vmatprep.subr.mxu0 0.0
        %2327 = vmatpush1.msra.mxu0 0.0
        %2328 = vmatprep.subr.mxu0 0.0
        %2329 = vmatpush1.msra.mxu0 0.0
        %2330 = vmatprep.subr.mxu0 0.0
        %2331 = vmatpush1.msra.mxu0 0.0
        %2332 = vmatprep.subr.mxu0 0.0
        %2333 = vmatpush1.msra.mxu0 0.0
        %2334 = vmatprep.subr.mxu0 0.0
        %2335 = vmatpush1.msra.mxu0 0.0
        %2336 = vmatprep.subr.mxu0 0.0
        %2337 = vmatpush1.msra.mxu0 0.0
        %2338 = vmatprep.subr.mxu0 0.0
        %2339 = vmatpush1.msra.mxu0 0.0
        %2340 = vmatprep.subr.mxu0 0.0
        %2341 = vmatpush1.msra.mxu0 0.0
        %2342 = vmatprep.subr.mxu0 0.0
        %2343 = vmatpush1.msra.mxu0 0.0
        %2344 = vmatprep.subr.mxu0 0.0
        %2345 = vmatpush1.msra.mxu0 0.0
        %2346 = vmatprep.subr.mxu0 0.0
        %2347 = vmatpush1.msra.mxu0 0.0
        %2348 = vmatprep.subr.mxu0 0.0
        %2349 = vmatpush1.msra.mxu0 0.0
        %2350 = vmatprep.subr.mxu0 0.0
        %2351 = vmatpush1.msra.mxu0 0.0
        %2352 = vmatprep.subr.mxu0 0.0
        %2353 = vmatpush1.msra.mxu0 0.0
        %2354 = vmatprep.subr.mxu0 0.0
        %2355 = vmatpush1.msra.mxu0 0.0
        %2356 = vmatprep.subr.mxu0 0.0
        %2357 = vmatpush1.msra.mxu0 0.0
        %2358 = vmatprep.subr.mxu0 0.0
        %2359 = vmatpush1.msra.mxu0 0.0
        %2360 = vmatprep.subr.mxu0 0.0
        %2361 = vmatpush1.msra.mxu0 0.0
        %2362 = vmatprep.subr.mxu0 0.0
        %2363 = vmatpush1.msra.mxu0 0.0
        %2364 = vmatprep.subr.mxu0 0.0
        %2365 = vmatpush1.msra.mxu0 0.0
        %2366 = vmatprep.subr.mxu0 0.0
        %2367 = vmatpush1.msra.mxu0 0.0
        %2368 = vmatprep.subr.mxu0 0.0
        %2369 = vmatpush1.msra.mxu0 0.0
        %2370 = vmatprep.subr.mxu0 0.0
        %2371 = vmatpush1.msra.mxu0 0.0
        %2372 = vmatprep.subr.mxu0 0.0
        %2373 = vmatpush1.msra.mxu0 0.0
        %2374 = vmatprep.subr.mxu0 0.0
        %2375 = vmatpush1.msra.mxu0 0.0
        %2376 = vmatprep.subr.mxu0 0.0
        %2377 = vmatpush1.msra.mxu0 0.0
        %2378 = vmatprep.subr.mxu0 0.0
        %2379 = vmatpush1.msra.mxu0 0.0
        %2380 = vmatprep.mubr.f32.mxu0 0.0
        %v2381 = vand.u32 %v250, 4294901760
        %2382 = vmatmul.mubr.f32.gmra.mrb[0].mxu0 %v2381
        %v2383 = vpop.f32.mrb[0].mxu0
        %v2384 = vadd.f32 %v2292, %v2383
        %v2385 = vpop.f32.mrb[0].mxu0
        %v2386 = vadd.f32 %v2294, %v2385
        %2387 = vdwg.mxu0
        %v2388 = vand.u32 %v219, 4294901760
        %v2389 = vsub.f32 %v219, %v2388
        %2390 = vmatprep.subr.mxu0 %v2389
        %v2391 = vand.u32 %v218, 4294901760
        %v2392 = vsub.f32 %v218, %v2391
        %2393 = vmatpush1.msra.mxu0 %v2392
        %v2394 = vand.u32 %v235, 4294901760
        %v2395 = vsub.f32 %v235, %v2394
        %2396 = vmatprep.subr.mxu0 %v2395
        %v2397 = vand.u32 %v234, 4294901760
        %v2398 = vsub.f32 %v234, %v2397
        %2399 = vmatpush1.msra.mxu0 %v2398
        %2400 = vmatprep.subr.mxu0 0.0
        %2401 = vmatpush1.msra.mxu0 0.0
        %2402 = vmatprep.subr.mxu0 0.0
        %2403 = vmatpush1.msra.mxu0 0.0
        %2404 = vmatprep.subr.mxu0 0.0
        %2405 = vmatpush1.msra.mxu0 0.0
        %2406 = vmatprep.subr.mxu0 0.0
        %2407 = vmatpush1.msra.mxu0 0.0
        %2408 = vmatprep.subr.mxu0 0.0
        %2409 = vmatpush1.msra.mxu0 0.0
        %2410 = vmatprep.subr.mxu0 0.0
        %2411 = vmatpush1.msra.mxu0 0.0
        %2412 = vmatprep.subr.mxu0 0.0
        %2413 = vmatpush1.msra.mxu0 0.0
        %2414 = vmatprep.subr.mxu0 0.0
        %2415 = vmatpush1.msra.mxu0 0.0
        %2416 = vmatprep.subr.mxu0 0.0
        %2417 = vmatpush1.msra.mxu0 0.0
        %2418 = vmatprep.subr.mxu0 0.0
        %2419 = vmatpush1.msra.mxu0 0.0
        %2420 = vmatprep.subr.mxu0 0.0
        %2421 = vmatpush1.msra.mxu0 0.0
        %2422 = vmatprep.subr.mxu0 0.0
        %2423 = vmatpush1.msra.mxu0 0.0
        %2424 = vmatprep.subr.mxu0 0.0
        %2425 = vmatpush1.msra.mxu0 0.0
        %2426 = vmatprep.subr.mxu0 0.0
        %2427 = vmatpush1.msra.mxu0 0.0
        %2428 = vmatprep.subr.mxu0 0.0
        %2429 = vmatpush1.msra.mxu0 0.0
        %2430 = vmatprep.subr.mxu0 0.0
        %2431 = vmatpush1.msra.mxu0 0.0
        %2432 = vmatprep.subr.mxu0 0.0
        %2433 = vmatpush1.msra.mxu0 0.0
        %2434 = vmatprep.subr.mxu0 0.0
        %2435 = vmatpush1.msra.mxu0 0.0
        %2436 = vmatprep.subr.mxu0 0.0
        %2437 = vmatpush1.msra.mxu0 0.0
        %2438 = vmatprep.subr.mxu0 0.0
        %2439 = vmatpush1.msra.mxu0 0.0
        %2440 = vmatprep.subr.mxu0 0.0
        %2441 = vmatpush1.msra.mxu0 0.0
        %2442 = vmatprep.subr.mxu0 0.0
        %2443 = vmatpush1.msra.mxu0 0.0
        %2444 = vmatprep.subr.mxu0 0.0
        %2445 = vmatpush1.msra.mxu0 0.0
        %2446 = vmatprep.subr.mxu0 0.0
        %2447 = vmatpush1.msra.mxu0 0.0
        %2448 = vmatprep.subr.mxu0 0.0
        %2449 = vmatpush1.msra.mxu0 0.0
        %2450 = vmatprep.subr.mxu0 0.0
        %2451 = vmatpush1.msra.mxu0 0.0
        %2452 = vmatprep.subr.mxu0 0.0
        %2453 = vmatpush1.msra.mxu0 0.0
        %2454 = vmatprep.subr.mxu0 0.0
        %2455 = vmatpush1.msra.mxu0 0.0
        %2456 = vmatprep.subr.mxu0 0.0
        %2457 = vmatpush1.msra.mxu0 0.0
        %2458 = vmatprep.subr.mxu0 0.0
        %2459 = vmatpush1.msra.mxu0 0.0
        %2460 = vmatprep.mubr.f32.mxu0 0.0
        %v2461 = vand.u32 %v250, 4294901760
        %v2462 = vsub.f32 %v250, %v2461
        %2463 = vmatmul.mubr.f32.gmra.mrb[0].mxu0 %v2462
        %v2464 = vpop.f32.mrb[0].mxu0
        %v2465 = vadd.f32 %v2384, %v2464
        %v2466 = vpop.f32.mrb[0].mxu0
        %v2467 = vadd.f32 %v2386, %v2466
        %2468 = vdwg.mxu0
        %v2469 = vand.u32 %v219, 4294901760
        %2470 = vmatprep.subr.mxu0 %v2469
        %v2471 = vand.u32 %v218, 4294901760
        %2472 = vmatpush1.msra.mxu0 %v2471
        %v2473 = vand.u32 %v235, 4294901760
        %2474 = vmatprep.subr.mxu0 %v2473
        %v2475 = vand.u32 %v234, 4294901760
        %2476 = vmatpush1.msra.mxu0 %v2475
        %2477 = vmatprep.subr.mxu0 0.0
        %2478 = vmatpush1.msra.mxu0 0.0
        %2479 = vmatprep.subr.mxu0 0.0
        %2480 = vmatpush1.msra.mxu0 0.0
        %2481 = vmatprep.subr.mxu0 0.0
        %2482 = vmatpush1.msra.mxu0 0.0
        %2483 = vmatprep.subr.mxu0 0.0
        %2484 = vmatpush1.msra.mxu0 0.0
        %2485 = vmatprep.subr.mxu0 0.0
        %2486 = vmatpush1.msra.mxu0 0.0
        %2487 = vmatprep.subr.mxu0 0.0
        %2488 = vmatpush1.msra.mxu0 0.0
        %2489 = vmatprep.subr.mxu0 0.0
        %2490 = vmatpush1.msra.mxu0 0.0
        %2491 = vmatprep.subr.mxu0 0.0
        %2492 = vmatpush1.msra.mxu0 0.0
        %2493 = vmatprep.subr.mxu0 0.0
        %2494 = vmatpush1.msra.mxu0 0.0
        %2495 = vmatprep.subr.mxu0 0.0
        %2496 = vmatpush1.msra.mxu0 0.0
        %2497 = vmatprep.subr.mxu0 0.0
        %2498 = vmatpush1.msra.mxu0 0.0
        %2499 = vmatprep.subr.mxu0 0.0
        %2500 = vmatpush1.msra.mxu0 0.0
        %2501 = vmatprep.subr.mxu0 0.0
        %2502 = vmatpush1.msra.mxu0 0.0
        %2503 = vmatprep.subr.mxu0 0.0
        %2504 = vmatpush1.msra.mxu0 0.0
        %2505 = vmatprep.subr.mxu0 0.0
        %2506 = vmatpush1.msra.mxu0 0.0
        %2507 = vmatprep.subr.mxu0 0.0
        %2508 = vmatpush1.msra.mxu0 0.0
        %2509 = vmatprep.subr.mxu0 0.0
        %2510 = vmatpush1.msra.mxu0 0.0
        %2511 = vmatprep.subr.mxu0 0.0
        %2512 = vmatpush1.msra.mxu0 0.0
        %2513 = vmatprep.subr.mxu0 0.0
        %2514 = vmatpush1.msra.mxu0 0.0
        %2515 = vmatprep.subr.mxu0 0.0
        %2516 = vmatpush1.msra.mxu0 0.0
        %2517 = vmatprep.subr.mxu0 0.0
        %2518 = vmatpush1.msra.mxu0 0.0
        %2519 = vmatprep.subr.mxu0 0.0
        %2520 = vmatpush1.msra.mxu0 0.0
        %2521 = vmatprep.subr.mxu0 0.0
        %2522 = vmatpush1.msra.mxu0 0.0
        %2523 = vmatprep.subr.mxu0 0.0
        %2524 = vmatpush1.msra.mxu0 0.0
        %2525 = vmatprep.subr.mxu0 0.0
        %2526 = vmatpush1.msra.mxu0 0.0
        %2527 = vmatprep.subr.mxu0 0.0
        %2528 = vmatpush1.msra.mxu0 0.0
        %2529 = vmatprep.subr.mxu0 0.0
        %2530 = vmatpush1.msra.mxu0 0.0
        %2531 = vmatprep.subr.mxu0 0.0
        %2532 = vmatpush1.msra.mxu0 0.0
        %2533 = vmatprep.subr.mxu0 0.0
        %2534 = vmatpush1.msra.mxu0 0.0
        %2535 = vmatprep.subr.mxu0 0.0
        %2536 = vmatpush1.msra.mxu0 0.0
        %2537 = vmatprep.mubr.f32.mxu0 0.0
        %v2538 = vand.u32 %v250, 4294901760
        %v2539 = vsub.f32 %v250, %v2538
        %v2540 = vand.u32 %v2539, 4294901760
        %2541 = vmatmul.mubr.f32.gmra.mrb[0].mxu0 %v2540
        %v2542 = vpop.f32.mrb[0].mxu0
        %v2543 = vadd.f32 %v2465, %v2542
        %v2544 = vpop.f32.mrb[0].mxu0
        %v2545 = vadd.f32 %v2467, %v2544
        %2546 = vdwg.mxu0
        %v2547 = vand.u32 %v219, 4294901760
        %v2548 = vsub.f32 %v219, %v2547
        %v2549 = vand.u32 %v2548, 4294901760
        %2550 = vmatprep.subr.mxu0 %v2549
        %v2551 = vand.u32 %v218, 4294901760
        %v2552 = vsub.f32 %v218, %v2551
        %v2553 = vand.u32 %v2552, 4294901760
        %2554 = vmatpush1.msra.mxu0 %v2553
        %v2555 = vand.u32 %v235, 4294901760
        %v2556 = vsub.f32 %v235, %v2555
        %v2557 = vand.u32 %v2556, 4294901760
        %2558 = vmatprep.subr.mxu0 %v2557
        %v2559 = vand.u32 %v234, 4294901760
        %v2560 = vsub.f32 %v234, %v2559
        %v2561 = vand.u32 %v2560, 4294901760
        %2562 = vmatpush1.msra.mxu0 %v2561
        %2563 = vmatprep.subr.mxu0 0.0
        %2564 = vmatpush1.msra.mxu0 0.0
        %2565 = vmatprep.subr.mxu0 0.0
        %2566 = vmatpush1.msra.mxu0 0.0
        %2567 = vmatprep.subr.mxu0 0.0
        %2568 = vmatpush1.msra.mxu0 0.0
        %2569 = vmatprep.subr.mxu0 0.0
        %2570 = vmatpush1.msra.mxu0 0.0
        %2571 = vmatprep.subr.mxu0 0.0
        %2572 = vmatpush1.msra.mxu0 0.0
        %2573 = vmatprep.subr.mxu0 0.0
        %2574 = vmatpush1.msra.mxu0 0.0
        %2575 = vmatprep.subr.mxu0 0.0
        %2576 = vmatpush1.msra.mxu0 0.0
        %2577 = vmatprep.subr.mxu0 0.0
        %2578 = vmatpush1.msra.mxu0 0.0
        %2579 = vmatprep.subr.mxu0 0.0
        %2580 = vmatpush1.msra.mxu0 0.0
        %2581 = vmatprep.subr.mxu0 0.0
        %2582 = vmatpush1.msra.mxu0 0.0
        %2583 = vmatprep.subr.mxu0 0.0
        %2584 = vmatpush1.msra.mxu0 0.0
        %2585 = vmatprep.subr.mxu0 0.0
        %2586 = vmatpush1.msra.mxu0 0.0
        %2587 = vmatprep.subr.mxu0 0.0
        %2588 = vmatpush1.msra.mxu0 0.0
        %2589 = vmatprep.subr.mxu0 0.0
        %2590 = vmatpush1.msra.mxu0 0.0
        %2591 = vmatprep.subr.mxu0 0.0
        %2592 = vmatpush1.msra.mxu0 0.0
        %2593 = vmatprep.subr.mxu0 0.0
        %2594 = vmatpush1.msra.mxu0 0.0
        %2595 = vmatprep.subr.mxu0 0.0
        %2596 = vmatpush1.msra.mxu0 0.0
        %2597 = vmatprep.subr.mxu0 0.0
        %2598 = vmatpush1.msra.mxu0 0.0
        %2599 = vmatprep.subr.mxu0 0.0
        %2600 = vmatpush1.msra.mxu0 0.0
        %2601 = vmatprep.subr.mxu0 0.0
        %2602 = vmatpush1.msra.mxu0 0.0
        %2603 = vmatprep.subr.mxu0 0.0
        %2604 = vmatpush1.msra.mxu0 0.0
        %2605 = vmatprep.subr.mxu0 0.0
        %2606 = vmatpush1.msra.mxu0 0.0
        %2607 = vmatprep.subr.mxu0 0.0
        %2608 = vmatpush1.msra.mxu0 0.0
        %2609 = vmatprep.subr.mxu0 0.0
        %2610 = vmatpush1.msra.mxu0 0.0
        %2611 = vmatprep.subr.mxu0 0.0
        %2612 = vmatpush1.msra.mxu0 0.0
        %2613 = vmatprep.subr.mxu0 0.0
        %2614 = vmatpush1.msra.mxu0 0.0
        %2615 = vmatprep.subr.mxu0 0.0
        %2616 = vmatpush1.msra.mxu0 0.0
        %2617 = vmatprep.subr.mxu0 0.0
        %2618 = vmatpush1.msra.mxu0 0.0
        %2619 = vmatprep.subr.mxu0 0.0
        %2620 = vmatpush1.msra.mxu0 0.0
        %2621 = vmatprep.subr.mxu0 0.0
        %2622 = vmatpush1.msra.mxu0 0.0
        %2623 = vmatprep.mubr.f32.mxu0 0.0
        %v2624 = vand.u32 %v250, 4294901760
        %2625 = vmatmul.mubr.f32.gmra.mrb[0].mxu0 %v2624
        %v2626 = vpop.f32.mrb[0].mxu0
        %v2627 = vadd.f32 %v2543, %v2626
        %v2628 = vpop.f32.mrb[0].mxu0
        %v2629 = vadd.f32 %v2545, %v2628
        %2630 = vdwg.mxu0
        %v2631 = vand.u32 %v219, 4294901760
        %2632 = vmatprep.subr.mxu0 %v2631
        %v2633 = vand.u32 %v218, 4294901760
        %2634 = vmatpush1.msra.mxu0 %v2633
        %v2635 = vand.u32 %v235, 4294901760
        %2636 = vmatprep.subr.mxu0 %v2635
        %v2637 = vand.u32 %v234, 4294901760
        %2638 = vmatpush1.msra.mxu0 %v2637
        %2639 = vmatprep.subr.mxu0 0.0
        %2640 = vmatpush1.msra.mxu0 0.0
        %2641 = vmatprep.subr.mxu0 0.0
        %2642 = vmatpush1.msra.mxu0 0.0
        %2643 = vmatprep.subr.mxu0 0.0
        %2644 = vmatpush1.msra.mxu0 0.0
        %2645 = vmatprep.subr.mxu0 0.0
        %2646 = vmatpush1.msra.mxu0 0.0
        %2647 = vmatprep.subr.mxu0 0.0
        %2648 = vmatpush1.msra.mxu0 0.0
        %2649 = vmatprep.subr.mxu0 0.0
        %2650 = vmatpush1.msra.mxu0 0.0
        %2651 = vmatprep.subr.mxu0 0.0
        %2652 = vmatpush1.msra.mxu0 0.0
        %2653 = vmatprep.subr.mxu0 0.0
        %2654 = vmatpush1.msra.mxu0 0.0
        %2655 = vmatprep.subr.mxu0 0.0
        %2656 = vmatpush1.msra.mxu0 0.0
        %2657 = vmatprep.subr.mxu0 0.0
        %2658 = vmatpush1.msra.mxu0 0.0
        %2659 = vmatprep.subr.mxu0 0.0
        %2660 = vmatpush1.msra.mxu0 0.0
        %2661 = vmatprep.subr.mxu0 0.0
        %2662 = vmatpush1.msra.mxu0 0.0
        %2663 = vmatprep.subr.mxu0 0.0
        %2664 = vmatpush1.msra.mxu0 0.0
        %2665 = vmatprep.subr.mxu0 0.0
        %2666 = vmatpush1.msra.mxu0 0.0
        %2667 = vmatprep.subr.mxu0 0.0
        %2668 = vmatpush1.msra.mxu0 0.0
        %2669 = vmatprep.subr.mxu0 0.0
        %2670 = vmatpush1.msra.mxu0 0.0
        %2671 = vmatprep.subr.mxu0 0.0
        %2672 = vmatpush1.msra.mxu0 0.0
        %2673 = vmatprep.subr.mxu0 0.0
        %2674 = vmatpush1.msra.mxu0 0.0
        %2675 = vmatprep.subr.mxu0 0.0
        %2676 = vmatpush1.msra.mxu0 0.0
        %2677 = vmatprep.subr.mxu0 0.0
        %2678 = vmatpush1.msra.mxu0 0.0
        %2679 = vmatprep.subr.mxu0 0.0
        %2680 = vmatpush1.msra.mxu0 0.0
        %2681 = vmatprep.subr.mxu0 0.0
        %2682 = vmatpush1.msra.mxu0 0.0
        %2683 = vmatprep.subr.mxu0 0.0
        %2684 = vmatpush1.msra.mxu0 0.0
        %2685 = vmatprep.subr.mxu0 0.0
        %2686 = vmatpush1.msra.mxu0 0.0
        %2687 = vmatprep.subr.mxu0 0.0
        %2688 = vmatpush1.msra.mxu0 0.0
        %2689 = vmatprep.subr.mxu0 0.0
        %2690 = vmatpush1.msra.mxu0 0.0
        %2691 = vmatprep.subr.mxu0 0.0
        %2692 = vmatpush1.msra.mxu0 0.0
        %2693 = vmatprep.subr.mxu0 0.0
        %2694 = vmatpush1.msra.mxu0 0.0
        %2695 = vmatprep.subr.mxu0 0.0
        %2696 = vmatpush1.msra.mxu0 0.0
        %2697 = vmatprep.subr.mxu0 0.0
        %2698 = vmatpush1.msra.mxu0 0.0
        %2699 = vmatprep.mubr.f32.mxu0 0.0
        %v2700 = vand.u32 %v250, 4294901760
        %2701 = vmatmul.mubr.f32.gmra.mrb[0].mxu0 %v2700
        %v2702 = vpop.f32.mrb[0].mxu0
        %v2703 = vadd.f32 %v2627, %v2702
        %v2704 = vpop.f32.mrb[0].mxu0
        %v2705 = vadd.f32 %v2629, %v2704
        %2706 = vdwg.mxu0
        %v2707 = vand.u32 %v221, 4294901760
        %2708 = vmatprep.subr.mxu0 %v2707
        %v2709 = vand.u32 %v220, 4294901760
        %2710 = vmatpush1.msra.mxu0 %v2709
        %v2711 = vand.u32 %v237, 4294901760
        %2712 = vmatprep.subr.mxu0 %v2711
        %v2713 = vand.u32 %v236, 4294901760
        %2714 = vmatpush1.msra.mxu0 %v2713
        %2715 = vmatprep.subr.mxu0 0.0
        %2716 = vmatpush1.msra.mxu0 0.0
        %2717 = vmatprep.subr.mxu0 0.0
        %2718 = vmatpush1.msra.mxu0 0.0
        %2719 = vmatprep.subr.mxu0 0.0
        %2720 = vmatpush1.msra.mxu0 0.0
        %2721 = vmatprep.subr.mxu0 0.0
        %2722 = vmatpush1.msra.mxu0 0.0
        %2723 = vmatprep.subr.mxu0 0.0
        %2724 = vmatpush1.msra.mxu0 0.0
        %2725 = vmatprep.subr.mxu0 0.0
        %2726 = vmatpush1.msra.mxu0 0.0
        %2727 = vmatprep.subr.mxu0 0.0
        %2728 = vmatpush1.msra.mxu0 0.0
        %2729 = vmatprep.subr.mxu0 0.0
        %2730 = vmatpush1.msra.mxu0 0.0
        %2731 = vmatprep.subr.mxu0 0.0
        %2732 = vmatpush1.msra.mxu0 0.0
        %2733 = vmatprep.subr.mxu0 0.0
        %2734 = vmatpush1.msra.mxu0 0.0
        %2735 = vmatprep.subr.mxu0 0.0
        %2736 = vmatpush1.msra.mxu0 0.0
        %2737 = vmatprep.subr.mxu0 0.0
        %2738 = vmatpush1.msra.mxu0 0.0
        %2739 = vmatprep.subr.mxu0 0.0
        %2740 = vmatpush1.msra.mxu0 0.0
        %2741 = vmatprep.subr.mxu0 0.0
        %2742 = vmatpush1.msra.mxu0 0.0
        %2743 = vmatprep.subr.mxu0 0.0
        %2744 = vmatpush1.msra.mxu0 0.0
        %2745 = vmatprep.subr.mxu0 0.0
        %2746 = vmatpush1.msra.mxu0 0.0
        %2747 = vmatprep.subr.mxu0 0.0
        %2748 = vmatpush1.msra.mxu0 0.0
        %2749 = vmatprep.subr.mxu0 0.0
        %2750 = vmatpush1.msra.mxu0 0.0
        %2751 = vmatprep.subr.mxu0 0.0
        %2752 = vmatpush1.msra.mxu0 0.0
        %2753 = vmatprep.subr.mxu0 0.0
        %2754 = vmatpush1.msra.mxu0 0.0
        %2755 = vmatprep.subr.mxu0 0.0
        %2756 = vmatpush1.msra.mxu0 0.0
        %2757 = vmatprep.subr.mxu0 0.0
        %2758 = vmatpush1.msra.mxu0 0.0
        %2759 = vmatprep.subr.mxu0 0.0
        %2760 = vmatpush1.msra.mxu0 0.0
        %2761 = vmatprep.subr.mxu0 0.0
        %2762 = vmatpush1.msra.mxu0 0.0
        %2763 = vmatprep.subr.mxu0 0.0
        %2764 = vmatpush1.msra.mxu0 0.0
        %2765 = vmatprep.subr.mxu0 0.0
        %2766 = vmatpush1.msra.mxu0 0.0
        %2767 = vmatprep.subr.mxu0 0.0
        %2768 = vmatpush1.msra.mxu0 0.0
        %2769 = vmatprep.subr.mxu0 0.0
        %2770 = vmatpush1.msra.mxu0 0.0
        %2771 = vmatprep.subr.mxu0 0.0
        %2772 = vmatpush1.msra.mxu0 0.0
        %2773 = vmatprep.subr.mxu0 0.0
        %2774 = vmatpush1.msra.mxu0 0.0
        %2775 = vmatprep.mubr.f32.mxu0 0.0
        %v2776 = vand.u32 %v250, 4294901760
        %v2777 = vsub.f32 %v250, %v2776
        %v2778 = vand.u32 %v2777, 4294901760
        %v2779 = vsub.f32 %v2777, %v2778
        %v2780 = vand.u32 %v2779, 4294901760
        %2781 = vmatmul.mubr.f32.gmra.mrb[0].mxu0 %v2780
        %v2782 = vpop.f32.mrb[0].mxu0
        %v2783 = vadd.f32 %v246, %v2782
        %v2784 = vpop.f32.mrb[0].mxu0
        %v2785 = vadd.f32 %v246, %v2784
        %2786 = vdwg.mxu0
        %v2787 = vand.u32 %v221, 4294901760
        %v2788 = vsub.f32 %v221, %v2787
        %v2789 = vand.u32 %v2788, 4294901760
        %v2790 = vsub.f32 %v2788, %v2789
        %v2791 = vand.u32 %v2790, 4294901760
        %2792 = vmatprep.subr.mxu0 %v2791
        %v2793 = vand.u32 %v220, 4294901760
        %v2794 = vsub.f32 %v220, %v2793
        %v2795 = vand.u32 %v2794, 4294901760
        %v2796 = vsub.f32 %v2794, %v2795
        %v2797 = vand.u32 %v2796, 4294901760
        %2798 = vmatpush1.msra.mxu0 %v2797
        %v2799 = vand.u32 %v237, 4294901760
        %v2800 = vsub.f32 %v237, %v2799
        %v2801 = vand.u32 %v2800, 4294901760
        %v2802 = vsub.f32 %v2800, %v2801
        %v2803 = vand.u32 %v2802, 4294901760
        %2804 = vmatprep.subr.mxu0 %v2803
        %v2805 = vand.u32 %v236, 4294901760
        %v2806 = vsub.f32 %v236, %v2805
        %v2807 = vand.u32 %v2806, 4294901760
        %v2808 = vsub.f32 %v2806, %v2807
        %v2809 = vand.u32 %v2808, 4294901760
        %2810 = vmatpush1.msra.mxu0 %v2809
        %2811 = vmatprep.subr.mxu0 0.0
        %2812 = vmatpush1.msra.mxu0 0.0
        %2813 = vmatprep.subr.mxu0 0.0
        %2814 = vmatpush1.msra.mxu0 0.0
        %2815 = vmatprep.subr.mxu0 0.0
        %2816 = vmatpush1.msra.mxu0 0.0
        %2817 = vmatprep.subr.mxu0 0.0
        %2818 = vmatpush1.msra.mxu0 0.0
        %2819 = vmatprep.subr.mxu0 0.0
        %2820 = vmatpush1.msra.mxu0 0.0
        %2821 = vmatprep.subr.mxu0 0.0
        %2822 = vmatpush1.msra.mxu0 0.0
        %2823 = vmatprep.subr.mxu0 0.0
        %2824 = vmatpush1.msra.mxu0 0.0
        %2825 = vmatprep.subr.mxu0 0.0
        %2826 = vmatpush1.msra.mxu0 0.0
        %2827 = vmatprep.subr.mxu0 0.0
        %2828 = vmatpush1.msra.mxu0 0.0
        %2829 = vmatprep.subr.mxu0 0.0
        %2830 = vmatpush1.msra.mxu0 0.0
        %2831 = vmatprep.subr.mxu0 0.0
        %2832 = vmatpush1.msra.mxu0 0.0
        %2833 = vmatprep.subr.mxu0 0.0
        %2834 = vmatpush1.msra.mxu0 0.0
        %2835 = vmatprep.subr.mxu0 0.0
        %2836 = vmatpush1.msra.mxu0 0.0
        %2837 = vmatprep.subr.mxu0 0.0
        %2838 = vmatpush1.msra.mxu0 0.0
        %2839 = vmatprep.subr.mxu0 0.0
        %2840 = vmatpush1.msra.mxu0 0.0
        %2841 = vmatprep.subr.mxu0 0.0
        %2842 = vmatpush1.msra.mxu0 0.0
        %2843 = vmatprep.subr.mxu0 0.0
        %2844 = vmatpush1.msra.mxu0 0.0
        %2845 = vmatprep.subr.mxu0 0.0
        %2846 = vmatpush1.msra.mxu0 0.0
        %2847 = vmatprep.subr.mxu0 0.0
        %2848 = vmatpush1.msra.mxu0 0.0
        %2849 = vmatprep.subr.mxu0 0.0
        %2850 = vmatpush1.msra.mxu0 0.0
        %2851 = vmatprep.subr.mxu0 0.0
        %2852 = vmatpush1.msra.mxu0 0.0
        %2853 = vmatprep.subr.mxu0 0.0
        %2854 = vmatpush1.msra.mxu0 0.0
        %2855 = vmatprep.subr.mxu0 0.0
        %2856 = vmatpush1.msra.mxu0 0.0
        %2857 = vmatprep.subr.mxu0 0.0
        %2858 = vmatpush1.msra.mxu0 0.0
        %2859 = vmatprep.subr.mxu0 0.0
        %2860 = vmatpush1.msra.mxu0 0.0
        %2861 = vmatprep.subr.mxu0 0.0
        %2862 = vmatpush1.msra.mxu0 0.0
        %2863 = vmatprep.subr.mxu0 0.0
        %2864 = vmatpush1.msra.mxu0 0.0
        %2865 = vmatprep.subr.mxu0 0.0
        %2866 = vmatpush1.msra.mxu0 0.0
        %2867 = vmatprep.subr.mxu0 0.0
        %2868 = vmatpush1.msra.mxu0 0.0
        %2869 = vmatprep.subr.mxu0 0.0
        %2870 = vmatpush1.msra.mxu0 0.0
        %2871 = vmatprep.mubr.f32.mxu0 0.0
        %v2872 = vand.u32 %v250, 4294901760
        %2873 = vmatmul.mubr.f32.gmra.mrb[0].mxu0 %v2872
        %v2874 = vpop.f32.mrb[0].mxu0
        %v2875 = vadd.f32 %v2783, %v2874
        %v2876 = vpop.f32.mrb[0].mxu0
        %v2877 = vadd.f32 %v2785, %v2876
        %2878 = vdwg.mxu0
        %v2879 = vand.u32 %v221, 4294901760
        %v2880 = vsub.f32 %v221, %v2879
        %2881 = vmatprep.subr.mxu0 %v2880
        %v2882 = vand.u32 %v220, 4294901760
        %v2883 = vsub.f32 %v220, %v2882
        %2884 = vmatpush1.msra.mxu0 %v2883
        %v2885 = vand.u32 %v237, 4294901760
        %v2886 = vsub.f32 %v237, %v2885
        %2887 = vmatprep.subr.mxu0 %v2886
        %v2888 = vand.u32 %v236, 4294901760
        %v2889 = vsub.f32 %v236, %v2888
        %2890 = vmatpush1.msra.mxu0 %v2889
        %2891 = vmatprep.subr.mxu0 0.0
        %2892 = vmatpush1.msra.mxu0 0.0
        %2893 = vmatprep.subr.mxu0 0.0
        %2894 = vmatpush1.msra.mxu0 0.0
        %2895 = vmatprep.subr.mxu0 0.0
        %2896 = vmatpush1.msra.mxu0 0.0
        %2897 = vmatprep.subr.mxu0 0.0
        %2898 = vmatpush1.msra.mxu0 0.0
        %2899 = vmatprep.subr.mxu0 0.0
        %2900 = vmatpush1.msra.mxu0 0.0
        %2901 = vmatprep.subr.mxu0 0.0
        %2902 = vmatpush1.msra.mxu0 0.0
        %2903 = vmatprep.subr.mxu0 0.0
        %2904 = vmatpush1.msra.mxu0 0.0
        %2905 = vmatprep.subr.mxu0 0.0
        %2906 = vmatpush1.msra.mxu0 0.0
        %2907 = vmatprep.subr.mxu0 0.0
        %2908 = vmatpush1.msra.mxu0 0.0
        %2909 = vmatprep.subr.mxu0 0.0
        %2910 = vmatpush1.msra.mxu0 0.0
        %2911 = vmatprep.subr.mxu0 0.0
        %2912 = vmatpush1.msra.mxu0 0.0
        %2913 = vmatprep.subr.mxu0 0.0
        %2914 = vmatpush1.msra.mxu0 0.0
        %2915 = vmatprep.subr.mxu0 0.0
        %2916 = vmatpush1.msra.mxu0 0.0
        %2917 = vmatprep.subr.mxu0 0.0
        %2918 = vmatpush1.msra.mxu0 0.0
        %2919 = vmatprep.subr.mxu0 0.0
        %2920 = vmatpush1.msra.mxu0 0.0
        %2921 = vmatprep.subr.mxu0 0.0
        %2922 = vmatpush1.msra.mxu0 0.0
        %2923 = vmatprep.subr.mxu0 0.0
        %2924 = vmatpush1.msra.mxu0 0.0
        %2925 = vmatprep.subr.mxu0 0.0
        %2926 = vmatpush1.msra.mxu0 0.0
        %2927 = vmatprep.subr.mxu0 0.0
        %2928 = vmatpush1.msra.mxu0 0.0
        %2929 = vmatprep.subr.mxu0 0.0
        %2930 = vmatpush1.msra.mxu0 0.0
        %2931 = vmatprep.subr.mxu0 0.0
        %2932 = vmatpush1.msra.mxu0 0.0
        %2933 = vmatprep.subr.mxu0 0.0
        %2934 = vmatpush1.msra.mxu0 0.0
        %2935 = vmatprep.subr.mxu0 0.0
        %2936 = vmatpush1.msra.mxu0 0.0
        %2937 = vmatprep.subr.mxu0 0.0
        %2938 = vmatpush1.msra.mxu0 0.0
        %2939 = vmatprep.subr.mxu0 0.0
        %2940 = vmatpush1.msra.mxu0 0.0
        %2941 = vmatprep.subr.mxu0 0.0
        %2942 = vmatpush1.msra.mxu0 0.0
        %2943 = vmatprep.subr.mxu0 0.0
        %2944 = vmatpush1.msra.mxu0 0.0
        %2945 = vmatprep.subr.mxu0 0.0
        %2946 = vmatpush1.msra.mxu0 0.0
        %2947 = vmatprep.subr.mxu0 0.0
        %2948 = vmatpush1.msra.mxu0 0.0
        %2949 = vmatprep.subr.mxu0 0.0
        %2950 = vmatpush1.msra.mxu0 0.0
        %2951 = vmatprep.mubr.f32.mxu0 0.0
        %v2952 = vand.u32 %v250, 4294901760
        %v2953 = vsub.f32 %v250, %v2952
        %2954 = vmatmul.mubr.f32.gmra.mrb[0].mxu0 %v2953
        %v2955 = vpop.f32.mrb[0].mxu0
        %v2956 = vadd.f32 %v2875, %v2955
        %v2957 = vpop.f32.mrb[0].mxu0
        %v2958 = vadd.f32 %v2877, %v2957
        %2959 = vdwg.mxu0
        %v2960 = vand.u32 %v221, 4294901760
        %2961 = vmatprep.subr.mxu0 %v2960
        %v2962 = vand.u32 %v220, 4294901760
        %2963 = vmatpush1.msra.mxu0 %v2962
        %v2964 = vand.u32 %v237, 4294901760
        %2965 = vmatprep.subr.mxu0 %v2964
        %v2966 = vand.u32 %v236, 4294901760
        %2967 = vmatpush1.msra.mxu0 %v2966
        %2968 = vmatprep.subr.mxu0 0.0
        %2969 = vmatpush1.msra.mxu0 0.0
        %2970 = vmatprep.subr.mxu0 0.0
        %2971 = vmatpush1.msra.mxu0 0.0
        %2972 = vmatprep.subr.mxu0 0.0
        %2973 = vmatpush1.msra.mxu0 0.0
        %2974 = vmatprep.subr.mxu0 0.0
        %2975 = vmatpush1.msra.mxu0 0.0
        %2976 = vmatprep.subr.mxu0 0.0
        %2977 = vmatpush1.msra.mxu0 0.0
        %2978 = vmatprep.subr.mxu0 0.0
        %2979 = vmatpush1.msra.mxu0 0.0
        %2980 = vmatprep.subr.mxu0 0.0
        %2981 = vmatpush1.msra.mxu0 0.0
        %2982 = vmatprep.subr.mxu0 0.0
        %2983 = vmatpush1.msra.mxu0 0.0
        %2984 = vmatprep.subr.mxu0 0.0
        %2985 = vmatpush1.msra.mxu0 0.0
        %2986 = vmatprep.subr.mxu0 0.0
        %2987 = vmatpush1.msra.mxu0 0.0
        %2988 = vmatprep.subr.mxu0 0.0
        %2989 = vmatpush1.msra.mxu0 0.0
        %2990 = vmatprep.subr.mxu0 0.0
        %2991 = vmatpush1.msra.mxu0 0.0
        %2992 = vmatprep.subr.mxu0 0.0
        %2993 = vmatpush1.msra.mxu0 0.0
        %2994 = vmatprep.subr.mxu0 0.0
        %2995 = vmatpush1.msra.mxu0 0.0
        %2996 = vmatprep.subr.mxu0 0.0
        %2997 = vmatpush1.msra.mxu0 0.0
        %2998 = vmatprep.subr.mxu0 0.0
        %2999 = vmatpush1.msra.mxu0 0.0
        %3000 = vmatprep.subr.mxu0 0.0
        %3001 = vmatpush1.msra.mxu0 0.0
        %3002 = vmatprep.subr.mxu0 0.0
        %3003 = vmatpush1.msra.mxu0 0.0
        %3004 = vmatprep.subr.mxu0 0.0
        %3005 = vmatpush1.msra.mxu0 0.0
        %3006 = vmatprep.subr.mxu0 0.0
        %3007 = vmatpush1.msra.mxu0 0.0
        %3008 = vmatprep.subr.mxu0 0.0
        %3009 = vmatpush1.msra.mxu0 0.0
        %3010 = vmatprep.subr.mxu0 0.0
        %3011 = vmatpush1.msra.mxu0 0.0
        %3012 = vmatprep.subr.mxu0 0.0
        %3013 = vmatpush1.msra.mxu0 0.0
        %3014 = vmatprep.subr.mxu0 0.0
        %3015 = vmatpush1.msra.mxu0 0.0
        %3016 = vmatprep.subr.mxu0 0.0
        %3017 = vmatpush1.msra.mxu0 0.0
        %3018 = vmatprep.subr.mxu0 0.0
        %3019 = vmatpush1.msra.mxu0 0.0
        %3020 = vmatprep.subr.mxu0 0.0
        %3021 = vmatpush1.msra.mxu0 0.0
        %3022 = vmatprep.subr.mxu0 0.0
        %3023 = vmatpush1.msra.mxu0 0.0
        %3024 = vmatprep.subr.mxu0 0.0
        %3025 = vmatpush1.msra.mxu0 0.0
        %3026 = vmatprep.subr.mxu0 0.0
        %3027 = vmatpush1.msra.mxu0 0.0
        %3028 = vmatprep.mubr.f32.mxu0 0.0
        %v3029 = vand.u32 %v250, 4294901760
        %v3030 = vsub.f32 %v250, %v3029
        %v3031 = vand.u32 %v3030, 4294901760
        %3032 = vmatmul.mubr.f32.gmra.mrb[0].mxu0 %v3031
        %v3033 = vpop.f32.mrb[0].mxu0
        %v3034 = vadd.f32 %v2956, %v3033
        %v3035 = vpop.f32.mrb[0].mxu0
        %v3036 = vadd.f32 %v2958, %v3035
        %3037 = vdwg.mxu0
        %v3038 = vand.u32 %v221, 4294901760
        %v3039 = vsub.f32 %v221, %v3038
        %v3040 = vand.u32 %v3039, 4294901760
        %3041 = vmatprep.subr.mxu0 %v3040
        %v3042 = vand.u32 %v220, 4294901760
        %v3043 = vsub.f32 %v220, %v3042
        %v3044 = vand.u32 %v3043, 4294901760
        %3045 = vmatpush1.msra.mxu0 %v3044
        %v3046 = vand.u32 %v237, 4294901760
        %v3047 = vsub.f32 %v237, %v3046
        %v3048 = vand.u32 %v3047, 4294901760
        %3049 = vmatprep.subr.mxu0 %v3048
        %v3050 = vand.u32 %v236, 4294901760
        %v3051 = vsub.f32 %v236, %v3050
        %v3052 = vand.u32 %v3051, 4294901760
        %3053 = vmatpush1.msra.mxu0 %v3052
        %3054 = vmatprep.subr.mxu0 0.0
        %3055 = vmatpush1.msra.mxu0 0.0
        %3056 = vmatprep.subr.mxu0 0.0
        %3057 = vmatpush1.msra.mxu0 0.0
        %3058 = vmatprep.subr.mxu0 0.0
        %3059 = vmatpush1.msra.mxu0 0.0
        %3060 = vmatprep.subr.mxu0 0.0
        %3061 = vmatpush1.msra.mxu0 0.0
        %3062 = vmatprep.subr.mxu0 0.0
        %3063 = vmatpush1.msra.mxu0 0.0
        %3064 = vmatprep.subr.mxu0 0.0
        %3065 = vmatpush1.msra.mxu0 0.0
        %3066 = vmatprep.subr.mxu0 0.0
        %3067 = vmatpush1.msra.mxu0 0.0
        %3068 = vmatprep.subr.mxu0 0.0
        %3069 = vmatpush1.msra.mxu0 0.0
        %3070 = vmatprep.subr.mxu0 0.0
        %3071 = vmatpush1.msra.mxu0 0.0
        %3072 = vmatprep.subr.mxu0 0.0
        %3073 = vmatpush1.msra.mxu0 0.0
        %3074 = vmatprep.subr.mxu0 0.0
        %3075 = vmatpush1.msra.mxu0 0.0
        %3076 = vmatprep.subr.mxu0 0.0
        %3077 = vmatpush1.msra.mxu0 0.0
        %3078 = vmatprep.subr.mxu0 0.0
        %3079 = vmatpush1.msra.mxu0 0.0
        %3080 = vmatprep.subr.mxu0 0.0
        %3081 = vmatpush1.msra.mxu0 0.0
        %3082 = vmatprep.subr.mxu0 0.0
        %3083 = vmatpush1.msra.mxu0 0.0
        %3084 = vmatprep.subr.mxu0 0.0
        %3085 = vmatpush1.msra.mxu0 0.0
        %3086 = vmatprep.subr.mxu0 0.0
        %3087 = vmatpush1.msra.mxu0 0.0
        %3088 = vmatprep.subr.mxu0 0.0
        %3089 = vmatpush1.msra.mxu0 0.0
        %3090 = vmatprep.subr.mxu0 0.0
        %3091 = vmatpush1.msra.mxu0 0.0
        %3092 = vmatprep.subr.mxu0 0.0
        %3093 = vmatpush1.msra.mxu0 0.0
        %3094 = vmatprep.subr.mxu0 0.0
        %3095 = vmatpush1.msra.mxu0 0.0
        %3096 = vmatprep.subr.mxu0 0.0
        %3097 = vmatpush1.msra.mxu0 0.0
        %3098 = vmatprep.subr.mxu0 0.0
        %3099 = vmatpush1.msra.mxu0 0.0
        %3100 = vmatprep.subr.mxu0 0.0
        %3101 = vmatpush1.msra.mxu0 0.0
        %3102 = vmatprep.subr.mxu0 0.0
        %3103 = vmatpush1.msra.mxu0 0.0
        %3104 = vmatprep.subr.mxu0 0.0
        %3105 = vmatpush1.msra.mxu0 0.0
        %3106 = vmatprep.subr.mxu0 0.0
        %3107 = vmatpush1.msra.mxu0 0.0
        %3108 = vmatprep.subr.mxu0 0.0
        %3109 = vmatpush1.msra.mxu0 0.0
        %3110 = vmatprep.subr.mxu0 0.0
        %3111 = vmatpush1.msra.mxu0 0.0
        %3112 = vmatprep.subr.mxu0 0.0
        %3113 = vmatpush1.msra.mxu0 0.0
        %3114 = vmatprep.mubr.f32.mxu0 0.0
        %v3115 = vand.u32 %v250, 4294901760
        %3116 = vmatmul.mubr.f32.gmra.mrb[0].mxu0 %v3115
        %v3117 = vpop.f32.mrb[0].mxu0
        %v3118 = vadd.f32 %v3034, %v3117
        %v3119 = vpop.f32.mrb[0].mxu0
        %v3120 = vadd.f32 %v3036, %v3119
        %3121 = vdwg.mxu0
        %v3122 = vand.u32 %v221, 4294901760
        %3123 = vmatprep.subr.mxu0 %v3122
        %v3124 = vand.u32 %v220, 4294901760
        %3125 = vmatpush1.msra.mxu0 %v3124
        %v3126 = vand.u32 %v237, 4294901760
        %3127 = vmatprep.subr.mxu0 %v3126
        %v3128 = vand.u32 %v236, 4294901760
        %3129 = vmatpush1.msra.mxu0 %v3128
        %3130 = vmatprep.subr.mxu0 0.0
        %3131 = vmatpush1.msra.mxu0 0.0
        %3132 = vmatprep.subr.mxu0 0.0
        %3133 = vmatpush1.msra.mxu0 0.0
        %3134 = vmatprep.subr.mxu0 0.0
        %3135 = vmatpush1.msra.mxu0 0.0
        %3136 = vmatprep.subr.mxu0 0.0
        %3137 = vmatpush1.msra.mxu0 0.0
        %3138 = vmatprep.subr.mxu0 0.0
        %3139 = vmatpush1.msra.mxu0 0.0
        %3140 = vmatprep.subr.mxu0 0.0
        %3141 = vmatpush1.msra.mxu0 0.0
        %3142 = vmatprep.subr.mxu0 0.0
        %3143 = vmatpush1.msra.mxu0 0.0
        %3144 = vmatprep.subr.mxu0 0.0
        %3145 = vmatpush1.msra.mxu0 0.0
        %3146 = vmatprep.subr.mxu0 0.0
        %3147 = vmatpush1.msra.mxu0 0.0
        %3148 = vmatprep.subr.mxu0 0.0
        %3149 = vmatpush1.msra.mxu0 0.0
        %3150 = vmatprep.subr.mxu0 0.0
        %3151 = vmatpush1.msra.mxu0 0.0
        %3152 = vmatprep.subr.mxu0 0.0
        %3153 = vmatpush1.msra.mxu0 0.0
        %3154 = vmatprep.subr.mxu0 0.0
        %3155 = vmatpush1.msra.mxu0 0.0
        %3156 = vmatprep.subr.mxu0 0.0
        %3157 = vmatpush1.msra.mxu0 0.0
        %3158 = vmatprep.subr.mxu0 0.0
        %3159 = vmatpush1.msra.mxu0 0.0
        %3160 = vmatprep.subr.mxu0 0.0
        %3161 = vmatpush1.msra.mxu0 0.0
        %3162 = vmatprep.subr.mxu0 0.0
        %3163 = vmatpush1.msra.mxu0 0.0
        %3164 = vmatprep.subr.mxu0 0.0
        %3165 = vmatpush1.msra.mxu0 0.0
        %3166 = vmatprep.subr.mxu0 0.0
        %3167 = vmatpush1.msra.mxu0 0.0
        %3168 = vmatprep.subr.mxu0 0.0
        %3169 = vmatpush1.msra.mxu0 0.0
        %3170 = vmatprep.subr.mxu0 0.0
        %3171 = vmatpush1.msra.mxu0 0.0
        %3172 = vmatprep.subr.mxu0 0.0
        %3173 = vmatpush1.msra.mxu0 0.0
        %3174 = vmatprep.subr.mxu0 0.0
        %3175 = vmatpush1.msra.mxu0 0.0
        %3176 = vmatprep.subr.mxu0 0.0
        %3177 = vmatpush1.msra.mxu0 0.0
        %3178 = vmatprep.subr.mxu0 0.0
        %3179 = vmatpush1.msra.mxu0 0.0
        %3180 = vmatprep.subr.mxu0 0.0
        %3181 = vmatpush1.msra.mxu0 0.0
        %3182 = vmatprep.subr.mxu0 0.0
        %3183 = vmatpush1.msra.mxu0 0.0
        %3184 = vmatprep.subr.mxu0 0.0
        %3185 = vmatpush1.msra.mxu0 0.0
        %3186 = vmatprep.subr.mxu0 0.0
        %3187 = vmatpush1.msra.mxu0 0.0
        %3188 = vmatprep.subr.mxu0 0.0
        %3189 = vmatpush1.msra.mxu0 0.0
        %3190 = vmatprep.mubr.f32.mxu0 0.0
        %v3191 = vand.u32 %v250, 4294901760
        %3192 = vmatmul.mubr.f32.gmra.mrb[0].mxu0 %v3191
        %v3193 = vpop.f32.mrb[0].mxu0
        %v3194 = vadd.f32 %v3118, %v3193
        %v3195 = vpop.f32.mrb[0].mxu0
        %v3196 = vadd.f32 %v3120, %v3195
        %3197 = vdwg.mxu0
        %v3198 = vand.u32 %v223, 4294901760
        %3199 = vmatprep.subr.mxu0 %v3198
        %v3200 = vand.u32 %v222, 4294901760
        %3201 = vmatpush1.msra.mxu0 %v3200
        %v3202 = vand.u32 %v239, 4294901760
        %3203 = vmatprep.subr.mxu0 %v3202
        %v3204 = vand.u32 %v238, 4294901760
        %3205 = vmatpush1.msra.mxu0 %v3204
        %3206 = vmatprep.subr.mxu0 0.0
        %3207 = vmatpush1.msra.mxu0 0.0
        %3208 = vmatprep.subr.mxu0 0.0
        %3209 = vmatpush1.msra.mxu0 0.0
        %3210 = vmatprep.subr.mxu0 0.0
        %3211 = vmatpush1.msra.mxu0 0.0
        %3212 = vmatprep.subr.mxu0 0.0
        %3213 = vmatpush1.msra.mxu0 0.0
        %3214 = vmatprep.subr.mxu0 0.0
        %3215 = vmatpush1.msra.mxu0 0.0
        %3216 = vmatprep.subr.mxu0 0.0
        %3217 = vmatpush1.msra.mxu0 0.0
        %3218 = vmatprep.subr.mxu0 0.0
        %3219 = vmatpush1.msra.mxu0 0.0
        %3220 = vmatprep.subr.mxu0 0.0
        %3221 = vmatpush1.msra.mxu0 0.0
        %3222 = vmatprep.subr.mxu0 0.0
        %3223 = vmatpush1.msra.mxu0 0.0
        %3224 = vmatprep.subr.mxu0 0.0
        %3225 = vmatpush1.msra.mxu0 0.0
        %3226 = vmatprep.subr.mxu0 0.0
        %3227 = vmatpush1.msra.mxu0 0.0
        %3228 = vmatprep.subr.mxu0 0.0
        %3229 = vmatpush1.msra.mxu0 0.0
        %3230 = vmatprep.subr.mxu0 0.0
        %3231 = vmatpush1.msra.mxu0 0.0
        %3232 = vmatprep.subr.mxu0 0.0
        %3233 = vmatpush1.msra.mxu0 0.0
        %3234 = vmatprep.subr.mxu0 0.0
        %3235 = vmatpush1.msra.mxu0 0.0
        %3236 = vmatprep.subr.mxu0 0.0
        %3237 = vmatpush1.msra.mxu0 0.0
        %3238 = vmatprep.subr.mxu0 0.0
        %3239 = vmatpush1.msra.mxu0 0.0
        %3240 = vmatprep.subr.mxu0 0.0
        %3241 = vmatpush1.msra.mxu0 0.0
        %3242 = vmatprep.subr.mxu0 0.0
        %3243 = vmatpush1.msra.mxu0 0.0
        %3244 = vmatprep.subr.mxu0 0.0
        %3245 = vmatpush1.msra.mxu0 0.0
        %3246 = vmatprep.subr.mxu0 0.0
        %3247 = vmatpush1.msra.mxu0 0.0
        %3248 = vmatprep.subr.mxu0 0.0
        %3249 = vmatpush1.msra.mxu0 0.0
        %3250 = vmatprep.subr.mxu0 0.0
        %3251 = vmatpush1.msra.mxu0 0.0
        %3252 = vmatprep.subr.mxu0 0.0
        %3253 = vmatpush1.msra.mxu0 0.0
        %3254 = vmatprep.subr.mxu0 0.0
        %3255 = vmatpush1.msra.mxu0 0.0
        %3256 = vmatprep.subr.mxu0 0.0
        %3257 = vmatpush1.msra.mxu0 0.0
        %3258 = vmatprep.subr.mxu0 0.0
        %3259 = vmatpush1.msra.mxu0 0.0
        %3260 = vmatprep.subr.mxu0 0.0
        %3261 = vmatpush1.msra.mxu0 0.0
        %3262 = vmatprep.subr.mxu0 0.0
        %3263 = vmatpush1.msra.mxu0 0.0
        %3264 = vmatprep.subr.mxu0 0.0
        %3265 = vmatpush1.msra.mxu0 0.0
        %3266 = vmatprep.mubr.f32.mxu0 0.0
        %v3267 = vand.u32 %v250, 4294901760
        %v3268 = vsub.f32 %v250, %v3267
        %v3269 = vand.u32 %v3268, 4294901760
        %v3270 = vsub.f32 %v3268, %v3269
        %v3271 = vand.u32 %v3270, 4294901760
        %3272 = vmatmul.mubr.f32.gmra.mrb[0].mxu0 %v3271
        %v3273 = vpop.f32.mrb[0].mxu0
        %v3274 = vadd.f32 %v246, %v3273
        %v3275 = vpop.f32.mrb[0].mxu0
        %v3276 = vadd.f32 %v246, %v3275
        %3277 = vdwg.mxu0
        %v3278 = vand.u32 %v223, 4294901760
        %v3279 = vsub.f32 %v223, %v3278
        %v3280 = vand.u32 %v3279, 4294901760
        %v3281 = vsub.f32 %v3279, %v3280
        %v3282 = vand.u32 %v3281, 4294901760
        %3283 = vmatprep.subr.mxu0 %v3282
        %v3284 = vand.u32 %v222, 4294901760
        %v3285 = vsub.f32 %v222, %v3284
        %v3286 = vand.u32 %v3285, 4294901760
        %v3287 = vsub.f32 %v3285, %v3286
        %v3288 = vand.u32 %v3287, 4294901760
        %3289 = vmatpush1.msra.mxu0 %v3288
        %v3290 = vand.u32 %v239, 4294901760
        %v3291 = vsub.f32 %v239, %v3290
        %v3292 = vand.u32 %v3291, 4294901760
        %v3293 = vsub.f32 %v3291, %v3292
        %v3294 = vand.u32 %v3293, 4294901760
        %3295 = vmatprep.subr.mxu0 %v3294
        %v3296 = vand.u32 %v238, 4294901760
        %v3297 = vsub.f32 %v238, %v3296
        %v3298 = vand.u32 %v3297, 4294901760
        %v3299 = vsub.f32 %v3297, %v3298
        %v3300 = vand.u32 %v3299, 4294901760
        %3301 = vmatpush1.msra.mxu0 %v3300
        %3302 = vmatprep.subr.mxu0 0.0
        %3303 = vmatpush1.msra.mxu0 0.0
        %3304 = vmatprep.subr.mxu0 0.0
        %3305 = vmatpush1.msra.mxu0 0.0
        %3306 = vmatprep.subr.mxu0 0.0
        %3307 = vmatpush1.msra.mxu0 0.0
        %3308 = vmatprep.subr.mxu0 0.0
        %3309 = vmatpush1.msra.mxu0 0.0
        %3310 = vmatprep.subr.mxu0 0.0
        %3311 = vmatpush1.msra.mxu0 0.0
        %3312 = vmatprep.subr.mxu0 0.0
        %3313 = vmatpush1.msra.mxu0 0.0
        %3314 = vmatprep.subr.mxu0 0.0
        %3315 = vmatpush1.msra.mxu0 0.0
        %3316 = vmatprep.subr.mxu0 0.0
        %3317 = vmatpush1.msra.mxu0 0.0
        %3318 = vmatprep.subr.mxu0 0.0
        %3319 = vmatpush1.msra.mxu0 0.0
        %3320 = vmatprep.subr.mxu0 0.0
        %3321 = vmatpush1.msra.mxu0 0.0
        %3322 = vmatprep.subr.mxu0 0.0
        %3323 = vmatpush1.msra.mxu0 0.0
        %3324 = vmatprep.subr.mxu0 0.0
        %3325 = vmatpush1.msra.mxu0 0.0
        %3326 = vmatprep.subr.mxu0 0.0
        %3327 = vmatpush1.msra.mxu0 0.0
        %3328 = vmatprep.subr.mxu0 0.0
        %3329 = vmatpush1.msra.mxu0 0.0
        %3330 = vmatprep.subr.mxu0 0.0
        %3331 = vmatpush1.msra.mxu0 0.0
        %3332 = vmatprep.subr.mxu0 0.0
        %3333 = vmatpush1.msra.mxu0 0.0
        %3334 = vmatprep.subr.mxu0 0.0
        %3335 = vmatpush1.msra.mxu0 0.0
        %3336 = vmatprep.subr.mxu0 0.0
        %3337 = vmatpush1.msra.mxu0 0.0
        %3338 = vmatprep.subr.mxu0 0.0
        %3339 = vmatpush1.msra.mxu0 0.0
        %3340 = vmatprep.subr.mxu0 0.0
        %3341 = vmatpush1.msra.mxu0 0.0
        %3342 = vmatprep.subr.mxu0 0.0
        %3343 = vmatpush1.msra.mxu0 0.0
        %3344 = vmatprep.subr.mxu0 0.0
        %3345 = vmatpush1.msra.mxu0 0.0
        %3346 = vmatprep.subr.mxu0 0.0
        %3347 = vmatpush1.msra.mxu0 0.0
        %3348 = vmatprep.subr.mxu0 0.0
        %3349 = vmatpush1.msra.mxu0 0.0
        %3350 = vmatprep.subr.mxu0 0.0
        %3351 = vmatpush1.msra.mxu0 0.0
        %3352 = vmatprep.subr.mxu0 0.0
        %3353 = vmatpush1.msra.mxu0 0.0
        %3354 = vmatprep.subr.mxu0 0.0
        %3355 = vmatpush1.msra.mxu0 0.0
        %3356 = vmatprep.subr.mxu0 0.0
        %3357 = vmatpush1.msra.mxu0 0.0
        %3358 = vmatprep.subr.mxu0 0.0
        %3359 = vmatpush1.msra.mxu0 0.0
        %3360 = vmatprep.subr.mxu0 0.0
        %3361 = vmatpush1.msra.mxu0 0.0
        %3362 = vmatprep.mubr.f32.mxu0 0.0
        %v3363 = vand.u32 %v250, 4294901760
        %3364 = vmatmul.mubr.f32.gmra.mrb[0].mxu0 %v3363
        %v3365 = vpop.f32.mrb[0].mxu0
        %v3366 = vadd.f32 %v3274, %v3365
        %v3367 = vpop.f32.mrb[0].mxu0
        %v3368 = vadd.f32 %v3276, %v3367
        %3369 = vdwg.mxu0
        %v3370 = vand.u32 %v223, 4294901760
        %v3371 = vsub.f32 %v223, %v3370
        %3372 = vmatprep.subr.mxu0 %v3371
        %v3373 = vand.u32 %v222, 4294901760
        %v3374 = vsub.f32 %v222, %v3373
        %3375 = vmatpush1.msra.mxu0 %v3374
        %v3376 = vand.u32 %v239, 4294901760
        %v3377 = vsub.f32 %v239, %v3376
        %3378 = vmatprep.subr.mxu0 %v3377
        %v3379 = vand.u32 %v238, 4294901760
        %v3380 = vsub.f32 %v238, %v3379
        %3381 = vmatpush1.msra.mxu0 %v3380
        %3382 = vmatprep.subr.mxu0 0.0
        %3383 = vmatpush1.msra.mxu0 0.0
        %3384 = vmatprep.subr.mxu0 0.0
        %3385 = vmatpush1.msra.mxu0 0.0
        %3386 = vmatprep.subr.mxu0 0.0
        %3387 = vmatpush1.msra.mxu0 0.0
        %3388 = vmatprep.subr.mxu0 0.0
        %3389 = vmatpush1.msra.mxu0 0.0
        %3390 = vmatprep.subr.mxu0 0.0
        %3391 = vmatpush1.msra.mxu0 0.0
        %3392 = vmatprep.subr.mxu0 0.0
        %3393 = vmatpush1.msra.mxu0 0.0
        %3394 = vmatprep.subr.mxu0 0.0
        %3395 = vmatpush1.msra.mxu0 0.0
        %3396 = vmatprep.subr.mxu0 0.0
        %3397 = vmatpush1.msra.mxu0 0.0
        %3398 = vmatprep.subr.mxu0 0.0
        %3399 = vmatpush1.msra.mxu0 0.0
        %3400 = vmatprep.subr.mxu0 0.0
        %3401 = vmatpush1.msra.mxu0 0.0
        %3402 = vmatprep.subr.mxu0 0.0
        %3403 = vmatpush1.msra.mxu0 0.0
        %3404 = vmatprep.subr.mxu0 0.0
        %3405 = vmatpush1.msra.mxu0 0.0
        %3406 = vmatprep.subr.mxu0 0.0
        %3407 = vmatpush1.msra.mxu0 0.0
        %3408 = vmatprep.subr.mxu0 0.0
        %3409 = vmatpush1.msra.mxu0 0.0
        %3410 = vmatprep.subr.mxu0 0.0
        %3411 = vmatpush1.msra.mxu0 0.0
        %3412 = vmatprep.subr.mxu0 0.0
        %3413 = vmatpush1.msra.mxu0 0.0
        %3414 = vmatprep.subr.mxu0 0.0
        %3415 = vmatpush1.msra.mxu0 0.0
        %3416 = vmatprep.subr.mxu0 0.0
        %3417 = vmatpush1.msra.mxu0 0.0
        %3418 = vmatprep.subr.mxu0 0.0
        %3419 = vmatpush1.msra.mxu0 0.0
        %3420 = vmatprep.subr.mxu0 0.0
        %3421 = vmatpush1.msra.mxu0 0.0
        %3422 = vmatprep.subr.mxu0 0.0
        %3423 = vmatpush1.msra.mxu0 0.0
        %3424 = vmatprep.subr.mxu0 0.0
        %3425 = vmatpush1.msra.mxu0 0.0
        %3426 = vmatprep.subr.mxu0 0.0
        %3427 = vmatpush1.msra.mxu0 0.0
        %3428 = vmatprep.subr.mxu0 0.0
        %3429 = vmatpush1.msra.mxu0 0.0
        %3430 = vmatprep.subr.mxu0 0.0
        %3431 = vmatpush1.msra.mxu0 0.0
        %3432 = vmatprep.subr.mxu0 0.0
        %3433 = vmatpush1.msra.mxu0 0.0
        %3434 = vmatprep.subr.mxu0 0.0
        %3435 = vmatpush1.msra.mxu0 0.0
        %3436 = vmatprep.subr.mxu0 0.0
        %3437 = vmatpush1.msra.mxu0 0.0
        %3438 = vmatprep.subr.mxu0 0.0
        %3439 = vmatpush1.msra.mxu0 0.0
        %3440 = vmatprep.subr.mxu0 0.0
        %3441 = vmatpush1.msra.mxu0 0.0
        %3442 = vmatprep.mubr.f32.mxu0 0.0
        %v3443 = vand.u32 %v250, 4294901760
        %v3444 = vsub.f32 %v250, %v3443
        %3445 = vmatmul.mubr.f32.gmra.mrb[0].mxu0 %v3444
        %v3446 = vpop.f32.mrb[0].mxu0
        %v3447 = vadd.f32 %v3366, %v3446
        %v3448 = vpop.f32.mrb[0].mxu0
        %v3449 = vadd.f32 %v3368, %v3448
        %3450 = vdwg.mxu0
        %v3451 = vand.u32 %v223, 4294901760
        %3452 = vmatprep.subr.mxu0 %v3451
        %v3453 = vand.u32 %v222, 4294901760
        %3454 = vmatpush1.msra.mxu0 %v3453
        %v3455 = vand.u32 %v239, 4294901760
        %3456 = vmatprep.subr.mxu0 %v3455
        %v3457 = vand.u32 %v238, 4294901760
        %3458 = vmatpush1.msra.mxu0 %v3457
        %3459 = vmatprep.subr.mxu0 0.0
        %3460 = vmatpush1.msra.mxu0 0.0
        %3461 = vmatprep.subr.mxu0 0.0
        %3462 = vmatpush1.msra.mxu0 0.0
        %3463 = vmatprep.subr.mxu0 0.0
        %3464 = vmatpush1.msra.mxu0 0.0
        %3465 = vmatprep.subr.mxu0 0.0
        %3466 = vmatpush1.msra.mxu0 0.0
        %3467 = vmatprep.subr.mxu0 0.0
        %3468 = vmatpush1.msra.mxu0 0.0
        %3469 = vmatprep.subr.mxu0 0.0
        %3470 = vmatpush1.msra.mxu0 0.0
        %3471 = vmatprep.subr.mxu0 0.0
        %3472 = vmatpush1.msra.mxu0 0.0
        %3473 = vmatprep.subr.mxu0 0.0
        %3474 = vmatpush1.msra.mxu0 0.0
        %3475 = vmatprep.subr.mxu0 0.0
        %3476 = vmatpush1.msra.mxu0 0.0
        %3477 = vmatprep.subr.mxu0 0.0
        %3478 = vmatpush1.msra.mxu0 0.0
        %3479 = vmatprep.subr.mxu0 0.0
        %3480 = vmatpush1.msra.mxu0 0.0
        %3481 = vmatprep.subr.mxu0 0.0
        %3482 = vmatpush1.msra.mxu0 0.0
        %3483 = vmatprep.subr.mxu0 0.0
        %3484 = vmatpush1.msra.mxu0 0.0
        %3485 = vmatprep.subr.mxu0 0.0
        %3486 = vmatpush1.msra.mxu0 0.0
        %3487 = vmatprep.subr.mxu0 0.0
        %3488 = vmatpush1.msra.mxu0 0.0
        %3489 = vmatprep.subr.mxu0 0.0
        %3490 = vmatpush1.msra.mxu0 0.0
        %3491 = vmatprep.subr.mxu0 0.0
        %3492 = vmatpush1.msra.mxu0 0.0
        %3493 = vmatprep.subr.mxu0 0.0
        %3494 = vmatpush1.msra.mxu0 0.0
        %3495 = vmatprep.subr.mxu0 0.0
        %3496 = vmatpush1.msra.mxu0 0.0
        %3497 = vmatprep.subr.mxu0 0.0
        %3498 = vmatpush1.msra.mxu0 0.0
        %3499 = vmatprep.subr.mxu0 0.0
        %3500 = vmatpush1.msra.mxu0 0.0
        %3501 = vmatprep.subr.mxu0 0.0
        %3502 = vmatpush1.msra.mxu0 0.0
        %3503 = vmatprep.subr.mxu0 0.0
        %3504 = vmatpush1.msra.mxu0 0.0
        %3505 = vmatprep.subr.mxu0 0.0
        %3506 = vmatpush1.msra.mxu0 0.0
        %3507 = vmatprep.subr.mxu0 0.0
        %3508 = vmatpush1.msra.mxu0 0.0
        %3509 = vmatprep.subr.mxu0 0.0
        %3510 = vmatpush1.msra.mxu0 0.0
        %3511 = vmatprep.subr.mxu0 0.0
        %3512 = vmatpush1.msra.mxu0 0.0
        %3513 = vmatprep.subr.mxu0 0.0
        %3514 = vmatpush1.msra.mxu0 0.0
        %3515 = vmatprep.subr.mxu0 0.0
        %3516 = vmatpush1.msra.mxu0 0.0
        %3517 = vmatprep.subr.mxu0 0.0
        %3518 = vmatpush1.msra.mxu0 0.0
        %3519 = vmatprep.mubr.f32.mxu0 0.0
        %v3520 = vand.u32 %v250, 4294901760
        %v3521 = vsub.f32 %v250, %v3520
        %v3522 = vand.u32 %v3521, 4294901760
        %3523 = vmatmul.mubr.f32.gmra.mrb[0].mxu0 %v3522
        %v3524 = vpop.f32.mrb[0].mxu0
        %v3525 = vadd.f32 %v3447, %v3524
        %v3526 = vpop.f32.mrb[0].mxu0
        %v3527 = vadd.f32 %v3449, %v3526
        %3528 = vdwg.mxu0
        %v3529 = vand.u32 %v223, 4294901760
        %v3530 = vsub.f32 %v223, %v3529
        %v3531 = vand.u32 %v3530, 4294901760
        %3532 = vmatprep.subr.mxu0 %v3531
        %v3533 = vand.u32 %v222, 4294901760
        %v3534 = vsub.f32 %v222, %v3533
        %v3535 = vand.u32 %v3534, 4294901760
        %3536 = vmatpush1.msra.mxu0 %v3535
        %v3537 = vand.u32 %v239, 4294901760
        %v3538 = vsub.f32 %v239, %v3537
        %v3539 = vand.u32 %v3538, 4294901760
        %3540 = vmatprep.subr.mxu0 %v3539
        %v3541 = vand.u32 %v238, 4294901760
        %v3542 = vsub.f32 %v238, %v3541
        %v3543 = vand.u32 %v3542, 4294901760
        %3544 = vmatpush1.msra.mxu0 %v3543
        %3545 = vmatprep.subr.mxu0 0.0
        %3546 = vmatpush1.msra.mxu0 0.0
        %3547 = vmatprep.subr.mxu0 0.0
        %3548 = vmatpush1.msra.mxu0 0.0
        %3549 = vmatprep.subr.mxu0 0.0
        %3550 = vmatpush1.msra.mxu0 0.0
        %3551 = vmatprep.subr.mxu0 0.0
        %3552 = vmatpush1.msra.mxu0 0.0
        %3553 = vmatprep.subr.mxu0 0.0
        %3554 = vmatpush1.msra.mxu0 0.0
        %3555 = vmatprep.subr.mxu0 0.0
        %3556 = vmatpush1.msra.mxu0 0.0
        %3557 = vmatprep.subr.mxu0 0.0
        %3558 = vmatpush1.msra.mxu0 0.0
        %3559 = vmatprep.subr.mxu0 0.0
        %3560 = vmatpush1.msra.mxu0 0.0
        %3561 = vmatprep.subr.mxu0 0.0
        %3562 = vmatpush1.msra.mxu0 0.0
        %3563 = vmatprep.subr.mxu0 0.0
        %3564 = vmatpush1.msra.mxu0 0.0
        %3565 = vmatprep.subr.mxu0 0.0
        %3566 = vmatpush1.msra.mxu0 0.0
        %3567 = vmatprep.subr.mxu0 0.0
        %3568 = vmatpush1.msra.mxu0 0.0
        %3569 = vmatprep.subr.mxu0 0.0
        %3570 = vmatpush1.msra.mxu0 0.0
        %3571 = vmatprep.subr.mxu0 0.0
        %3572 = vmatpush1.msra.mxu0 0.0
        %3573 = vmatprep.subr.mxu0 0.0
        %3574 = vmatpush1.msra.mxu0 0.0
        %3575 = vmatprep.subr.mxu0 0.0
        %3576 = vmatpush1.msra.mxu0 0.0
        %3577 = vmatprep.subr.mxu0 0.0
        %3578 = vmatpush1.msra.mxu0 0.0
        %3579 = vmatprep.subr.mxu0 0.0
        %3580 = vmatpush1.msra.mxu0 0.0
        %3581 = vmatprep.subr.mxu0 0.0
        %3582 = vmatpush1.msra.mxu0 0.0
        %3583 = vmatprep.subr.mxu0 0.0
        %3584 = vmatpush1.msra.mxu0 0.0
        %3585 = vmatprep.subr.mxu0 0.0
        %3586 = vmatpush1.msra.mxu0 0.0
        %3587 = vmatprep.subr.mxu0 0.0
        %3588 = vmatpush1.msra.mxu0 0.0
        %3589 = vmatprep.subr.mxu0 0.0
        %3590 = vmatpush1.msra.mxu0 0.0
        %3591 = vmatprep.subr.mxu0 0.0
        %3592 = vmatpush1.msra.mxu0 0.0
        %3593 = vmatprep.subr.mxu0 0.0
        %3594 = vmatpush1.msra.mxu0 0.0
        %3595 = vmatprep.subr.mxu0 0.0
        %3596 = vmatpush1.msra.mxu0 0.0
        %3597 = vmatprep.subr.mxu0 0.0
        %3598 = vmatpush1.msra.mxu0 0.0
        %3599 = vmatprep.subr.mxu0 0.0
        %3600 = vmatpush1.msra.mxu0 0.0
        %3601 = vmatprep.subr.mxu0 0.0
        %3602 = vmatpush1.msra.mxu0 0.0
        %3603 = vmatprep.subr.mxu0 0.0
        %3604 = vmatpush1.msra.mxu0 0.0
        %3605 = vmatprep.mubr.f32.mxu0 0.0
        %v3606 = vand.u32 %v250, 4294901760
        %3607 = vmatmul.mubr.f32.gmra.mrb[0].mxu0 %v3606
        %v3608 = vpop.f32.mrb[0].mxu0
        %v3609 = vadd.f32 %v3525, %v3608
        %v3610 = vpop.f32.mrb[0].mxu0
        %v3611 = vadd.f32 %v3527, %v3610
        %3612 = vdwg.mxu0
        %v3613 = vand.u32 %v223, 4294901760
        %3614 = vmatprep.subr.mxu0 %v3613
        %v3615 = vand.u32 %v222, 4294901760
        %3616 = vmatpush1.msra.mxu0 %v3615
        %v3617 = vand.u32 %v239, 4294901760
        %3618 = vmatprep.subr.mxu0 %v3617
        %v3619 = vand.u32 %v238, 4294901760
        %3620 = vmatpush1.msra.mxu0 %v3619
        %3621 = vmatprep.subr.mxu0 0.0
        %3622 = vmatpush1.msra.mxu0 0.0
        %3623 = vmatprep.subr.mxu0 0.0
        %3624 = vmatpush1.msra.mxu0 0.0
        %3625 = vmatprep.subr.mxu0 0.0
        %3626 = vmatpush1.msra.mxu0 0.0
        %3627 = vmatprep.subr.mxu0 0.0
        %3628 = vmatpush1.msra.mxu0 0.0
        %3629 = vmatprep.subr.mxu0 0.0
        %3630 = vmatpush1.msra.mxu0 0.0
        %3631 = vmatprep.subr.mxu0 0.0
        %3632 = vmatpush1.msra.mxu0 0.0
        %3633 = vmatprep.subr.mxu0 0.0
        %3634 = vmatpush1.msra.mxu0 0.0
        %3635 = vmatprep.subr.mxu0 0.0
        %3636 = vmatpush1.msra.mxu0 0.0
        %3637 = vmatprep.subr.mxu0 0.0
        %3638 = vmatpush1.msra.mxu0 0.0
        %3639 = vmatprep.subr.mxu0 0.0
        %3640 = vmatpush1.msra.mxu0 0.0
        %3641 = vmatprep.subr.mxu0 0.0
        %3642 = vmatpush1.msra.mxu0 0.0
        %3643 = vmatprep.subr.mxu0 0.0
        %3644 = vmatpush1.msra.mxu0 0.0
        %3645 = vmatprep.subr.mxu0 0.0
        %3646 = vmatpush1.msra.mxu0 0.0
        %3647 = vmatprep.subr.mxu0 0.0
        %3648 = vmatpush1.msra.mxu0 0.0
        %3649 = vmatprep.subr.mxu0 0.0
        %3650 = vmatpush1.msra.mxu0 0.0
        %3651 = vmatprep.subr.mxu0 0.0
        %3652 = vmatpush1.msra.mxu0 0.0
        %3653 = vmatprep.subr.mxu0 0.0
        %3654 = vmatpush1.msra.mxu0 0.0
        %3655 = vmatprep.subr.mxu0 0.0
        %3656 = vmatpush1.msra.mxu0 0.0
        %3657 = vmatprep.subr.mxu0 0.0
        %3658 = vmatpush1.msra.mxu0 0.0
        %3659 = vmatprep.subr.mxu0 0.0
        %3660 = vmatpush1.msra.mxu0 0.0
        %3661 = vmatprep.subr.mxu0 0.0
        %3662 = vmatpush1.msra.mxu0 0.0
        %3663 = vmatprep.subr.mxu0 0.0
        %3664 = vmatpush1.msra.mxu0 0.0
        %3665 = vmatprep.subr.mxu0 0.0
        %3666 = vmatpush1.msra.mxu0 0.0
        %3667 = vmatprep.subr.mxu0 0.0
        %3668 = vmatpush1.msra.mxu0 0.0
        %3669 = vmatprep.subr.mxu0 0.0
        %3670 = vmatpush1.msra.mxu0 0.0
        %3671 = vmatprep.subr.mxu0 0.0
        %3672 = vmatpush1.msra.mxu0 0.0
        %3673 = vmatprep.subr.mxu0 0.0
        %3674 = vmatpush1.msra.mxu0 0.0
        %3675 = vmatprep.subr.mxu0 0.0
        %3676 = vmatpush1.msra.mxu0 0.0
        %3677 = vmatprep.subr.mxu0 0.0
        %3678 = vmatpush1.msra.mxu0 0.0
        %3679 = vmatprep.subr.mxu0 0.0
        %3680 = vmatpush1.msra.mxu0 0.0
        %3681 = vmatprep.mubr.f32.mxu0 0.0
        %v3682 = vand.u32 %v250, 4294901760
        %3683 = vmatmul.mubr.f32.gmra.mrb[0].mxu0 %v3682
        %v3684 = vpop.f32.mrb[0].mxu0
        %v3685 = vadd.f32 %v3609, %v3684
        %v3686 = vpop.f32.mrb[0].mxu0
        %v3687 = vadd.f32 %v3611, %v3686
        %3688 = vdwg.mxu0
        %v3689 = vand.u32 %v225, 4294901760
        %3690 = vmatprep.subr.mxu0 %v3689
        %v3691 = vand.u32 %v224, 4294901760
        %3692 = vmatpush1.msra.mxu0 %v3691
        %v3693 = vand.u32 %v241, 4294901760
        %3694 = vmatprep.subr.mxu0 %v3693
        %v3695 = vand.u32 %v240, 4294901760
        %3696 = vmatpush1.msra.mxu0 %v3695
        %3697 = vmatprep.subr.mxu0 0.0
        %3698 = vmatpush1.msra.mxu0 0.0
        %3699 = vmatprep.subr.mxu0 0.0
        %3700 = vmatpush1.msra.mxu0 0.0
        %3701 = vmatprep.subr.mxu0 0.0
        %3702 = vmatpush1.msra.mxu0 0.0
        %3703 = vmatprep.subr.mxu0 0.0
        %3704 = vmatpush1.msra.mxu0 0.0
        %3705 = vmatprep.subr.mxu0 0.0
        %3706 = vmatpush1.msra.mxu0 0.0
        %3707 = vmatprep.subr.mxu0 0.0
        %3708 = vmatpush1.msra.mxu0 0.0
        %3709 = vmatprep.subr.mxu0 0.0
        %3710 = vmatpush1.msra.mxu0 0.0
        %3711 = vmatprep.subr.mxu0 0.0
        %3712 = vmatpush1.msra.mxu0 0.0
        %3713 = vmatprep.subr.mxu0 0.0
        %3714 = vmatpush1.msra.mxu0 0.0
        %3715 = vmatprep.subr.mxu0 0.0
        %3716 = vmatpush1.msra.mxu0 0.0
        %3717 = vmatprep.subr.mxu0 0.0
        %3718 = vmatpush1.msra.mxu0 0.0
        %3719 = vmatprep.subr.mxu0 0.0
        %3720 = vmatpush1.msra.mxu0 0.0
        %3721 = vmatprep.subr.mxu0 0.0
        %3722 = vmatpush1.msra.mxu0 0.0
        %3723 = vmatprep.subr.mxu0 0.0
        %3724 = vmatpush1.msra.mxu0 0.0
        %3725 = vmatprep.subr.mxu0 0.0
        %3726 = vmatpush1.msra.mxu0 0.0
        %3727 = vmatprep.subr.mxu0 0.0
        %3728 = vmatpush1.msra.mxu0 0.0
        %3729 = vmatprep.subr.mxu0 0.0
        %3730 = vmatpush1.msra.mxu0 0.0
        %3731 = vmatprep.subr.mxu0 0.0
        %3732 = vmatpush1.msra.mxu0 0.0
        %3733 = vmatprep.subr.mxu0 0.0
        %3734 = vmatpush1.msra.mxu0 0.0
        %3735 = vmatprep.subr.mxu0 0.0
        %3736 = vmatpush1.msra.mxu0 0.0
        %3737 = vmatprep.subr.mxu0 0.0
        %3738 = vmatpush1.msra.mxu0 0.0
        %3739 = vmatprep.subr.mxu0 0.0
        %3740 = vmatpush1.msra.mxu0 0.0
        %3741 = vmatprep.subr.mxu0 0.0
        %3742 = vmatpush1.msra.mxu0 0.0
        %3743 = vmatprep.subr.mxu0 0.0
        %3744 = vmatpush1.msra.mxu0 0.0
        %3745 = vmatprep.subr.mxu0 0.0
        %3746 = vmatpush1.msra.mxu0 0.0
        %3747 = vmatprep.subr.mxu0 0.0
        %3748 = vmatpush1.msra.mxu0 0.0
        %3749 = vmatprep.subr.mxu0 0.0
        %3750 = vmatpush1.msra.mxu0 0.0
        %3751 = vmatprep.subr.mxu0 0.0
        %3752 = vmatpush1.msra.mxu0 0.0
        %3753 = vmatprep.subr.mxu0 0.0
        %3754 = vmatpush1.msra.mxu0 0.0
        %3755 = vmatprep.subr.mxu0 0.0
        %3756 = vmatpush1.msra.mxu0 0.0
        %3757 = vmatprep.mubr.f32.mxu0 0.0
        %v3758 = vand.u32 %v250, 4294901760
        %v3759 = vsub.f32 %v250, %v3758
        %v3760 = vand.u32 %v3759, 4294901760
        %v3761 = vsub.f32 %v3759, %v3760
        %v3762 = vand.u32 %v3761, 4294901760
        %3763 = vmatmul.mubr.f32.gmra.mrb[0].mxu0 %v3762
        %v3764 = vpop.f32.mrb[0].mxu0
        %v3765 = vadd.f32 %v246, %v3764
        %v3766 = vpop.f32.mrb[0].mxu0
        %v3767 = vadd.f32 %v246, %v3766
        %3768 = vdwg.mxu0
        %v3769 = vand.u32 %v225, 4294901760
        %v3770 = vsub.f32 %v225, %v3769
        %v3771 = vand.u32 %v3770, 4294901760
        %v3772 = vsub.f32 %v3770, %v3771
        %v3773 = vand.u32 %v3772, 4294901760
        %3774 = vmatprep.subr.mxu0 %v3773
        %v3775 = vand.u32 %v224, 4294901760
        %v3776 = vsub.f32 %v224, %v3775
        %v3777 = vand.u32 %v3776, 4294901760
        %v3778 = vsub.f32 %v3776, %v3777
        %v3779 = vand.u32 %v3778, 4294901760
        %3780 = vmatpush1.msra.mxu0 %v3779
        %v3781 = vand.u32 %v241, 4294901760
        %v3782 = vsub.f32 %v241, %v3781
        %v3783 = vand.u32 %v3782, 4294901760
        %v3784 = vsub.f32 %v3782, %v3783
        %v3785 = vand.u32 %v3784, 4294901760
        %3786 = vmatprep.subr.mxu0 %v3785
        %v3787 = vand.u32 %v240, 4294901760
        %v3788 = vsub.f32 %v240, %v3787
        %v3789 = vand.u32 %v3788, 4294901760
        %v3790 = vsub.f32 %v3788, %v3789
        %v3791 = vand.u32 %v3790, 4294901760
        %3792 = vmatpush1.msra.mxu0 %v3791
        %3793 = vmatprep.subr.mxu0 0.0
        %3794 = vmatpush1.msra.mxu0 0.0
        %3795 = vmatprep.subr.mxu0 0.0
        %3796 = vmatpush1.msra.mxu0 0.0
        %3797 = vmatprep.subr.mxu0 0.0
        %3798 = vmatpush1.msra.mxu0 0.0
        %3799 = vmatprep.subr.mxu0 0.0
        %3800 = vmatpush1.msra.mxu0 0.0
        %3801 = vmatprep.subr.mxu0 0.0
        %3802 = vmatpush1.msra.mxu0 0.0
        %3803 = vmatprep.subr.mxu0 0.0
        %3804 = vmatpush1.msra.mxu0 0.0
        %3805 = vmatprep.subr.mxu0 0.0
        %3806 = vmatpush1.msra.mxu0 0.0
        %3807 = vmatprep.subr.mxu0 0.0
        %3808 = vmatpush1.msra.mxu0 0.0
        %3809 = vmatprep.subr.mxu0 0.0
        %3810 = vmatpush1.msra.mxu0 0.0
        %3811 = vmatprep.subr.mxu0 0.0
        %3812 = vmatpush1.msra.mxu0 0.0
        %3813 = vmatprep.subr.mxu0 0.0
        %3814 = vmatpush1.msra.mxu0 0.0
        %3815 = vmatprep.subr.mxu0 0.0
        %3816 = vmatpush1.msra.mxu0 0.0
        %3817 = vmatprep.subr.mxu0 0.0
        %3818 = vmatpush1.msra.mxu0 0.0
        %3819 = vmatprep.subr.mxu0 0.0
        %3820 = vmatpush1.msra.mxu0 0.0
        %3821 = vmatprep.subr.mxu0 0.0
        %3822 = vmatpush1.msra.mxu0 0.0
        %3823 = vmatprep.subr.mxu0 0.0
        %3824 = vmatpush1.msra.mxu0 0.0
        %3825 = vmatprep.subr.mxu0 0.0
        %3826 = vmatpush1.msra.mxu0 0.0
        %3827 = vmatprep.subr.mxu0 0.0
        %3828 = vmatpush1.msra.mxu0 0.0
        %3829 = vmatprep.subr.mxu0 0.0
        %3830 = vmatpush1.msra.mxu0 0.0
        %3831 = vmatprep.subr.mxu0 0.0
        %3832 = vmatpush1.msra.mxu0 0.0
        %3833 = vmatprep.subr.mxu0 0.0
        %3834 = vmatpush1.msra.mxu0 0.0
        %3835 = vmatprep.subr.mxu0 0.0
        %3836 = vmatpush1.msra.mxu0 0.0
        %3837 = vmatprep.subr.mxu0 0.0
        %3838 = vmatpush1.msra.mxu0 0.0
        %3839 = vmatprep.subr.mxu0 0.0
        %3840 = vmatpush1.msra.mxu0 0.0
        %3841 = vmatprep.subr.mxu0 0.0
        %3842 = vmatpush1.msra.mxu0 0.0
        %3843 = vmatprep.subr.mxu0 0.0
        %3844 = vmatpush1.msra.mxu0 0.0
        %3845 = vmatprep.subr.mxu0 0.0
        %3846 = vmatpush1.msra.mxu0 0.0
        %3847 = vmatprep.subr.mxu0 0.0
        %3848 = vmatpush1.msra.mxu0 0.0
        %3849 = vmatprep.subr.mxu0 0.0
        %3850 = vmatpush1.msra.mxu0 0.0
        %3851 = vmatprep.subr.mxu0 0.0
        %3852 = vmatpush1.msra.mxu0 0.0
        %3853 = vmatprep.mubr.f32.mxu0 0.0
        %v3854 = vand.u32 %v250, 4294901760
        %3855 = vmatmul.mubr.f32.gmra.mrb[0].mxu0 %v3854
        %v3856 = vpop.f32.mrb[0].mxu0
        %v3857 = vadd.f32 %v3765, %v3856
        %v3858 = vpop.f32.mrb[0].mxu0
        %v3859 = vadd.f32 %v3767, %v3858
        %3860 = vdwg.mxu0
        %v3861 = vand.u32 %v225, 4294901760
        %v3862 = vsub.f32 %v225, %v3861
        %3863 = vmatprep.subr.mxu0 %v3862
        %v3864 = vand.u32 %v224, 4294901760
        %v3865 = vsub.f32 %v224, %v3864
        %3866 = vmatpush1.msra.mxu0 %v3865
        %v3867 = vand.u32 %v241, 4294901760
        %v3868 = vsub.f32 %v241, %v3867
        %3869 = vmatprep.subr.mxu0 %v3868
        %v3870 = vand.u32 %v240, 4294901760
        %v3871 = vsub.f32 %v240, %v3870
        %3872 = vmatpush1.msra.mxu0 %v3871
        %3873 = vmatprep.subr.mxu0 0.0
        %3874 = vmatpush1.msra.mxu0 0.0
        %3875 = vmatprep.subr.mxu0 0.0
        %3876 = vmatpush1.msra.mxu0 0.0
        %3877 = vmatprep.subr.mxu0 0.0
        %3878 = vmatpush1.msra.mxu0 0.0
        %3879 = vmatprep.subr.mxu0 0.0
        %3880 = vmatpush1.msra.mxu0 0.0
        %3881 = vmatprep.subr.mxu0 0.0
        %3882 = vmatpush1.msra.mxu0 0.0
        %3883 = vmatprep.subr.mxu0 0.0
        %3884 = vmatpush1.msra.mxu0 0.0
        %3885 = vmatprep.subr.mxu0 0.0
        %3886 = vmatpush1.msra.mxu0 0.0
        %3887 = vmatprep.subr.mxu0 0.0
        %3888 = vmatpush1.msra.mxu0 0.0
        %3889 = vmatprep.subr.mxu0 0.0
        %3890 = vmatpush1.msra.mxu0 0.0
        %3891 = vmatprep.subr.mxu0 0.0
        %3892 = vmatpush1.msra.mxu0 0.0
        %3893 = vmatprep.subr.mxu0 0.0
        %3894 = vmatpush1.msra.mxu0 0.0
        %3895 = vmatprep.subr.mxu0 0.0
        %3896 = vmatpush1.msra.mxu0 0.0
        %3897 = vmatprep.subr.mxu0 0.0
        %3898 = vmatpush1.msra.mxu0 0.0
        %3899 = vmatprep.subr.mxu0 0.0
        %3900 = vmatpush1.msra.mxu0 0.0
        %3901 = vmatprep.subr.mxu0 0.0
        %3902 = vmatpush1.msra.mxu0 0.0
        %3903 = vmatprep.subr.mxu0 0.0
        %3904 = vmatpush1.msra.mxu0 0.0
        %3905 = vmatprep.subr.mxu0 0.0
        %3906 = vmatpush1.msra.mxu0 0.0
        %3907 = vmatprep.subr.mxu0 0.0
        %3908 = vmatpush1.msra.mxu0 0.0
        %3909 = vmatprep.subr.mxu0 0.0
        %3910 = vmatpush1.msra.mxu0 0.0
        %3911 = vmatprep.subr.mxu0 0.0
        %3912 = vmatpush1.msra.mxu0 0.0
        %3913 = vmatprep.subr.mxu0 0.0
        %3914 = vmatpush1.msra.mxu0 0.0
        %3915 = vmatprep.subr.mxu0 0.0
        %3916 = vmatpush1.msra.mxu0 0.0
        %3917 = vmatprep.subr.mxu0 0.0
        %3918 = vmatpush1.msra.mxu0 0.0
        %3919 = vmatprep.subr.mxu0 0.0
        %3920 = vmatpush1.msra.mxu0 0.0
        %3921 = vmatprep.subr.mxu0 0.0
        %3922 = vmatpush1.msra.mxu0 0.0
        %3923 = vmatprep.subr.mxu0 0.0
        %3924 = vmatpush1.msra.mxu0 0.0
        %3925 = vmatprep.subr.mxu0 0.0
        %3926 = vmatpush1.msra.mxu0 0.0
        %3927 = vmatprep.subr.mxu0 0.0
        %3928 = vmatpush1.msra.mxu0 0.0
        %3929 = vmatprep.subr.mxu0 0.0
        %3930 = vmatpush1.msra.mxu0 0.0
        %3931 = vmatprep.subr.mxu0 0.0
        %3932 = vmatpush1.msra.mxu0 0.0
        %3933 = vmatprep.mubr.f32.mxu0 0.0
        %v3934 = vand.u32 %v250, 4294901760
        %v3935 = vsub.f32 %v250, %v3934
        %3936 = vmatmul.mubr.f32.gmra.mrb[0].mxu0 %v3935
        %v3937 = vpop.f32.mrb[0].mxu0
        %v3938 = vadd.f32 %v3857, %v3937
        %v3939 = vpop.f32.mrb[0].mxu0
        %v3940 = vadd.f32 %v3859, %v3939
        %3941 = vdwg.mxu0
        %v3942 = vand.u32 %v225, 4294901760
        %3943 = vmatprep.subr.mxu0 %v3942
        %v3944 = vand.u32 %v224, 4294901760
        %3945 = vmatpush1.msra.mxu0 %v3944
        %v3946 = vand.u32 %v241, 4294901760
        %3947 = vmatprep.subr.mxu0 %v3946
        %v3948 = vand.u32 %v240, 4294901760
        %3949 = vmatpush1.msra.mxu0 %v3948
        %3950 = vmatprep.subr.mxu0 0.0
        %3951 = vmatpush1.msra.mxu0 0.0
        %3952 = vmatprep.subr.mxu0 0.0
        %3953 = vmatpush1.msra.mxu0 0.0
        %3954 = vmatprep.subr.mxu0 0.0
        %3955 = vmatpush1.msra.mxu0 0.0
        %3956 = vmatprep.subr.mxu0 0.0
        %3957 = vmatpush1.msra.mxu0 0.0
        %3958 = vmatprep.subr.mxu0 0.0
        %3959 = vmatpush1.msra.mxu0 0.0
        %3960 = vmatprep.subr.mxu0 0.0
        %3961 = vmatpush1.msra.mxu0 0.0
        %3962 = vmatprep.subr.mxu0 0.0
        %3963 = vmatpush1.msra.mxu0 0.0
        %3964 = vmatprep.subr.mxu0 0.0
        %3965 = vmatpush1.msra.mxu0 0.0
        %3966 = vmatprep.subr.mxu0 0.0
        %3967 = vmatpush1.msra.mxu0 0.0
        %3968 = vmatprep.subr.mxu0 0.0
        %3969 = vmatpush1.msra.mxu0 0.0
        %3970 = vmatprep.subr.mxu0 0.0
        %3971 = vmatpush1.msra.mxu0 0.0
        %3972 = vmatprep.subr.mxu0 0.0
        %3973 = vmatpush1.msra.mxu0 0.0
        %3974 = vmatprep.subr.mxu0 0.0
        %3975 = vmatpush1.msra.mxu0 0.0
        %3976 = vmatprep.subr.mxu0 0.0
        %3977 = vmatpush1.msra.mxu0 0.0
        %3978 = vmatprep.subr.mxu0 0.0
        %3979 = vmatpush1.msra.mxu0 0.0
        %3980 = vmatprep.subr.mxu0 0.0
        %3981 = vmatpush1.msra.mxu0 0.0
        %3982 = vmatprep.subr.mxu0 0.0
        %3983 = vmatpush1.msra.mxu0 0.0
        %3984 = vmatprep.subr.mxu0 0.0
        %3985 = vmatpush1.msra.mxu0 0.0
        %3986 = vmatprep.subr.mxu0 0.0
        %3987 = vmatpush1.msra.mxu0 0.0
        %3988 = vmatprep.subr.mxu0 0.0
        %3989 = vmatpush1.msra.mxu0 0.0
        %3990 = vmatprep.subr.mxu0 0.0
        %3991 = vmatpush1.msra.mxu0 0.0
        %3992 = vmatprep.subr.mxu0 0.0
        %3993 = vmatpush1.msra.mxu0 0.0
        %3994 = vmatprep.subr.mxu0 0.0
        %3995 = vmatpush1.msra.mxu0 0.0
        %3996 = vmatprep.subr.mxu0 0.0
        %3997 = vmatpush1.msra.mxu0 0.0
        %3998 = vmatprep.subr.mxu0 0.0
        %3999 = vmatpush1.msra.mxu0 0.0
        %4000 = vmatprep.subr.mxu0 0.0
        %4001 = vmatpush1.msra.mxu0 0.0
        %4002 = vmatprep.subr.mxu0 0.0
        %4003 = vmatpush1.msra.mxu0 0.0
        %4004 = vmatprep.subr.mxu0 0.0
        %4005 = vmatpush1.msra.mxu0 0.0
        %4006 = vmatprep.subr.mxu0 0.0
        %4007 = vmatpush1.msra.mxu0 0.0
        %4008 = vmatprep.subr.mxu0 0.0
        %4009 = vmatpush1.msra.mxu0 0.0
        %4010 = vmatprep.mubr.f32.mxu0 0.0
        %v4011 = vand.u32 %v250, 4294901760
        %v4012 = vsub.f32 %v250, %v4011
        %v4013 = vand.u32 %v4012, 4294901760
        %4014 = vmatmul.mubr.f32.gmra.mrb[0].mxu0 %v4013
        %v4015 = vpop.f32.mrb[0].mxu0
        %v4016 = vadd.f32 %v3938, %v4015
        %v4017 = vpop.f32.mrb[0].mxu0
        %v4018 = vadd.f32 %v3940, %v4017
        %4019 = vdwg.mxu0
        %v4020 = vand.u32 %v225, 4294901760
        %v4021 = vsub.f32 %v225, %v4020
        %v4022 = vand.u32 %v4021, 4294901760
        %4023 = vmatprep.subr.mxu0 %v4022
        %v4024 = vand.u32 %v224, 4294901760
        %v4025 = vsub.f32 %v224, %v4024
        %v4026 = vand.u32 %v4025, 4294901760
        %4027 = vmatpush1.msra.mxu0 %v4026
        %v4028 = vand.u32 %v241, 4294901760
        %v4029 = vsub.f32 %v241, %v4028
        %v4030 = vand.u32 %v4029, 4294901760
        %4031 = vmatprep.subr.mxu0 %v4030
        %v4032 = vand.u32 %v240, 4294901760
        %v4033 = vsub.f32 %v240, %v4032
        %v4034 = vand.u32 %v4033, 4294901760
        %4035 = vmatpush1.msra.mxu0 %v4034
        %4036 = vmatprep.subr.mxu0 0.0
        %4037 = vmatpush1.msra.mxu0 0.0
        %4038 = vmatprep.subr.mxu0 0.0
        %4039 = vmatpush1.msra.mxu0 0.0
        %4040 = vmatprep.subr.mxu0 0.0
        %4041 = vmatpush1.msra.mxu0 0.0
        %4042 = vmatprep.subr.mxu0 0.0
        %4043 = vmatpush1.msra.mxu0 0.0
        %4044 = vmatprep.subr.mxu0 0.0
        %4045 = vmatpush1.msra.mxu0 0.0
        %4046 = vmatprep.subr.mxu0 0.0
        %4047 = vmatpush1.msra.mxu0 0.0
        %4048 = vmatprep.subr.mxu0 0.0
        %4049 = vmatpush1.msra.mxu0 0.0
        %4050 = vmatprep.subr.mxu0 0.0
        %4051 = vmatpush1.msra.mxu0 0.0
        %4052 = vmatprep.subr.mxu0 0.0
        %4053 = vmatpush1.msra.mxu0 0.0
        %4054 = vmatprep.subr.mxu0 0.0
        %4055 = vmatpush1.msra.mxu0 0.0
        %4056 = vmatprep.subr.mxu0 0.0
        %4057 = vmatpush1.msra.mxu0 0.0
        %4058 = vmatprep.subr.mxu0 0.0
        %4059 = vmatpush1.msra.mxu0 0.0
        %4060 = vmatprep.subr.mxu0 0.0
        %4061 = vmatpush1.msra.mxu0 0.0
        %4062 = vmatprep.subr.mxu0 0.0
        %4063 = vmatpush1.msra.mxu0 0.0
        %4064 = vmatprep.subr.mxu0 0.0
        %4065 = vmatpush1.msra.mxu0 0.0
        %4066 = vmatprep.subr.mxu0 0.0
        %4067 = vmatpush1.msra.mxu0 0.0
        %4068 = vmatprep.subr.mxu0 0.0
        %4069 = vmatpush1.msra.mxu0 0.0
        %4070 = vmatprep.subr.mxu0 0.0
        %4071 = vmatpush1.msra.mxu0 0.0
        %4072 = vmatprep.subr.mxu0 0.0
        %4073 = vmatpush1.msra.mxu0 0.0
        %4074 = vmatprep.subr.mxu0 0.0
        %4075 = vmatpush1.msra.mxu0 0.0
        %4076 = vmatprep.subr.mxu0 0.0
        %4077 = vmatpush1.msra.mxu0 0.0
        %4078 = vmatprep.subr.mxu0 0.0
        %4079 = vmatpush1.msra.mxu0 0.0
        %4080 = vmatprep.subr.mxu0 0.0
        %4081 = vmatpush1.msra.mxu0 0.0
        %4082 = vmatprep.subr.mxu0 0.0
        %4083 = vmatpush1.msra.mxu0 0.0
        %4084 = vmatprep.subr.mxu0 0.0
        %4085 = vmatpush1.msra.mxu0 0.0
        %4086 = vmatprep.subr.mxu0 0.0
        %4087 = vmatpush1.msra.mxu0 0.0
        %4088 = vmatprep.subr.mxu0 0.0
        %4089 = vmatpush1.msra.mxu0 0.0
        %4090 = vmatprep.subr.mxu0 0.0
        %4091 = vmatpush1.msra.mxu0 0.0
        %4092 = vmatprep.subr.mxu0 0.0
        %4093 = vmatpush1.msra.mxu0 0.0
        %4094 = vmatprep.subr.mxu0 0.0
        %4095 = vmatpush1.msra.mxu0 0.0
        %4096 = vmatprep.mubr.f32.mxu0 0.0
        %v4097 = vand.u32 %v250, 4294901760
        %4098 = vmatmul.mubr.f32.gmra.mrb[0].mxu0 %v4097
        %v4099 = vpop.f32.mrb[0].mxu0
        %v4100 = vadd.f32 %v4016, %v4099
        %v4101 = vpop.f32.mrb[0].mxu0
        %v4102 = vadd.f32 %v4018, %v4101
        %4103 = vdwg.mxu0
        %v4104 = vand.u32 %v225, 4294901760
        %4105 = vmatprep.subr.mxu0 %v4104
        %v4106 = vand.u32 %v224, 4294901760
        %4107 = vmatpush1.msra.mxu0 %v4106
        %v4108 = vand.u32 %v241, 4294901760
        %4109 = vmatprep.subr.mxu0 %v4108
        %v4110 = vand.u32 %v240, 4294901760
        %4111 = vmatpush1.msra.mxu0 %v4110
        %4112 = vmatprep.subr.mxu0 0.0
        %4113 = vmatpush1.msra.mxu0 0.0
        %4114 = vmatprep.subr.mxu0 0.0
        %4115 = vmatpush1.msra.mxu0 0.0
        %4116 = vmatprep.subr.mxu0 0.0
        %4117 = vmatpush1.msra.mxu0 0.0
        %4118 = vmatprep.subr.mxu0 0.0
        %4119 = vmatpush1.msra.mxu0 0.0
        %4120 = vmatprep.subr.mxu0 0.0
        %4121 = vmatpush1.msra.mxu0 0.0
        %4122 = vmatprep.subr.mxu0 0.0
        %4123 = vmatpush1.msra.mxu0 0.0
        %4124 = vmatprep.subr.mxu0 0.0
        %4125 = vmatpush1.msra.mxu0 0.0
        %4126 = vmatprep.subr.mxu0 0.0
        %4127 = vmatpush1.msra.mxu0 0.0
        %4128 = vmatprep.subr.mxu0 0.0
        %4129 = vmatpush1.msra.mxu0 0.0
        %4130 = vmatprep.subr.mxu0 0.0
        %4131 = vmatpush1.msra.mxu0 0.0
        %4132 = vmatprep.subr.mxu0 0.0
        %4133 = vmatpush1.msra.mxu0 0.0
        %4134 = vmatprep.subr.mxu0 0.0
        %4135 = vmatpush1.msra.mxu0 0.0
        %4136 = vmatprep.subr.mxu0 0.0
        %4137 = vmatpush1.msra.mxu0 0.0
        %4138 = vmatprep.subr.mxu0 0.0
        %4139 = vmatpush1.msra.mxu0 0.0
        %4140 = vmatprep.subr.mxu0 0.0
        %4141 = vmatpush1.msra.mxu0 0.0
        %4142 = vmatprep.subr.mxu0 0.0
        %4143 = vmatpush1.msra.mxu0 0.0
        %4144 = vmatprep.subr.mxu0 0.0
        %4145 = vmatpush1.msra.mxu0 0.0
        %4146 = vmatprep.subr.mxu0 0.0
        %4147 = vmatpush1.msra.mxu0 0.0
        %4148 = vmatprep.subr.mxu0 0.0
        %4149 = vmatpush1.msra.mxu0 0.0
        %4150 = vmatprep.subr.mxu0 0.0
        %4151 = vmatpush1.msra.mxu0 0.0
        %4152 = vmatprep.subr.mxu0 0.0
        %4153 = vmatpush1.msra.mxu0 0.0
        %4154 = vmatprep.subr.mxu0 0.0
        %4155 = vmatpush1.msra.mxu0 0.0
        %4156 = vmatprep.subr.mxu0 0.0
        %4157 = vmatpush1.msra.mxu0 0.0
        %4158 = vmatprep.subr.mxu0 0.0
        %4159 = vmatpush1.msra.mxu0 0.0
        %4160 = vmatprep.subr.mxu0 0.0
        %4161 = vmatpush1.msra.mxu0 0.0
        %4162 = vmatprep.subr.mxu0 0.0
        %4163 = vmatpush1.msra.mxu0 0.0
        %4164 = vmatprep.subr.mxu0 0.0
        %4165 = vmatpush1.msra.mxu0 0.0
        %4166 = vmatprep.subr.mxu0 0.0
        %4167 = vmatpush1.msra.mxu0 0.0
        %4168 = vmatprep.subr.mxu0 0.0
        %4169 = vmatpush1.msra.mxu0 0.0
        %4170 = vmatprep.subr.mxu0 0.0
        %4171 = vmatpush1.msra.mxu0 0.0
        %4172 = vmatprep.mubr.f32.mxu0 0.0
        %v4173 = vand.u32 %v250, 4294901760
        %4174 = vmatmul.mubr.f32.gmra.mrb[0].mxu0 %v4173
        %v4175 = vpop.f32.mrb[0].mxu0
        %v4176 = vadd.f32 %v4100, %v4175
        %v4177 = vpop.f32.mrb[0].mxu0
        %v4178 = vadd.f32 %v4102, %v4177
        %4179 = vdwg.mxu0
        %v4196 = vcombine.low %v739, %v741
        %v4197 = vcombine.low %v1230, %v1232
        %v4198 = vcombine.low %v1721, %v1723
        %v4199 = vcombine.low %v2212, %v2214
        %v4200 = vcombine.low %v2703, %v2705
        %v4201 = vcombine.low %v3194, %v3196
        %v4202 = vcombine.low %v3685, %v3687
        %v4203 = vcombine.low %v4176, %v4178
        %4212 = vst [vmem:[%s206] sm:$0xff] %v4196
        %4213 = vst [vmem:[%s206 + $0x8] sm:$0xff] %v4197
        %4214 = vst [vmem:[%s206 + $0x10] sm:$0xff] %v4198
        %4215 = vst [vmem:[%s206 + $0x18] sm:$0xff] %v4199
        %4216 = vst [vmem:[%s206 + $0x20] sm:$0xff] %v4200
        %4217 = vst [vmem:[%s206 + $0x28] sm:$0xff] %v4201
        %4218 = vst [vmem:[%s206 + $0x30] sm:$0xff] %v4202
        %4219 = vst [vmem:[%s206 + $0x38] sm:$0xff] %v4203
        %s4220 = sand.u32 %s112, 1
        %s4221 = scalar_lea.sflag [#allocation4], %s4220
        %s4222 = sand.u32 %s112, 1
        %s4223 = smul.addr %s4222, 64
        %s4224 = scalar_lea.vmem [#allocation5], %s4223
        // Predicated region
        $region37: #{tpu_custom_call.1} parent=31 // pred_check
          %p4225 = pneg %p122
        $region38: #{tpu_custom_call.1} parent=31 // pred_check_branch
          %4227 = sbr.rel (%p4225) target = $region40
        $region39: #{tpu_custom_call.1} parent=31 // pred_region
          %s4228 = smul.u32 16, %s25
          %s4230 = ssub.s32 1024, 1024
          %4231 = vsyncadd %s4221, %s4230
          %s4232 = smul.addr %s24, 16
          %s4233 = sadd.s32 %s4228, %s4232
          %s4234 = smul.addr %s4233, 64
          %s4235 = scalar_lea.hbm %s3, %s4234
          %s4237 = sshll.u32 %s4224, 4
          %s4238 = int_to_ptr.vmem [resolvable:$true] %s4237
          %4240 = dma.vmem_to_hbm [thread:$0]  %s4238, 1024, %s4235, %s4221
        $region40: #{tpu_custom_call.1} parent=31 // pred_fallthru
          _
      $region32: #{tpu_custom_call.1} parent=5 // pred_fallthru
        _
      %p4241 = scmp.le.s32.totalorder 2, %s15
      // Predicated region
      $region41: #{tpu_custom_call.1} parent=5 // pred_check
        %p4242 = pneg %p4241
      $region42: #{tpu_custom_call.1} parent=5 // pred_check_branch
        %4244 = sbr.rel (%p4242) target = $region44
      $region43: #{tpu_custom_call.1} parent=5 // pred_region
        %s4245 = ssub.s32 %s15, 2
        // Predicated region
        $region45: #{tpu_custom_call.1} parent=43 // pred_check
          %p4246 = pneg %p128
        $region46: #{tpu_custom_call.1} parent=43 // pred_check_branch
          %4248 = sbr.rel (%p4246) target = $region48
        $region47: #{tpu_custom_call.1} parent=43 // pred_region
          %s4249 = sand.u32 %s113, 1
          %s4250 = scalar_lea.sflag [#allocation4], %s4249
          %s4251 = sand.u32 %s113, 1
          %s4252 = smul.addr %s4251, 64
          %s4253 = scalar_lea.vmem [#allocation5], %s4252
          %4254 = dma.done %s4250, 1024
        $region48: #{tpu_custom_call.1} parent=43 // pred_fallthru
          _
      $region44: #{tpu_custom_call.1} parent=5 // pred_fallthru
        _
    $region6: #{tpu_custom_call.1} parent=1 // loop_footer
      %s19 = sadd.s32 1, %s15
    $region7: #{tpu_custom_call.1} parent=1 // loop_footer_branch
      %14 = sbr.rel target = $region3
    $region8: #{tpu_custom_call.1} parent=1 // loop_exit
      _
    %4255 = vsyncpa [#allocation3], 1
    %s4256 = scalar_lea.sflag [#allocation3], 1
    %4257 = vsyncpa %s4256, 1
    %4258 = vsyncpa [#allocation4], 1
    %s4259 = scalar_lea.sflag [#allocation4], 1
    %4260 = vsyncpa %s4259, 1

</llo_original>
